<compile_context>
chip_gen: v7x
topology: tpu7x:2x2x1
jax: 0.10.0
libtpu: 0.0.40
codegen_flags: <defaults>
</compile_context>

<pallas_src>
import jax
import jax.numpy as jnp
from jax import lax
from jax.experimental import pallas as pl
from jax.experimental.pallas import tpu as pltpu  # noqa: F401  (imported per convention)

# ---- model config (small, deterministic, synthetic) -------------------------
E = 32          # args.decoder_embed_dim
H = 4           # args.decoder_attention_heads
DH = E // H     # head dim
FFN = 64        # args.decoder_ffn_embed_dim
E_ENC = 48      # args.encoder_embed_dim (kdim/vdim of encoder attention)
T = 8           # target sequence length
B = 2           # batch size
S = 12          # encoder (source) sequence length
EPS = 1e-5      # nn.LayerNorm default eps
SCALE = DH ** -0.5

# rows of the packed (10, E) constant slab
_BO_S, _G_S, _B_S, _BQ_C, _BO_C, _G_C, _B_C, _B2, _G_F, _B_F = range(10)


# ---------------------------- fused Pallas kernel -----------------------------
def _layer_norm(y, g_row, b_row):
    mu = jnp.mean(y, axis=-1, keepdims=True)
    var = jnp.mean((y - mu) ** 2, axis=-1, keepdims=True)
    return (y - mu) * lax.rsqrt(var + EPS) * g_row + b_row


def _attention(q_slab, kv_slab, q_off, k_off, v_off, kv_len, wo, attn_ref):
    """Multi-head attention on batch-major row slabs.

    q_slab : (B*T, >= q_off+E) rows grouped by batch, time-ordered within batch.
    kv_slab: (B*kv_len, ...) same layout; K columns start at k_off, V at v_off.
    wo     : (E, E) output projection; its row block h*DH:(h+1)*DH is folded
             into each head's value matmul (no head concat).
    Returns the projected attention output (B*T, E), bias NOT added.  If
    attn_ref is not None the head-averaged probabilities are stored per batch.
    SCALE is already folded into the Q projection.
    """
    f32 = jnp.float32
    dn = (((1,), (1,)), ((), ()))          # contract last dims (K fed untransposed)

    # -- scores for every (batch, head) collected into one slab ----------------
    blocks = []
    for b in range(B):
        qb = q_slab[b * T:(b + 1) * T]
        kb = kv_slab[b * kv_len:(b + 1) * kv_len]
        for h in range(H):
            blocks.append(lax.dot_general(
                qb[:, q_off + h * DH:q_off + (h + 1) * DH],
                kb[:, k_off + h * DH:k_off + (h + 1) * DH],
                dn, preferred_element_type=f32))              # (T, kv_len)
    s = jnp.concatenate(blocks, axis=0)                        # (B*H*T, kv_len)

    # -- ONE batched softmax over the whole slab --------------------------------
    s = s - jnp.max(s, axis=-1, keepdims=True)
    p = jnp.exp(s)
    p = p * pl.reciprocal(jnp.sum(p, axis=-1, keepdims=True), approx=False)

    # -- per-(batch, head) value matmul, output projection folded per head ------
    outs = []
    for b in range(B):
        vb = kv_slab[b * kv_len:(b + 1) * kv_len]
        acc = None
        psum = None
        for h in range(H):
            pb = p[(b * H + h) * T:(b * H + h + 1) * T]        # (T, kv_len)
            ov = jnp.dot(pb, vb[:, v_off + h * DH:v_off + (h + 1) * DH],
                         preferred_element_type=f32)           # (T, DH)
            contrib = jnp.dot(ov, wo[h * DH:(h + 1) * DH, :],
                              preferred_element_type=f32)      # (T, E)
            acc = contrib if acc is None else acc + contrib
            if attn_ref is not None:
                psum = pb if psum is None else psum + pb
        outs.append(acc)
        if attn_ref is not None:
            attn_ref[b] = (psum * (1.0 / H)).astype(attn_ref.dtype)
    return jnp.concatenate(outs, axis=0)                       # (B*T, E)


def _decoder_layer_kernel(x_ref, enc_ref, perm_ref,
                          wqkv_s_ref, bqkv_s_ref, wo_s_ref,
                          wq_c_ref, wkv_c_ref, bkv_c_ref, wo_c_ref,
                          w1_ref, b1_ref, w2_ref, c_ref,
                          out_ref, attn_ref):
    f32 = jnp.float32
    c = c_ref[...].astype(f32)                     # (10, E) packed constants

    # Batch-major working slab built from (time, batch)-ordered input rows:
    # two strided loads + one aligned row concat (no wrapper transposes).
    x = jnp.concatenate(
        [x_ref[pl.ds(b, T, stride=B)] for b in range(B)], axis=0).astype(f32)   # (B*T, E)

    # ---- self-attention block (post-norm) -----------------------------------
    residual = x
    qkv = jnp.dot(x, wqkv_s_ref[...], preferred_element_type=f32) + bqkv_s_ref[...]
    o = _attention(qkv, qkv, 0, E, 2 * E, T, wo_s_ref[...], None)
    x = _layer_norm(o + c[_BO_S:_BO_S + 1] + residual,
                    c[_G_S:_G_S + 1], c[_B_S:_B_S + 1])

    # ---- encoder (cross) attention block -------------------------------------
    residual = x
    enc = jnp.concatenate(
        [enc_ref[pl.ds(b, S, stride=B)] for b in range(B)], axis=0).astype(f32)  # (B*S, E_ENC)
    q = jnp.dot(x, wq_c_ref[...], preferred_element_type=f32) + c[_BQ_C:_BQ_C + 1]
    kv = jnp.dot(enc, wkv_c_ref[...], preferred_element_type=f32) + bkv_c_ref[...]
    o = _attention(q, kv, 0, 0, E, S, wo_c_ref[...], attn_ref)
    x = _layer_norm(o + c[_BO_C:_BO_C + 1] + residual,
                    c[_G_C:_G_C + 1], c[_B_C:_B_C + 1])

    # Re-interleave rows back to (time, batch) order with one tiny permutation
    # matmul (MXU) so the output needs no wrapper transpose or strided store.
    x = jnp.dot(perm_ref[...], x, preferred_element_type=f32)   # (T*B, E) time-major

    # ---- feed-forward block (row-wise, order independent) ---------------------
    residual = x
    hdn = jnp.maximum(
        jnp.dot(x, w1_ref[...], preferred_element_type=f32) + b1_ref[...], 0.0)
    y = jnp.dot(hdn, w2_ref[...], preferred_element_type=f32) + c[_B2:_B2 + 1]
    x = _layer_norm(y + residual, c[_G_F:_G_F + 1], c[_B_F:_B_F + 1])

    out_ref[...] = x.astype(out_ref.dtype)


# ------------------- parameter packing (ONCE, at init time) -------------------
def pack_decoder_params(params):
    sa, ca = params["self_attn"], params["enc_attn"]
    # fused, pre-transposed (din, dout) weights; SCALE folded into Q projection
    wqkv_s = jnp.concatenate([sa["wq"] * SCALE, sa["wk"], sa["wv"]], axis=0).T  # (E, 3E)
    bqkv_s = jnp.concatenate([sa["bq"] * SCALE, sa["bk"], sa["bv"]]).reshape(1, 3 * E)
    wo_s = sa["wo"].T                                                           # (E, E)
    wq_c = (ca["wq"] * SCALE).T                                                 # (E, E)
    wkv_c = jnp.concatenate([ca["wk"], ca["wv"]], axis=0).T                     # (E_ENC, 2E)
    bkv_c = jnp.concatenate([ca["bk"], ca["bv"]]).reshape(1, 2 * E)
    wo_c = ca["wo"].T                                                           # (E, E)
    w1t = params["w1"].T                                                        # (E, FFN)
    b1 = params["b1"].reshape(1, FFN)
    w2t = params["w2"].T                                                        # (FFN, E)
    consts = jnp.stack([
        sa["bo"], params["ln_self_g"], params["ln_self_b"],
        ca["bq"] * SCALE, ca["bo"], params["ln_enc_g"], params["ln_enc_b"],
        params["b2"], params["ln_final_g"], params["ln_final_b"],
    ], axis=0)                                                                  # (10, E)
    # (T*B, T*B) permutation: time-major row t*B+b  <-  batch-major row b*T+t
    r = jnp.arange(T * B)
    perm = jax.nn.one_hot((r % B) * T + r // B, T * B, dtype=jnp.float32)
    return (perm, wqkv_s, bqkv_s, wo_s, wq_c, wkv_c, bkv_c, wo_c,
            w1t, b1, w2t, consts)


# ----------------------------- public forward ---------------------------------
@jax.jit
def decoder_layer_forward(x, encoder_out, packed):
    """Forward of TransformerDecoderLayer (post-norm, eval mode).

    x:            (T, B, E)
    encoder_out:  (S, B, E_enc)
    packed:       tuple from pack_decoder_params (built once at init)
    returns (x, attn, None) with attn = (B, T, S) head-averaged encoder-attn
    weights.
    """
    (perm, wqkv_s, bqkv_s, wo_s, wq_c, wkv_c, bkv_c, wo_c,
     w1t, b1, w2t, consts) = packed

    # Free leading-dim reshapes only (row order stays time-major); per-batch
    # gathering happens inside the kernel with strided pl.ds loads.
    x2 = x.reshape(T * B, E)
    enc2 = encoder_out.reshape(S * B, E_ENC)

    out2, attn = pl.pallas_call(
        _decoder_layer_kernel,
        out_shape=(
            jax.ShapeDtypeStruct((T * B, E), x.dtype),
            jax.ShapeDtypeStruct((B, T, S), jnp.float32),
        ),
    )(x2, enc2, perm, wqkv_s, bqkv_s, wo_s, wq_c, wkv_c, bkv_c, wo_c,
      w1t, b1, w2t, consts)

    return out2.reshape(T, B, E), attn, None


# ---------------------------- reference (pure JAX) ----------------------------
def _ref_forward(x, enc, params):
    def lin(z, w, b):
        return z @ w.T + b

    def ln(y, g, bb):
        mu = y.mean(-1, keepdims=True)
        var = ((y - mu) ** 2).mean(-1, keepdims=True)
        return (y - mu) / jnp.sqrt(var + EPS) * g + bb

    def mha_ref(qx, kx, p):
        t, b, _ = qx.shape
        s = kx.shape[0]
        q = lin(qx.reshape(t * b, -1), p["wq"], p["bq"]).reshape(t, b, E) * SCALE
        k = lin(kx.reshape(s * b, -1), p["wk"], p["bk"]).reshape(s, b, E)
        v = lin(kx.reshape(s * b, -1), p["wv"], p["bv"]).reshape(s, b, E)
        qh = q.reshape(t, b * H, DH).transpose(1, 0, 2)
        kh = k.reshape(s, b * H, DH).transpose(1, 0, 2)
        vh = v.reshape(s, b * H, DH).transpose(1, 0, 2)
        w = jax.nn.softmax(jnp.einsum("btd,bsd->bts", qh, kh), axis=-1)
        o = jnp.einsum("bts,bsd->btd", w, vh).transpose(1, 0, 2).reshape(t, b, E)
        o = lin(o.reshape(t * b, E), p["wo"], p["bo"]).reshape(t, b, E)
        return o, w.reshape(b, H, t, s).mean(axis=1)

    t, b, _ = x.shape
    res = x
    sa, _ = mha_ref(x, x, params["self_attn"])
    x = ln(sa + res, params["ln_self_g"], params["ln_self_b"])
    res = x
    ea, attn = mha_ref(x, enc, params["enc_attn"])
    x = ln(ea + res, params["ln_enc_g"], params["ln_enc_b"])
    res = x
    h = jnp.maximum(lin(x.reshape(t * b, E), params["w1"], params["b1"]), 0.0)
    f = lin(h, params["w2"], params["b2"]).reshape(t, b, E)
    x = ln(f + res, params["ln_final_g"], params["ln_final_b"])
    return x, attn


# ---------------------------- params init ------------------------------------
def _init_linear(key, dout, din):
    k1, k2 = jax.random.split(key)
    w = jax.random.normal(k1, (dout, din), jnp.float32) * 0.05
    b = jax.random.normal(k2, (dout,), jnp.float32) * 0.02
    return w, b


def init_params(key):
    keys = jax.random.split(key, 12)

    def attn_params(ks, kdim):
        wq, bq = _init_linear(ks[0], E, E)
        wk, bk = _init_linear(ks[1], E, kdim)
        wv, bv = _init_linear(ks[2], E, kdim)
        wo, bo = _init_linear(ks[3], E, E)
        return dict(wq=wq, bq=bq, wk=wk, bk=bk, wv=wv, bv=bv, wo=wo, bo=bo)

    self_attn = attn_params(jax.random.split(keys[0], 4), E)
    enc_attn = attn_params(jax.random.split(keys[1], 4), E_ENC)
    w1, b1 = _init_linear(keys[2], FFN, E)
    w2, b2 = _init_linear(keys[3], E, FFN)
    return dict(
        self_attn=self_attn,
        enc_attn=enc_attn,
        w1=w1, b1=b1, w2=w2, b2=b2,
        ln_self_g=jnp.ones((E,), jnp.float32), ln_self_b=jnp.zeros((E,), jnp.float32),
        ln_enc_g=jnp.ones((E,), jnp.float32), ln_enc_b=jnp.zeros((E,), jnp.float32),
        ln_final_g=jnp.ones((E,), jnp.float32), ln_final_b=jnp.zeros((E,), jnp.float32),
    )


# ---------------------------------- main --------------------------------------
if __name__ == "__main__":
    root = jax.random.PRNGKey(0)
    k_param, k_x, k_enc = jax.random.split(root, 3)
    params = init_params(k_param)
    packed = pack_decoder_params(params)          # one-time packing (NOT per call)

    x = jax.random.normal(k_x, (T, B, E), jnp.float32)            # (seq, batch, embed)
    encoder_out = jax.random.normal(k_enc, (S, B, E_ENC), jnp.float32)

    out, attn, extra = decoder_layer_forward(x, encoder_out, packed)
    out = jax.block_until_ready(out)
    attn = jax.block_until_ready(attn)

    ref_out, ref_attn = _ref_forward(x, encoder_out, params)
    assert out.shape == (T, B, E) and attn.shape == (B, T, S) and extra is None
    assert jnp.allclose(out, ref_out, atol=1e-4, rtol=1e-4), "output mismatch vs reference"
    assert jnp.allclose(attn, ref_attn, atol=1e-4, rtol=1e-4), "attn weights mismatch vs reference"

    print("KERNEL_OK")
</pallas_src>

<mosaic_0001>
module attributes {stable_mosaic.version = 11 : i64} {
  func.func @_decoder_layer_kernel(%arg0: memref<16x32xf32, #tpu.memory_space<vmem>>, %arg1: memref<24x48xf32, #tpu.memory_space<vmem>>, %arg2: memref<16x16xf32, #tpu.memory_space<vmem>>, %arg3: memref<32x96xf32, #tpu.memory_space<vmem>>, %arg4: memref<1x96xf32, #tpu.memory_space<vmem>>, %arg5: memref<32x32xf32, #tpu.memory_space<vmem>>, %arg6: memref<32x32xf32, #tpu.memory_space<vmem>>, %arg7: memref<48x64xf32, #tpu.memory_space<vmem>>, %arg8: memref<1x64xf32, #tpu.memory_space<vmem>>, %arg9: memref<32x32xf32, #tpu.memory_space<vmem>>, %arg10: memref<32x64xf32, #tpu.memory_space<vmem>>, %arg11: memref<1x64xf32, #tpu.memory_space<vmem>>, %arg12: memref<64x32xf32, #tpu.memory_space<vmem>>, %arg13: memref<10x32xf32, #tpu.memory_space<vmem>>, %arg14: memref<16x32xf32, #tpu.memory_space<vmem>>, %arg15: memref<2x8x12xf32, #tpu.memory_space<vmem>>) attributes {dimension_semantics = [], scalar_prefetch = 0 : i64, scratch_operands = 0 : i64, tpu.core_type = #tpu.core_type<tc>} {
    %c0 = arith.constant 0 : index
    %c0_0 = arith.constant 0 : index
    %0 = vector.load %arg13[%c0, %c0_0] : memref<10x32xf32, #tpu.memory_space<vmem>>, vector<10x32xf32>
    %c0_1 = arith.constant 0 : index
    %c0_2 = arith.constant 0 : index
    %1 = tpu.strided_load %arg0[%c0_1, %c0_2] {strides = array<i32: 2, 1>} : memref<16x32xf32, #tpu.memory_space<vmem>>, vector<8x32xf32>
    %c1 = arith.constant 1 : index
    %c0_3 = arith.constant 0 : index
    %2 = tpu.strided_load %arg0[%c1, %c0_3] {strides = array<i32: 2, 1>} : memref<16x32xf32, #tpu.memory_space<vmem>>, vector<8x32xf32>
    %3 = tpu.concatenate %1, %2 in 0 : vector<8x32xf32>, vector<8x32xf32> -> vector<16x32xf32>
    %c0_4 = arith.constant 0 : index
    %c0_5 = arith.constant 0 : index
    %4 = vector.load %arg3[%c0_4, %c0_5] : memref<32x96xf32, #tpu.memory_space<vmem>>, vector<32x96xf32>
    %cst = arith.constant dense<0.000000e+00> : vector<16x96xf32>
    %5 = tpu.matmul %3, %4, %cst {dimension_numbers = #tpu.dot_dimension_numbers<[1], [0], [0], [1], [0, 0, 1, 1], [], []>} : vector<16x32xf32>, vector<32x96xf32>, vector<16x96xf32> -> vector<16x96xf32>
    %c0_6 = arith.constant 0 : index
    %c0_7 = arith.constant 0 : index
    %6 = vector.load %arg4[%c0_6, %c0_7] : memref<1x96xf32, #tpu.memory_space<vmem>>, vector<1x96xf32>
    %7 = vector.broadcast %6 : vector<1x96xf32> to vector<16x96xf32>
    %8 = arith.addf %5, %7 : vector<16x96xf32>
    %c0_8 = arith.constant 0 : index
    %c0_9 = arith.constant 0 : index
    %9 = vector.load %arg5[%c0_8, %c0_9] : memref<32x32xf32, #tpu.memory_space<vmem>>, vector<32x32xf32>
    %10 = vector.extract_strided_slice %8 {offsets = [0, 0], sizes = [8, 96], strides = [1, 1]} : vector<16x96xf32> to vector<8x96xf32>
    %11 = vector.extract_strided_slice %8 {offsets = [0, 0], sizes = [8, 96], strides = [1, 1]} : vector<16x96xf32> to vector<8x96xf32>
    %12 = vector.extract_strided_slice %10 {offsets = [0, 0], sizes = [8, 8], strides = [1, 1]} : vector<8x96xf32> to vector<8x8xf32>
    %13 = vector.extract_strided_slice %11 {offsets = [0, 32], sizes = [8, 8], strides = [1, 1]} : vector<8x96xf32> to vector<8x8xf32>
    %cst_10 = arith.constant dense<0.000000e+00> : vector<8x8xf32>
    %14 = tpu.matmul %12, %13, %cst_10 {dimension_numbers = #tpu.dot_dimension_numbers<[1], [1], [0], [0], [0, 0, 1, 0], [], []>} : vector<8x8xf32>, vector<8x8xf32>, vector<8x8xf32> -> vector<8x8xf32>
    %15 = vector.extract_strided_slice %10 {offsets = [0, 8], sizes = [8, 8], strides = [1, 1]} : vector<8x96xf32> to vector<8x8xf32>
    %16 = vector.extract_strided_slice %11 {offsets = [0, 40], sizes = [8, 8], strides = [1, 1]} : vector<8x96xf32> to vector<8x8xf32>
    %cst_11 = arith.constant dense<0.000000e+00> : vector<8x8xf32>
    %17 = tpu.matmul %15, %16, %cst_11 {dimension_numbers = #tpu.dot_dimension_numbers<[1], [1], [0], [0], [0, 0, 1, 0], [], []>} : vector<8x8xf32>, vector<8x8xf32>, vector<8x8xf32> -> vector<8x8xf32>
    %18 = vector.extract_strided_slice %10 {offsets = [0, 16], sizes = [8, 8], strides = [1, 1]} : vector<8x96xf32> to vector<8x8xf32>
    %19 = vector.extract_strided_slice %11 {offsets = [0, 48], sizes = [8, 8], strides = [1, 1]} : vector<8x96xf32> to vector<8x8xf32>
    %cst_12 = arith.constant dense<0.000000e+00> : vector<8x8xf32>
    %20 = tpu.matmul %18, %19, %cst_12 {dimension_numbers = #tpu.dot_dimension_numbers<[1], [1], [0], [0], [0, 0, 1, 0], [], []>} : vector<8x8xf32>, vector<8x8xf32>, vector<8x8xf32> -> vector<8x8xf32>
    %21 = vector.extract_strided_slice %10 {offsets = [0, 24], sizes = [8, 8], strides = [1, 1]} : vector<8x96xf32> to vector<8x8xf32>
    %22 = vector.extract_strided_slice %11 {offsets = [0, 56], sizes = [8, 8], strides = [1, 1]} : vector<8x96xf32> to vector<8x8xf32>
    %cst_13 = arith.constant dense<0.000000e+00> : vector<8x8xf32>
    %23 = tpu.matmul %21, %22, %cst_13 {dimension_numbers = #tpu.dot_dimension_numbers<[1], [1], [0], [0], [0, 0, 1, 0], [], []>} : vector<8x8xf32>, vector<8x8xf32>, vector<8x8xf32> -> vector<8x8xf32>
    %24 = vector.extract_strided_slice %8 {offsets = [8, 0], sizes = [8, 96], strides = [1, 1]} : vector<16x96xf32> to vector<8x96xf32>
    %25 = vector.extract_strided_slice %8 {offsets = [8, 0], sizes = [8, 96], strides = [1, 1]} : vector<16x96xf32> to vector<8x96xf32>
    %26 = vector.extract_strided_slice %24 {offsets = [0, 0], sizes = [8, 8], strides = [1, 1]} : vector<8x96xf32> to vector<8x8xf32>
    %27 = vector.extract_strided_slice %25 {offsets = [0, 32], sizes = [8, 8], strides = [1, 1]} : vector<8x96xf32> to vector<8x8xf32>
    %cst_14 = arith.constant dense<0.000000e+00> : vector<8x8xf32>
    %28 = tpu.matmul %26, %27, %cst_14 {dimension_numbers = #tpu.dot_dimension_numbers<[1], [1], [0], [0], [0, 0, 1, 0], [], []>} : vector<8x8xf32>, vector<8x8xf32>, vector<8x8xf32> -> vector<8x8xf32>
    %29 = vector.extract_strided_slice %24 {offsets = [0, 8], sizes = [8, 8], strides = [1, 1]} : vector<8x96xf32> to vector<8x8xf32>
    %30 = vector.extract_strided_slice %25 {offsets = [0, 40], sizes = [8, 8], strides = [1, 1]} : vector<8x96xf32> to vector<8x8xf32>
    %cst_15 = arith.constant dense<0.000000e+00> : vector<8x8xf32>
    %31 = tpu.matmul %29, %30, %cst_15 {dimension_numbers = #tpu.dot_dimension_numbers<[1], [1], [0], [0], [0, 0, 1, 0], [], []>} : vector<8x8xf32>, vector<8x8xf32>, vector<8x8xf32> -> vector<8x8xf32>
    %32 = vector.extract_strided_slice %24 {offsets = [0, 16], sizes = [8, 8], strides = [1, 1]} : vector<8x96xf32> to vector<8x8xf32>
    %33 = vector.extract_strided_slice %25 {offsets = [0, 48], sizes = [8, 8], strides = [1, 1]} : vector<8x96xf32> to vector<8x8xf32>
    %cst_16 = arith.constant dense<0.000000e+00> : vector<8x8xf32>
    %34 = tpu.matmul %32, %33, %cst_16 {dimension_numbers = #tpu.dot_dimension_numbers<[1], [1], [0], [0], [0, 0, 1, 0], [], []>} : vector<8x8xf32>, vector<8x8xf32>, vector<8x8xf32> -> vector<8x8xf32>
    %35 = vector.extract_strided_slice %24 {offsets = [0, 24], sizes = [8, 8], strides = [1, 1]} : vector<8x96xf32> to vector<8x8xf32>
    %36 = vector.extract_strided_slice %25 {offsets = [0, 56], sizes = [8, 8], strides = [1, 1]} : vector<8x96xf32> to vector<8x8xf32>
    %cst_17 = arith.constant dense<0.000000e+00> : vector<8x8xf32>
    %37 = tpu.matmul %35, %36, %cst_17 {dimension_numbers = #tpu.dot_dimension_numbers<[1], [1], [0], [0], [0, 0, 1, 0], [], []>} : vector<8x8xf32>, vector<8x8xf32>, vector<8x8xf32> -> vector<8x8xf32>
    %38 = tpu.concatenate %14, %17, %20, %23, %28, %31, %34, %37 in 0 : vector<8x8xf32>, vector<8x8xf32>, vector<8x8xf32>, vector<8x8xf32>, vector<8x8xf32>, vector<8x8xf32>, vector<8x8xf32>, vector<8x8xf32> -> vector<64x8xf32>
    %cst_18 = arith.constant dense<0xFF800000> : vector<64xf32>
    %39 = vector.multi_reduction <maximumf>, %38, %cst_18 [1] : vector<64x8xf32> to vector<64xf32>
    %40 = vector.shape_cast %39 : vector<64xf32> to vector<64x1xf32>
    %41 = vector.broadcast %40 : vector<64x1xf32> to vector<64x8xf32>
    %42 = arith.subf %38, %41 : vector<64x8xf32>
    %43 = math.exp %42 : vector<64x8xf32>
    %cst_19 = arith.constant dense<0.000000e+00> : vector<64xf32>
    %44 = vector.multi_reduction <add>, %43, %cst_19 [1] : vector<64x8xf32> to vector<64xf32>
    %45 = vector.shape_cast %44 : vector<64xf32> to vector<64x1xf32>
    %46 = tpu.reciprocal %45 : vector<64x1xf32> -> vector<64x1xf32>
    %47 = vector.broadcast %46 : vector<64x1xf32> to vector<64x8xf32>
    %48 = arith.mulf %43, %47 : vector<64x8xf32>
    %49 = vector.extract_strided_slice %8 {offsets = [0, 0], sizes = [8, 96], strides = [1, 1]} : vector<16x96xf32> to vector<8x96xf32>
    %50 = vector.extract_strided_slice %48 {offsets = [0, 0], sizes = [8, 8], strides = [1, 1]} : vector<64x8xf32> to vector<8x8xf32>
    %51 = vector.extract_strided_slice %49 {offsets = [0, 64], sizes = [8, 8], strides = [1, 1]} : vector<8x96xf32> to vector<8x8xf32>
    %cst_20 = arith.constant dense<0.000000e+00> : vector<8x8xf32>
    %52 = tpu.matmul %50, %51, %cst_20 {dimension_numbers = #tpu.dot_dimension_numbers<[1], [0], [0], [1], [0, 0, 1, 1], [], []>} : vector<8x8xf32>, vector<8x8xf32>, vector<8x8xf32> -> vector<8x8xf32>
    %53 = vector.extract_strided_slice %9 {offsets = [0, 0], sizes = [8, 32], strides = [1, 1]} : vector<32x32xf32> to vector<8x32xf32>
    %cst_21 = arith.constant dense<0.000000e+00> : vector<8x32xf32>
    %54 = tpu.matmul %52, %53, %cst_21 {dimension_numbers = #tpu.dot_dimension_numbers<[1], [0], [0], [1], [0, 0, 1, 1], [], []>} : vector<8x8xf32>, vector<8x32xf32>, vector<8x32xf32> -> vector<8x32xf32>
    %55 = vector.extract_strided_slice %48 {offsets = [8, 0], sizes = [8, 8], strides = [1, 1]} : vector<64x8xf32> to vector<8x8xf32>
    %56 = vector.extract_strided_slice %49 {offsets = [0, 72], sizes = [8, 8], strides = [1, 1]} : vector<8x96xf32> to vector<8x8xf32>
    %cst_22 = arith.constant dense<0.000000e+00> : vector<8x8xf32>
    %57 = tpu.matmul %55, %56, %cst_22 {dimension_numbers = #tpu.dot_dimension_numbers<[1], [0], [0], [1], [0, 0, 1, 1], [], []>} : vector<8x8xf32>, vector<8x8xf32>, vector<8x8xf32> -> vector<8x8xf32>
    %58 = vector.extract_strided_slice %9 {offsets = [8, 0], sizes = [8, 32], strides = [1, 1]} : vector<32x32xf32> to vector<8x32xf32>
    %cst_23 = arith.constant dense<0.000000e+00> : vector<8x32xf32>
    %59 = tpu.matmul %57, %58, %cst_23 {dimension_numbers = #tpu.dot_dimension_numbers<[1], [0], [0], [1], [0, 0, 1, 1], [], []>} : vector<8x8xf32>, vector<8x32xf32>, vector<8x32xf32> -> vector<8x32xf32>
    %60 = arith.addf %54, %59 : vector<8x32xf32>
    %61 = vector.extract_strided_slice %48 {offsets = [16, 0], sizes = [8, 8], strides = [1, 1]} : vector<64x8xf32> to vector<8x8xf32>
    %62 = vector.extract_strided_slice %49 {offsets = [0, 80], sizes = [8, 8], strides = [1, 1]} : vector<8x96xf32> to vector<8x8xf32>
    %cst_24 = arith.constant dense<0.000000e+00> : vector<8x8xf32>
    %63 = tpu.matmul %61, %62, %cst_24 {dimension_numbers = #tpu.dot_dimension_numbers<[1], [0], [0], [1], [0, 0, 1, 1], [], []>} : vector<8x8xf32>, vector<8x8xf32>, vector<8x8xf32> -> vector<8x8xf32>
    %64 = vector.extract_strided_slice %9 {offsets = [16, 0], sizes = [8, 32], strides = [1, 1]} : vector<32x32xf32> to vector<8x32xf32>
    %cst_25 = arith.constant dense<0.000000e+00> : vector<8x32xf32>
    %65 = tpu.matmul %63, %64, %cst_25 {dimension_numbers = #tpu.dot_dimension_numbers<[1], [0], [0], [1], [0, 0, 1, 1], [], []>} : vector<8x8xf32>, vector<8x32xf32>, vector<8x32xf32> -> vector<8x32xf32>
    %66 = arith.addf %60, %65 : vector<8x32xf32>
    %67 = vector.extract_strided_slice %48 {offsets = [24, 0], sizes = [8, 8], strides = [1, 1]} : vector<64x8xf32> to vector<8x8xf32>
    %68 = vector.extract_strided_slice %49 {offsets = [0, 88], sizes = [8, 8], strides = [1, 1]} : vector<8x96xf32> to vector<8x8xf32>
    %cst_26 = arith.constant dense<0.000000e+00> : vector<8x8xf32>
    %69 = tpu.matmul %67, %68, %cst_26 {dimension_numbers = #tpu.dot_dimension_numbers<[1], [0], [0], [1], [0, 0, 1, 1], [], []>} : vector<8x8xf32>, vector<8x8xf32>, vector<8x8xf32> -> vector<8x8xf32>
    %70 = vector.extract_strided_slice %9 {offsets = [24, 0], sizes = [8, 32], strides = [1, 1]} : vector<32x32xf32> to vector<8x32xf32>
    %cst_27 = arith.constant dense<0.000000e+00> : vector<8x32xf32>
    %71 = tpu.matmul %69, %70, %cst_27 {dimension_numbers = #tpu.dot_dimension_numbers<[1], [0], [0], [1], [0, 0, 1, 1], [], []>} : vector<8x8xf32>, vector<8x32xf32>, vector<8x32xf32> -> vector<8x32xf32>
    %72 = arith.addf %66, %71 : vector<8x32xf32>
    %73 = vector.extract_strided_slice %8 {offsets = [8, 0], sizes = [8, 96], strides = [1, 1]} : vector<16x96xf32> to vector<8x96xf32>
    %74 = vector.extract_strided_slice %48 {offsets = [32, 0], sizes = [8, 8], strides = [1, 1]} : vector<64x8xf32> to vector<8x8xf32>
    %75 = vector.extract_strided_slice %73 {offsets = [0, 64], sizes = [8, 8], strides = [1, 1]} : vector<8x96xf32> to vector<8x8xf32>
    %cst_28 = arith.constant dense<0.000000e+00> : vector<8x8xf32>
    %76 = tpu.matmul %74, %75, %cst_28 {dimension_numbers = #tpu.dot_dimension_numbers<[1], [0], [0], [1], [0, 0, 1, 1], [], []>} : vector<8x8xf32>, vector<8x8xf32>, vector<8x8xf32> -> vector<8x8xf32>
    %77 = vector.extract_strided_slice %9 {offsets = [0, 0], sizes = [8, 32], strides = [1, 1]} : vector<32x32xf32> to vector<8x32xf32>
    %cst_29 = arith.constant dense<0.000000e+00> : vector<8x32xf32>
    %78 = tpu.matmul %76, %77, %cst_29 {dimension_numbers = #tpu.dot_dimension_numbers<[1], [0], [0], [1], [0, 0, 1, 1], [], []>} : vector<8x8xf32>, vector<8x32xf32>, vector<8x32xf32> -> vector<8x32xf32>
    %79 = vector.extract_strided_slice %48 {offsets = [40, 0], sizes = [8, 8], strides = [1, 1]} : vector<64x8xf32> to vector<8x8xf32>
    %80 = vector.extract_strided_slice %73 {offsets = [0, 72], sizes = [8, 8], strides = [1, 1]} : vector<8x96xf32> to vector<8x8xf32>
    %cst_30 = arith.constant dense<0.000000e+00> : vector<8x8xf32>
    %81 = tpu.matmul %79, %80, %cst_30 {dimension_numbers = #tpu.dot_dimension_numbers<[1], [0], [0], [1], [0, 0, 1, 1], [], []>} : vector<8x8xf32>, vector<8x8xf32>, vector<8x8xf32> -> vector<8x8xf32>
    %82 = vector.extract_strided_slice %9 {offsets = [8, 0], sizes = [8, 32], strides = [1, 1]} : vector<32x32xf32> to vector<8x32xf32>
    %cst_31 = arith.constant dense<0.000000e+00> : vector<8x32xf32>
    %83 = tpu.matmul %81, %82, %cst_31 {dimension_numbers = #tpu.dot_dimension_numbers<[1], [0], [0], [1], [0, 0, 1, 1], [], []>} : vector<8x8xf32>, vector<8x32xf32>, vector<8x32xf32> -> vector<8x32xf32>
    %84 = arith.addf %78, %83 : vector<8x32xf32>
    %85 = vector.extract_strided_slice %48 {offsets = [48, 0], sizes = [8, 8], strides = [1, 1]} : vector<64x8xf32> to vector<8x8xf32>
    %86 = vector.extract_strided_slice %73 {offsets = [0, 80], sizes = [8, 8], strides = [1, 1]} : vector<8x96xf32> to vector<8x8xf32>
    %cst_32 = arith.constant dense<0.000000e+00> : vector<8x8xf32>
    %87 = tpu.matmul %85, %86, %cst_32 {dimension_numbers = #tpu.dot_dimension_numbers<[1], [0], [0], [1], [0, 0, 1, 1], [], []>} : vector<8x8xf32>, vector<8x8xf32>, vector<8x8xf32> -> vector<8x8xf32>
    %88 = vector.extract_strided_slice %9 {offsets = [16, 0], sizes = [8, 32], strides = [1, 1]} : vector<32x32xf32> to vector<8x32xf32>
    %cst_33 = arith.constant dense<0.000000e+00> : vector<8x32xf32>
    %89 = tpu.matmul %87, %88, %cst_33 {dimension_numbers = #tpu.dot_dimension_numbers<[1], [0], [0], [1], [0, 0, 1, 1], [], []>} : vector<8x8xf32>, vector<8x32xf32>, vector<8x32xf32> -> vector<8x32xf32>
    %90 = arith.addf %84, %89 : vector<8x32xf32>
    %91 = vector.extract_strided_slice %48 {offsets = [56, 0], sizes = [8, 8], strides = [1, 1]} : vector<64x8xf32> to vector<8x8xf32>
    %92 = vector.extract_strided_slice %73 {offsets = [0, 88], sizes = [8, 8], strides = [1, 1]} : vector<8x96xf32> to vector<8x8xf32>
    %cst_34 = arith.constant dense<0.000000e+00> : vector<8x8xf32>
    %93 = tpu.matmul %91, %92, %cst_34 {dimension_numbers = #tpu.dot_dimension_numbers<[1], [0], [0], [1], [0, 0, 1, 1], [], []>} : vector<8x8xf32>, vector<8x8xf32>, vector<8x8xf32> -> vector<8x8xf32>
    %94 = vector.extract_strided_slice %9 {offsets = [24, 0], sizes = [8, 32], strides = [1, 1]} : vector<32x32xf32> to vector<8x32xf32>
    %cst_35 = arith.constant dense<0.000000e+00> : vector<8x32xf32>
    %95 = tpu.matmul %93, %94, %cst_35 {dimension_numbers = #tpu.dot_dimension_numbers<[1], [0], [0], [1], [0, 0, 1, 1], [], []>} : vector<8x8xf32>, vector<8x32xf32>, vector<8x32xf32> -> vector<8x32xf32>
    %96 = arith.addf %90, %95 : vector<8x32xf32>
    %97 = tpu.concatenate %72, %96 in 0 : vector<8x32xf32>, vector<8x32xf32> -> vector<16x32xf32>
    %98 = vector.extract_strided_slice %0 {offsets = [0, 0], sizes = [1, 32], strides = [1, 1]} : vector<10x32xf32> to vector<1x32xf32>
    %99 = vector.broadcast %98 : vector<1x32xf32> to vector<16x32xf32>
    %100 = arith.addf %97, %99 : vector<16x32xf32>
    %101 = arith.addf %100, %3 : vector<16x32xf32>
    %102 = vector.extract_strided_slice %0 {offsets = [1, 0], sizes = [1, 32], strides = [1, 1]} : vector<10x32xf32> to vector<1x32xf32>
    %103 = vector.extract_strided_slice %0 {offsets = [2, 0], sizes = [1, 32], strides = [1, 1]} : vector<10x32xf32> to vector<1x32xf32>
    %cst_36 = arith.constant dense<0.000000e+00> : vector<16xf32>
    %104 = vector.multi_reduction <add>, %101, %cst_36 [1] : vector<16x32xf32> to vector<16xf32>
    %105 = vector.shape_cast %104 : vector<16xf32> to vector<16x1xf32>
    %cst_37 = arith.constant 3.200000e+01 : f32
    %106 = vector.broadcast %cst_37 : f32 to vector<16x1xf32>
    %107 = arith.divf %105, %106 : vector<16x1xf32>
    %108 = vector.broadcast %107 : vector<16x1xf32> to vector<16x32xf32>
    %109 = arith.subf %101, %108 : vector<16x32xf32>
    %110 = arith.mulf %109, %109 : vector<16x32xf32>
    %cst_38 = arith.constant dense<0.000000e+00> : vector<16xf32>
    %111 = vector.multi_reduction <add>, %110, %cst_38 [1] : vector<16x32xf32> to vector<16xf32>
    %112 = vector.shape_cast %111 : vector<16xf32> to vector<16x1xf32>
    %cst_39 = arith.constant 3.200000e+01 : f32
    %113 = vector.broadcast %cst_39 : f32 to vector<16x1xf32>
    %114 = arith.divf %112, %113 : vector<16x1xf32>
    %115 = vector.broadcast %107 : vector<16x1xf32> to vector<16x32xf32>
    %116 = arith.subf %101, %115 : vector<16x32xf32>
    %cst_40 = arith.constant 9.99999974E-6 : f32
    %117 = vector.broadcast %cst_40 : f32 to vector<16x1xf32>
    %118 = arith.addf %114, %117 : vector<16x1xf32>
    %119 = math.rsqrt %118 : vector<16x1xf32>
    %120 = vector.broadcast %119 : vector<16x1xf32> to vector<16x32xf32>
    %121 = arith.mulf %116, %120 : vector<16x32xf32>
    %122 = vector.broadcast %102 : vector<1x32xf32> to vector<16x32xf32>
    %123 = arith.mulf %121, %122 : vector<16x32xf32>
    %124 = vector.broadcast %103 : vector<1x32xf32> to vector<16x32xf32>
    %125 = arith.addf %123, %124 : vector<16x32xf32>
    %c0_41 = arith.constant 0 : index
    %c0_42 = arith.constant 0 : index
    %126 = tpu.strided_load %arg1[%c0_41, %c0_42] {strides = array<i32: 2, 1>} : memref<24x48xf32, #tpu.memory_space<vmem>>, vector<12x48xf32>
    %c1_43 = arith.constant 1 : index
    %c0_44 = arith.constant 0 : index
    %127 = tpu.strided_load %arg1[%c1_43, %c0_44] {strides = array<i32: 2, 1>} : memref<24x48xf32, #tpu.memory_space<vmem>>, vector<12x48xf32>
    %128 = tpu.concatenate %126, %127 in 0 : vector<12x48xf32>, vector<12x48xf32> -> vector<24x48xf32>
    %c0_45 = arith.constant 0 : index
    %c0_46 = arith.constant 0 : index
    %129 = vector.load %arg6[%c0_45, %c0_46] : memref<32x32xf32, #tpu.memory_space<vmem>>, vector<32x32xf32>
    %cst_47 = arith.constant dense<0.000000e+00> : vector<16x32xf32>
    %130 = tpu.matmul %125, %129, %cst_47 {dimension_numbers = #tpu.dot_dimension_numbers<[1], [0], [0], [1], [0, 0, 1, 1], [], []>} : vector<16x32xf32>, vector<32x32xf32>, vector<16x32xf32> -> vector<16x32xf32>
    %131 = vector.extract_strided_slice %0 {offsets = [3, 0], sizes = [1, 32], strides = [1, 1]} : vector<10x32xf32> to vector<1x32xf32>
    %132 = vector.broadcast %131 : vector<1x32xf32> to vector<16x32xf32>
    %133 = arith.addf %130, %132 : vector<16x32xf32>
    %c0_48 = arith.constant 0 : index
    %c0_49 = arith.constant 0 : index
    %134 = vector.load %arg7[%c0_48, %c0_49] : memref<48x64xf32, #tpu.memory_space<vmem>>, vector<48x64xf32>
    %cst_50 = arith.constant dense<0.000000e+00> : vector<24x64xf32>
    %135 = tpu.matmul %128, %134, %cst_50 {dimension_numbers = #tpu.dot_dimension_numbers<[1], [0], [0], [1], [0, 0, 1, 1], [], []>} : vector<24x48xf32>, vector<48x64xf32>, vector<24x64xf32> -> vector<24x64xf32>
    %c0_51 = arith.constant 0 : index
    %c0_52 = arith.constant 0 : index
    %136 = vector.load %arg8[%c0_51, %c0_52] : memref<1x64xf32, #tpu.memory_space<vmem>>, vector<1x64xf32>
    %137 = vector.broadcast %136 : vector<1x64xf32> to vector<24x64xf32>
    %138 = arith.addf %135, %137 : vector<24x64xf32>
    %c0_53 = arith.constant 0 : index
    %c0_54 = arith.constant 0 : index
    %139 = vector.load %arg9[%c0_53, %c0_54] : memref<32x32xf32, #tpu.memory_space<vmem>>, vector<32x32xf32>
    %140 = vector.extract_strided_slice %133 {offsets = [0, 0], sizes = [8, 32], strides = [1, 1]} : vector<16x32xf32> to vector<8x32xf32>
    %141 = vector.extract_strided_slice %138 {offsets = [0, 0], sizes = [12, 64], strides = [1, 1]} : vector<24x64xf32> to vector<12x64xf32>
    %142 = vector.extract_strided_slice %140 {offsets = [0, 0], sizes = [8, 8], strides = [1, 1]} : vector<8x32xf32> to vector<8x8xf32>
    %143 = vector.extract_strided_slice %141 {offsets = [0, 0], sizes = [12, 8], strides = [1, 1]} : vector<12x64xf32> to vector<12x8xf32>
    %cst_55 = arith.constant dense<0.000000e+00> : vector<8x12xf32>
    %144 = tpu.matmul %142, %143, %cst_55 {dimension_numbers = #tpu.dot_dimension_numbers<[1], [1], [0], [0], [0, 0, 1, 0], [], []>} : vector<8x8xf32>, vector<12x8xf32>, vector<8x12xf32> -> vector<8x12xf32>
    %145 = vector.extract_strided_slice %140 {offsets = [0, 8], sizes = [8, 8], strides = [1, 1]} : vector<8x32xf32> to vector<8x8xf32>
    %146 = vector.extract_strided_slice %141 {offsets = [0, 8], sizes = [12, 8], strides = [1, 1]} : vector<12x64xf32> to vector<12x8xf32>
    %cst_56 = arith.constant dense<0.000000e+00> : vector<8x12xf32>
    %147 = tpu.matmul %145, %146, %cst_56 {dimension_numbers = #tpu.dot_dimension_numbers<[1], [1], [0], [0], [0, 0, 1, 0], [], []>} : vector<8x8xf32>, vector<12x8xf32>, vector<8x12xf32> -> vector<8x12xf32>
    %148 = vector.extract_strided_slice %140 {offsets = [0, 16], sizes = [8, 8], strides = [1, 1]} : vector<8x32xf32> to vector<8x8xf32>
    %149 = vector.extract_strided_slice %141 {offsets = [0, 16], sizes = [12, 8], strides = [1, 1]} : vector<12x64xf32> to vector<12x8xf32>
    %cst_57 = arith.constant dense<0.000000e+00> : vector<8x12xf32>
    %150 = tpu.matmul %148, %149, %cst_57 {dimension_numbers = #tpu.dot_dimension_numbers<[1], [1], [0], [0], [0, 0, 1, 0], [], []>} : vector<8x8xf32>, vector<12x8xf32>, vector<8x12xf32> -> vector<8x12xf32>
    %151 = vector.extract_strided_slice %140 {offsets = [0, 24], sizes = [8, 8], strides = [1, 1]} : vector<8x32xf32> to vector<8x8xf32>
    %152 = vector.extract_strided_slice %141 {offsets = [0, 24], sizes = [12, 8], strides = [1, 1]} : vector<12x64xf32> to vector<12x8xf32>
    %cst_58 = arith.constant dense<0.000000e+00> : vector<8x12xf32>
    %153 = tpu.matmul %151, %152, %cst_58 {dimension_numbers = #tpu.dot_dimension_numbers<[1], [1], [0], [0], [0, 0, 1, 0], [], []>} : vector<8x8xf32>, vector<12x8xf32>, vector<8x12xf32> -> vector<8x12xf32>
    %154 = vector.extract_strided_slice %133 {offsets = [8, 0], sizes = [8, 32], strides = [1, 1]} : vector<16x32xf32> to vector<8x32xf32>
    %155 = vector.extract_strided_slice %138 {offsets = [12, 0], sizes = [12, 64], strides = [1, 1]} : vector<24x64xf32> to vector<12x64xf32>
    %156 = vector.extract_strided_slice %154 {offsets = [0, 0], sizes = [8, 8], strides = [1, 1]} : vector<8x32xf32> to vector<8x8xf32>
    %157 = vector.extract_strided_slice %155 {offsets = [0, 0], sizes = [12, 8], strides = [1, 1]} : vector<12x64xf32> to vector<12x8xf32>
    %cst_59 = arith.constant dense<0.000000e+00> : vector<8x12xf32>
    %158 = tpu.matmul %156, %157, %cst_59 {dimension_numbers = #tpu.dot_dimension_numbers<[1], [1], [0], [0], [0, 0, 1, 0], [], []>} : vector<8x8xf32>, vector<12x8xf32>, vector<8x12xf32> -> vector<8x12xf32>
    %159 = vector.extract_strided_slice %154 {offsets = [0, 8], sizes = [8, 8], strides = [1, 1]} : vector<8x32xf32> to vector<8x8xf32>
    %160 = vector.extract_strided_slice %155 {offsets = [0, 8], sizes = [12, 8], strides = [1, 1]} : vector<12x64xf32> to vector<12x8xf32>
    %cst_60 = arith.constant dense<0.000000e+00> : vector<8x12xf32>
    %161 = tpu.matmul %159, %160, %cst_60 {dimension_numbers = #tpu.dot_dimension_numbers<[1], [1], [0], [0], [0, 0, 1, 0], [], []>} : vector<8x8xf32>, vector<12x8xf32>, vector<8x12xf32> -> vector<8x12xf32>
    %162 = vector.extract_strided_slice %154 {offsets = [0, 16], sizes = [8, 8], strides = [1, 1]} : vector<8x32xf32> to vector<8x8xf32>
    %163 = vector.extract_strided_slice %155 {offsets = [0, 16], sizes = [12, 8], strides = [1, 1]} : vector<12x64xf32> to vector<12x8xf32>
    %cst_61 = arith.constant dense<0.000000e+00> : vector<8x12xf32>
    %164 = tpu.matmul %162, %163, %cst_61 {dimension_numbers = #tpu.dot_dimension_numbers<[1], [1], [0], [0], [0, 0, 1, 0], [], []>} : vector<8x8xf32>, vector<12x8xf32>, vector<8x12xf32> -> vector<8x12xf32>
    %165 = vector.extract_strided_slice %154 {offsets = [0, 24], sizes = [8, 8], strides = [1, 1]} : vector<8x32xf32> to vector<8x8xf32>
    %166 = vector.extract_strided_slice %155 {offsets = [0, 24], sizes = [12, 8], strides = [1, 1]} : vector<12x64xf32> to vector<12x8xf32>
    %cst_62 = arith.constant dense<0.000000e+00> : vector<8x12xf32>
    %167 = tpu.matmul %165, %166, %cst_62 {dimension_numbers = #tpu.dot_dimension_numbers<[1], [1], [0], [0], [0, 0, 1, 0], [], []>} : vector<8x8xf32>, vector<12x8xf32>, vector<8x12xf32> -> vector<8x12xf32>
    %168 = tpu.concatenate %144, %147, %150, %153, %158, %161, %164, %167 in 0 : vector<8x12xf32>, vector<8x12xf32>, vector<8x12xf32>, vector<8x12xf32>, vector<8x12xf32>, vector<8x12xf32>, vector<8x12xf32>, vector<8x12xf32> -> vector<64x12xf32>
    %cst_63 = arith.constant dense<0xFF800000> : vector<64xf32>
    %169 = vector.multi_reduction <maximumf>, %168, %cst_63 [1] : vector<64x12xf32> to vector<64xf32>
    %170 = vector.shape_cast %169 : vector<64xf32> to vector<64x1xf32>
    %171 = vector.broadcast %170 : vector<64x1xf32> to vector<64x12xf32>
    %172 = arith.subf %168, %171 : vector<64x12xf32>
    %173 = math.exp %172 : vector<64x12xf32>
    %cst_64 = arith.constant dense<0.000000e+00> : vector<64xf32>
    %174 = vector.multi_reduction <add>, %173, %cst_64 [1] : vector<64x12xf32> to vector<64xf32>
    %175 = vector.shape_cast %174 : vector<64xf32> to vector<64x1xf32>
    %176 = tpu.reciprocal %175 : vector<64x1xf32> -> vector<64x1xf32>
    %177 = vector.broadcast %176 : vector<64x1xf32> to vector<64x12xf32>
    %178 = arith.mulf %173, %177 : vector<64x12xf32>
    %179 = vector.extract_strided_slice %138 {offsets = [0, 0], sizes = [12, 64], strides = [1, 1]} : vector<24x64xf32> to vector<12x64xf32>
    %180 = vector.extract_strided_slice %178 {offsets = [0, 0], sizes = [8, 12], strides = [1, 1]} : vector<64x12xf32> to vector<8x12xf32>
    %181 = vector.extract_strided_slice %179 {offsets = [0, 32], sizes = [12, 8], strides = [1, 1]} : vector<12x64xf32> to vector<12x8xf32>
    %cst_65 = arith.constant dense<0.000000e+00> : vector<8x8xf32>
    %182 = tpu.matmul %180, %181, %cst_65 {dimension_numbers = #tpu.dot_dimension_numbers<[1], [0], [0], [1], [0, 0, 1, 1], [], []>} : vector<8x12xf32>, vector<12x8xf32>, vector<8x8xf32> -> vector<8x8xf32>
    %183 = vector.extract_strided_slice %139 {offsets = [0, 0], sizes = [8, 32], strides = [1, 1]} : vector<32x32xf32> to vector<8x32xf32>
    %cst_66 = arith.constant dense<0.000000e+00> : vector<8x32xf32>
    %184 = tpu.matmul %182, %183, %cst_66 {dimension_numbers = #tpu.dot_dimension_numbers<[1], [0], [0], [1], [0, 0, 1, 1], [], []>} : vector<8x8xf32>, vector<8x32xf32>, vector<8x32xf32> -> vector<8x32xf32>
    %185 = vector.extract_strided_slice %178 {offsets = [8, 0], sizes = [8, 12], strides = [1, 1]} : vector<64x12xf32> to vector<8x12xf32>
    %186 = vector.extract_strided_slice %179 {offsets = [0, 40], sizes = [12, 8], strides = [1, 1]} : vector<12x64xf32> to vector<12x8xf32>
    %cst_67 = arith.constant dense<0.000000e+00> : vector<8x8xf32>
    %187 = tpu.matmul %185, %186, %cst_67 {dimension_numbers = #tpu.dot_dimension_numbers<[1], [0], [0], [1], [0, 0, 1, 1], [], []>} : vector<8x12xf32>, vector<12x8xf32>, vector<8x8xf32> -> vector<8x8xf32>
    %188 = vector.extract_strided_slice %139 {offsets = [8, 0], sizes = [8, 32], strides = [1, 1]} : vector<32x32xf32> to vector<8x32xf32>
    %cst_68 = arith.constant dense<0.000000e+00> : vector<8x32xf32>
    %189 = tpu.matmul %187, %188, %cst_68 {dimension_numbers = #tpu.dot_dimension_numbers<[1], [0], [0], [1], [0, 0, 1, 1], [], []>} : vector<8x8xf32>, vector<8x32xf32>, vector<8x32xf32> -> vector<8x32xf32>
    %190 = arith.addf %184, %189 : vector<8x32xf32>
    %191 = arith.addf %180, %185 : vector<8x12xf32>
    %192 = vector.extract_strided_slice %178 {offsets = [16, 0], sizes = [8, 12], strides = [1, 1]} : vector<64x12xf32> to vector<8x12xf32>
    %193 = vector.extract_strided_slice %179 {offsets = [0, 48], sizes = [12, 8], strides = [1, 1]} : vector<12x64xf32> to vector<12x8xf32>
    %cst_69 = arith.constant dense<0.000000e+00> : vector<8x8xf32>
    %194 = tpu.matmul %192, %193, %cst_69 {dimension_numbers = #tpu.dot_dimension_numbers<[1], [0], [0], [1], [0, 0, 1, 1], [], []>} : vector<8x12xf32>, vector<12x8xf32>, vector<8x8xf32> -> vector<8x8xf32>
    %195 = vector.extract_strided_slice %139 {offsets = [16, 0], sizes = [8, 32], strides = [1, 1]} : vector<32x32xf32> to vector<8x32xf32>
    %cst_70 = arith.constant dense<0.000000e+00> : vector<8x32xf32>
    %196 = tpu.matmul %194, %195, %cst_70 {dimension_numbers = #tpu.dot_dimension_numbers<[1], [0], [0], [1], [0, 0, 1, 1], [], []>} : vector<8x8xf32>, vector<8x32xf32>, vector<8x32xf32> -> vector<8x32xf32>
    %197 = arith.addf %190, %196 : vector<8x32xf32>
    %198 = arith.addf %191, %192 : vector<8x12xf32>
    %199 = vector.extract_strided_slice %178 {offsets = [24, 0], sizes = [8, 12], strides = [1, 1]} : vector<64x12xf32> to vector<8x12xf32>
    %200 = vector.extract_strided_slice %179 {offsets = [0, 56], sizes = [12, 8], strides = [1, 1]} : vector<12x64xf32> to vector<12x8xf32>
    %cst_71 = arith.constant dense<0.000000e+00> : vector<8x8xf32>
    %201 = tpu.matmul %199, %200, %cst_71 {dimension_numbers = #tpu.dot_dimension_numbers<[1], [0], [0], [1], [0, 0, 1, 1], [], []>} : vector<8x12xf32>, vector<12x8xf32>, vector<8x8xf32> -> vector<8x8xf32>
    %202 = vector.extract_strided_slice %139 {offsets = [24, 0], sizes = [8, 32], strides = [1, 1]} : vector<32x32xf32> to vector<8x32xf32>
    %cst_72 = arith.constant dense<0.000000e+00> : vector<8x32xf32>
    %203 = tpu.matmul %201, %202, %cst_72 {dimension_numbers = #tpu.dot_dimension_numbers<[1], [0], [0], [1], [0, 0, 1, 1], [], []>} : vector<8x8xf32>, vector<8x32xf32>, vector<8x32xf32> -> vector<8x32xf32>
    %204 = arith.addf %197, %203 : vector<8x32xf32>
    %205 = arith.addf %198, %199 : vector<8x12xf32>
    %cst_73 = arith.constant 2.500000e-01 : f32
    %206 = vector.broadcast %cst_73 : f32 to vector<8x12xf32>
    %207 = arith.mulf %205, %206 : vector<8x12xf32>
    %c0_74 = arith.constant 0 : index
    %c0_75 = arith.constant 0 : index
    %c0_76 = arith.constant 0 : index
    %208 = vector.load %arg15[%c0_74, %c0_75, %c0_76] : memref<2x8x12xf32, #tpu.memory_space<vmem>>, vector<1x8x12xf32>
    %209 = vector.shape_cast %208 : vector<1x8x12xf32> to vector<8x12xf32>
    %210 = vector.shape_cast %207 : vector<8x12xf32> to vector<1x8x12xf32>
    tpu.vector_store %arg15[%c0_74, %c0_75, %c0_76], %210 {strides = array<i32>} : memref<2x8x12xf32, #tpu.memory_space<vmem>>, vector<1x8x12xf32>,
    %211 = vector.extract_strided_slice %138 {offsets = [12, 0], sizes = [12, 64], strides = [1, 1]} : vector<24x64xf32> to vector<12x64xf32>
    %212 = vector.extract_strided_slice %178 {offsets = [32, 0], sizes = [8, 12], strides = [1, 1]} : vector<64x12xf32> to vector<8x12xf32>
    %213 = vector.extract_strided_slice %211 {offsets = [0, 32], sizes = [12, 8], strides = [1, 1]} : vector<12x64xf32> to vector<12x8xf32>
    %cst_77 = arith.constant dense<0.000000e+00> : vector<8x8xf32>
    %214 = tpu.matmul %212, %213, %cst_77 {dimension_numbers = #tpu.dot_dimension_numbers<[1], [0], [0], [1], [0, 0, 1, 1], [], []>} : vector<8x12xf32>, vector<12x8xf32>, vector<8x8xf32> -> vector<8x8xf32>
    %215 = vector.extract_strided_slice %139 {offsets = [0, 0], sizes = [8, 32], strides = [1, 1]} : vector<32x32xf32> to vector<8x32xf32>
    %cst_78 = arith.constant dense<0.000000e+00> : vector<8x32xf32>
    %216 = tpu.matmul %214, %215, %cst_78 {dimension_numbers = #tpu.dot_dimension_numbers<[1], [0], [0], [1], [0, 0, 1, 1], [], []>} : vector<8x8xf32>, vector<8x32xf32>, vector<8x32xf32> -> vector<8x32xf32>
    %217 = vector.extract_strided_slice %178 {offsets = [40, 0], sizes = [8, 12], strides = [1, 1]} : vector<64x12xf32> to vector<8x12xf32>
    %218 = vector.extract_strided_slice %211 {offsets = [0, 40], sizes = [12, 8], strides = [1, 1]} : vector<12x64xf32> to vector<12x8xf32>
    %cst_79 = arith.constant dense<0.000000e+00> : vector<8x8xf32>
    %219 = tpu.matmul %217, %218, %cst_79 {dimension_numbers = #tpu.dot_dimension_numbers<[1], [0], [0], [1], [0, 0, 1, 1], [], []>} : vector<8x12xf32>, vector<12x8xf32>, vector<8x8xf32> -> vector<8x8xf32>
    %220 = vector.extract_strided_slice %139 {offsets = [8, 0], sizes = [8, 32], strides = [1, 1]} : vector<32x32xf32> to vector<8x32xf32>
    %cst_80 = arith.constant dense<0.000000e+00> : vector<8x32xf32>
    %221 = tpu.matmul %219, %220, %cst_80 {dimension_numbers = #tpu.dot_dimension_numbers<[1], [0], [0], [1], [0, 0, 1, 1], [], []>} : vector<8x8xf32>, vector<8x32xf32>, vector<8x32xf32> -> vector<8x32xf32>
    %222 = arith.addf %216, %221 : vector<8x32xf32>
    %223 = arith.addf %212, %217 : vector<8x12xf32>
    %224 = vector.extract_strided_slice %178 {offsets = [48, 0], sizes = [8, 12], strides = [1, 1]} : vector<64x12xf32> to vector<8x12xf32>
    %225 = vector.extract_strided_slice %211 {offsets = [0, 48], sizes = [12, 8], strides = [1, 1]} : vector<12x64xf32> to vector<12x8xf32>
    %cst_81 = arith.constant dense<0.000000e+00> : vector<8x8xf32>
    %226 = tpu.matmul %224, %225, %cst_81 {dimension_numbers = #tpu.dot_dimension_numbers<[1], [0], [0], [1], [0, 0, 1, 1], [], []>} : vector<8x12xf32>, vector<12x8xf32>, vector<8x8xf32> -> vector<8x8xf32>
    %227 = vector.extract_strided_slice %139 {offsets = [16, 0], sizes = [8, 32], strides = [1, 1]} : vector<32x32xf32> to vector<8x32xf32>
    %cst_82 = arith.constant dense<0.000000e+00> : vector<8x32xf32>
    %228 = tpu.matmul %226, %227, %cst_82 {dimension_numbers = #tpu.dot_dimension_numbers<[1], [0], [0], [1], [0, 0, 1, 1], [], []>} : vector<8x8xf32>, vector<8x32xf32>, vector<8x32xf32> -> vector<8x32xf32>
    %229 = arith.addf %222, %228 : vector<8x32xf32>
    %230 = arith.addf %223, %224 : vector<8x12xf32>
    %231 = vector.extract_strided_slice %178 {offsets = [56, 0], sizes = [8, 12], strides = [1, 1]} : vector<64x12xf32> to vector<8x12xf32>
    %232 = vector.extract_strided_slice %211 {offsets = [0, 56], sizes = [12, 8], strides = [1, 1]} : vector<12x64xf32> to vector<12x8xf32>
    %cst_83 = arith.constant dense<0.000000e+00> : vector<8x8xf32>
    %233 = tpu.matmul %231, %232, %cst_83 {dimension_numbers = #tpu.dot_dimension_numbers<[1], [0], [0], [1], [0, 0, 1, 1], [], []>} : vector<8x12xf32>, vector<12x8xf32>, vector<8x8xf32> -> vector<8x8xf32>
    %234 = vector.extract_strided_slice %139 {offsets = [24, 0], sizes = [8, 32], strides = [1, 1]} : vector<32x32xf32> to vector<8x32xf32>
    %cst_84 = arith.constant dense<0.000000e+00> : vector<8x32xf32>
    %235 = tpu.matmul %233, %234, %cst_84 {dimension_numbers = #tpu.dot_dimension_numbers<[1], [0], [0], [1], [0, 0, 1, 1], [], []>} : vector<8x8xf32>, vector<8x32xf32>, vector<8x32xf32> -> vector<8x32xf32>
    %236 = arith.addf %229, %235 : vector<8x32xf32>
    %237 = arith.addf %230, %231 : vector<8x12xf32>
    %cst_85 = arith.constant 2.500000e-01 : f32
    %238 = vector.broadcast %cst_85 : f32 to vector<8x12xf32>
    %239 = arith.mulf %237, %238 : vector<8x12xf32>
    %c1_86 = arith.constant 1 : index
    %c0_87 = arith.constant 0 : index
    %c0_88 = arith.constant 0 : index
    %240 = vector.load %arg15[%c1_86, %c0_87, %c0_88] : memref<2x8x12xf32, #tpu.memory_space<vmem>>, vector<1x8x12xf32>
    %241 = vector.shape_cast %240 : vector<1x8x12xf32> to vector<8x12xf32>
    %242 = vector.shape_cast %239 : vector<8x12xf32> to vector<1x8x12xf32>
    tpu.vector_store %arg15[%c1_86, %c0_87, %c0_88], %242 {strides = array<i32>} : memref<2x8x12xf32, #tpu.memory_space<vmem>>, vector<1x8x12xf32>,
    %243 = tpu.concatenate %204, %236 in 0 : vector<8x32xf32>, vector<8x32xf32> -> vector<16x32xf32>
    %244 = vector.extract_strided_slice %0 {offsets = [4, 0], sizes = [1, 32], strides = [1, 1]} : vector<10x32xf32> to vector<1x32xf32>
    %245 = vector.broadcast %244 : vector<1x32xf32> to vector<16x32xf32>
    %246 = arith.addf %243, %245 : vector<16x32xf32>
    %247 = arith.addf %246, %125 : vector<16x32xf32>
    %248 = vector.extract_strided_slice %0 {offsets = [5, 0], sizes = [1, 32], strides = [1, 1]} : vector<10x32xf32> to vector<1x32xf32>
    %249 = vector.extract_strided_slice %0 {offsets = [6, 0], sizes = [1, 32], strides = [1, 1]} : vector<10x32xf32> to vector<1x32xf32>
    %cst_89 = arith.constant dense<0.000000e+00> : vector<16xf32>
    %250 = vector.multi_reduction <add>, %247, %cst_89 [1] : vector<16x32xf32> to vector<16xf32>
    %251 = vector.shape_cast %250 : vector<16xf32> to vector<16x1xf32>
    %cst_90 = arith.constant 3.200000e+01 : f32
    %252 = vector.broadcast %cst_90 : f32 to vector<16x1xf32>
    %253 = arith.divf %251, %252 : vector<16x1xf32>
    %254 = vector.broadcast %253 : vector<16x1xf32> to vector<16x32xf32>
    %255 = arith.subf %247, %254 : vector<16x32xf32>
    %256 = arith.mulf %255, %255 : vector<16x32xf32>
    %cst_91 = arith.constant dense<0.000000e+00> : vector<16xf32>
    %257 = vector.multi_reduction <add>, %256, %cst_91 [1] : vector<16x32xf32> to vector<16xf32>
    %258 = vector.shape_cast %257 : vector<16xf32> to vector<16x1xf32>
    %cst_92 = arith.constant 3.200000e+01 : f32
    %259 = vector.broadcast %cst_92 : f32 to vector<16x1xf32>
    %260 = arith.divf %258, %259 : vector<16x1xf32>
    %261 = vector.broadcast %253 : vector<16x1xf32> to vector<16x32xf32>
    %262 = arith.subf %247, %261 : vector<16x32xf32>
    %cst_93 = arith.constant 9.99999974E-6 : f32
    %263 = vector.broadcast %cst_93 : f32 to vector<16x1xf32>
    %264 = arith.addf %260, %263 : vector<16x1xf32>
    %265 = math.rsqrt %264 : vector<16x1xf32>
    %266 = vector.broadcast %265 : vector<16x1xf32> to vector<16x32xf32>
    %267 = arith.mulf %262, %266 : vector<16x32xf32>
    %268 = vector.broadcast %248 : vector<1x32xf32> to vector<16x32xf32>
    %269 = arith.mulf %267, %268 : vector<16x32xf32>
    %270 = vector.broadcast %249 : vector<1x32xf32> to vector<16x32xf32>
    %271 = arith.addf %269, %270 : vector<16x32xf32>
    %c0_94 = arith.constant 0 : index
    %c0_95 = arith.constant 0 : index
    %272 = vector.load %arg2[%c0_94, %c0_95] : memref<16x16xf32, #tpu.memory_space<vmem>>, vector<16x16xf32>
    %cst_96 = arith.constant dense<0.000000e+00> : vector<16x32xf32>
    %273 = tpu.matmul %272, %271, %cst_96 {dimension_numbers = #tpu.dot_dimension_numbers<[1], [0], [0], [1], [0, 0, 1, 1], [], []>} : vector<16x16xf32>, vector<16x32xf32>, vector<16x32xf32> -> vector<16x32xf32>
    %c0_97 = arith.constant 0 : index
    %c0_98 = arith.constant 0 : index
    %274 = vector.load %arg10[%c0_97, %c0_98] : memref<32x64xf32, #tpu.memory_space<vmem>>, vector<32x64xf32>
    %cst_99 = arith.constant dense<0.000000e+00> : vector<16x64xf32>
    %275 = tpu.matmul %273, %274, %cst_99 {dimension_numbers = #tpu.dot_dimension_numbers<[1], [0], [0], [1], [0, 0, 1, 1], [], []>} : vector<16x32xf32>, vector<32x64xf32>, vector<16x64xf32> -> vector<16x64xf32>
    %c0_100 = arith.constant 0 : index
    %c0_101 = arith.constant 0 : index
    %276 = vector.load %arg11[%c0_100, %c0_101] : memref<1x64xf32, #tpu.memory_space<vmem>>, vector<1x64xf32>
    %277 = vector.broadcast %276 : vector<1x64xf32> to vector<16x64xf32>
    %278 = arith.addf %275, %277 : vector<16x64xf32>
    %cst_102 = arith.constant 0.000000e+00 : f32
    %279 = vector.broadcast %cst_102 : f32 to vector<16x64xf32>
    %280 = arith.maximumf %278, %279 : vector<16x64xf32>
    %c0_103 = arith.constant 0 : index
    %c0_104 = arith.constant 0 : index
    %281 = vector.load %arg12[%c0_103, %c0_104] : memref<64x32xf32, #tpu.memory_space<vmem>>, vector<64x32xf32>
    %cst_105 = arith.constant dense<0.000000e+00> : vector<16x32xf32>
    %282 = tpu.matmul %280, %281, %cst_105 {dimension_numbers = #tpu.dot_dimension_numbers<[1], [0], [0], [1], [0, 0, 1, 1], [], []>} : vector<16x64xf32>, vector<64x32xf32>, vector<16x32xf32> -> vector<16x32xf32>
    %283 = vector.extract_strided_slice %0 {offsets = [7, 0], sizes = [1, 32], strides = [1, 1]} : vector<10x32xf32> to vector<1x32xf32>
    %284 = vector.broadcast %283 : vector<1x32xf32> to vector<16x32xf32>
    %285 = arith.addf %282, %284 : vector<16x32xf32>
    %286 = arith.addf %285, %273 : vector<16x32xf32>
    %287 = vector.extract_strided_slice %0 {offsets = [8, 0], sizes = [1, 32], strides = [1, 1]} : vector<10x32xf32> to vector<1x32xf32>
    %288 = vector.extract_strided_slice %0 {offsets = [9, 0], sizes = [1, 32], strides = [1, 1]} : vector<10x32xf32> to vector<1x32xf32>
    %cst_106 = arith.constant dense<0.000000e+00> : vector<16xf32>
    %289 = vector.multi_reduction <add>, %286, %cst_106 [1] : vector<16x32xf32> to vector<16xf32>
    %290 = vector.shape_cast %289 : vector<16xf32> to vector<16x1xf32>
    %cst_107 = arith.constant 3.200000e+01 : f32
    %291 = vector.broadcast %cst_107 : f32 to vector<16x1xf32>
    %292 = arith.divf %290, %291 : vector<16x1xf32>
    %293 = vector.broadcast %292 : vector<16x1xf32> to vector<16x32xf32>
    %294 = arith.subf %286, %293 : vector<16x32xf32>
    %295 = arith.mulf %294, %294 : vector<16x32xf32>
    %cst_108 = arith.constant dense<0.000000e+00> : vector<16xf32>
    %296 = vector.multi_reduction <add>, %295, %cst_108 [1] : vector<16x32xf32> to vector<16xf32>
    %297 = vector.shape_cast %296 : vector<16xf32> to vector<16x1xf32>
    %cst_109 = arith.constant 3.200000e+01 : f32
    %298 = vector.broadcast %cst_109 : f32 to vector<16x1xf32>
    %299 = arith.divf %297, %298 : vector<16x1xf32>
    %300 = vector.broadcast %292 : vector<16x1xf32> to vector<16x32xf32>
    %301 = arith.subf %286, %300 : vector<16x32xf32>
    %cst_110 = arith.constant 9.99999974E-6 : f32
    %302 = vector.broadcast %cst_110 : f32 to vector<16x1xf32>
    %303 = arith.addf %299, %302 : vector<16x1xf32>
    %304 = math.rsqrt %303 : vector<16x1xf32>
    %305 = vector.broadcast %304 : vector<16x1xf32> to vector<16x32xf32>
    %306 = arith.mulf %301, %305 : vector<16x32xf32>
    %307 = vector.broadcast %287 : vector<1x32xf32> to vector<16x32xf32>
    %308 = arith.mulf %306, %307 : vector<16x32xf32>
    %309 = vector.broadcast %288 : vector<1x32xf32> to vector<16x32xf32>
    %310 = arith.addf %308, %309 : vector<16x32xf32>
    %c0_111 = arith.constant 0 : index
    %c0_112 = arith.constant 0 : index
    %311 = vector.load %arg14[%c0_111, %c0_112] : memref<16x32xf32, #tpu.memory_space<vmem>>, vector<16x32xf32>
    tpu.vector_store %arg14[%c0_111, %c0_112], %310 {strides = array<i32>} : memref<16x32xf32, #tpu.memory_space<vmem>>, vector<16x32xf32>,
    return
  }
}

</mosaic_0001>

<llo_original>
// kernel: decoder_layer_forward.1
$region0: #{decoder_layer_forward.1}
  #allocation0 [shape = 'u32[]', space=smem, size = 0x4, offset = 0x4, fixed_abs, tag = 'smem constant byte address 0x4 - core index']
  #allocation1 [shape = 'u32[144,128]{1,0:T(1,128)}', space=vmem, size = 0x12000, scoped, tag = 'internal scratch']
  %s0 = inlined_call_operand.hbm [shape: f32[16,32], index: 0, kind: input, shape index: {}]
  %s1 = inlined_call_operand.hbm [shape: f32[24,48], index: 1, kind: input, shape index: {}]
  %s2 = inlined_call_operand.hbm [shape: f32[16,16], index: 2, kind: input, shape index: {}]
  %s3 = inlined_call_operand.vmem [shape: f32[32,96], index: 3, kind: input, shape index: {}]
  %s4 = inlined_call_operand.vmem [shape: f32[1,96], index: 4, kind: input, shape index: {}]
  %s5 = inlined_call_operand.vmem [shape: f32[32,32], index: 5, kind: input, shape index: {}]
  %s6 = inlined_call_operand.hbm [shape: f32[32,32], index: 6, kind: input, shape index: {}]
  %s7 = inlined_call_operand.vmem [shape: f32[48,64], index: 7, kind: input, shape index: {}]
  %s8 = inlined_call_operand.vmem [shape: f32[1,64], index: 8, kind: input, shape index: {}]
  %s9 = inlined_call_operand.hbm [shape: f32[32,32], index: 9, kind: input, shape index: {}]
  %s10 = inlined_call_operand.hbm [shape: f32[32,64], index: 10, kind: input, shape index: {}]
  %s11 = inlined_call_operand.vmem [shape: f32[1,64], index: 11, kind: input, shape index: {}]
  %s12 = inlined_call_operand.vmem [shape: f32[64,32], index: 12, kind: input, shape index: {}]
  %s13 = inlined_call_operand.hbm [shape: f32[10,32], index: 13, kind: input, shape index: {}]
  %s14 = inlined_call_operand.hbm [shape: f32[16,32], index: 14, kind: output, shape index: {0}]
  %s15 = inlined_call_operand.hbm [shape: f32[2,8,12], index: 15, kind: output, shape index: {1}]
  %16 = xla_tuple %s14, %s15
  %s17 = sld [smem:[#allocation0]]
  $region102: #{decoder_layer_forward.1} parent=0
    _
  %s19 = ssub.s32 1, %s17
  %s20 = scalar_select 0, %s19, %s17
  $region1: #{decoder_layer_forward.1} parent=0
    #allocation2 [shape = 'u8[8192]{0}', space=vmem, size = 0x2000, scoped, tag = 'input window, operand 0, single buffered']
    #allocation3 [shape = 's32[1]{0}', space=sflag, size = 0x4, scoped, tag = 'scoped memory for decoder_layer_forward.1']
    #allocation4 [shape = 's32[1]{0}', space=sflag, size = 0x4, scoped, tag = 'scoped memory for decoder_layer_forward.1']
    #allocation5 [shape = 'u8[12288]{0}', space=vmem, size = 0x3000, scoped, tag = 'input window, operand 1, single buffered']
    #allocation6 [shape = 's32[1]{0}', space=sflag, size = 0x4, scoped, tag = 'scoped memory for decoder_layer_forward.1']
    #allocation7 [shape = 'u8[8192]{0}', space=vmem, size = 0x2000, scoped, tag = 'input window, operand 2, single buffered']
    #allocation8 [shape = 'u8[16384]{0}', space=vmem, size = 0x4000, scoped, tag = 'input window, operand 6, single buffered']
    #allocation9 [shape = 's32[1]{0}', space=sflag, size = 0x4, scoped, tag = 'scoped memory for decoder_layer_forward.1']
    #allocation10 [shape = 'u8[16384]{0}', space=vmem, size = 0x4000, scoped, tag = 'input window, operand 9, single buffered']
    #allocation11 [shape = 'u8[16384]{0}', space=vmem, size = 0x4000, scoped, tag = 'input window, operand 10, single buffered']
    #allocation12 [shape = 's32[1]{0}', space=sflag, size = 0x4, scoped, tag = 'scoped memory for decoder_layer_forward.1']
    #allocation13 [shape = 'u8[8192]{0}', space=vmem, size = 0x2000, scoped, tag = 'input window, operand 13, single buffered']
    #allocation14 [shape = 'u8[8192]{0}', space=vmem, size = 0x2000, scoped, tag = 'output window, operand 0, single buffered']
    #allocation15 [shape = 'u8[8192]{0}', space=vmem, size = 0x2000, scoped, tag = 'output window, operand 1, single buffered']
    #allocation16 [shape = 's32[1]{0}', space=sflag, size = 0x4, scoped, tag = 'scoped memory for decoder_layer_forward.1']
    %21 = vsyncpa [#allocation3], 0
    %22 = vsyncpa [#allocation6], 0
    %23 = vsyncpa [#allocation9], 0
    %24 = vsyncpa [#allocation12], 0
    %25 = vsyncpa [#allocation4], 0
    %26 = vsyncpa [#allocation16], 0
    // Predicated region
    $region2: #{decoder_layer_forward.1} parent=1 // pred_check
      _
    $region3: #{decoder_layer_forward.1} parent=1 // pred_check_branch
      %28 = sbr.rel (0) target = $region5
    $region4: #{decoder_layer_forward.1} parent=1 // pred_region
      %s30 = ssub.s32 256, 256
      %31 = vsyncadd [#allocation3], %s30
      %s32 = sshll.u32 [#allocation2], 4
      %s33 = int_to_ptr.vmem [resolvable:$true] %s32
      %38 = dma.hbm_to_vmem [thread:$0]  %s0, 256, %s33, [#allocation3], 128, 128, 8
    $region5: #{decoder_layer_forward.1} parent=1 // pred_fallthru
      _
    // Predicated region
    $region6: #{decoder_layer_forward.1} parent=1 // pred_check
      _
    $region7: #{decoder_layer_forward.1} parent=1 // pred_check_branch
      %40 = sbr.rel (0) target = $region9
    $region8: #{decoder_layer_forward.1} parent=1 // pred_region
      %s42 = ssub.s32 384, 384
      %43 = vsyncadd [#allocation6], %s42
      %s44 = sshll.u32 [#allocation5], 4
      %s45 = int_to_ptr.vmem [resolvable:$true] %s44
      %50 = dma.hbm_to_vmem [thread:$0]  %s1, 384, %s45, [#allocation6], 128, 128, 8
    $region9: #{decoder_layer_forward.1} parent=1 // pred_fallthru
      _
    // Predicated region
    $region10: #{decoder_layer_forward.1} parent=1 // pred_check
      _
    $region11: #{decoder_layer_forward.1} parent=1 // pred_check_branch
      %52 = sbr.rel (0) target = $region13
    $region12: #{decoder_layer_forward.1} parent=1 // pred_region
      %s54 = ssub.s32 256, 256
      %55 = vsyncadd [#allocation6], %s54
      %s56 = sshll.u32 [#allocation7], 4
      %s57 = int_to_ptr.vmem [resolvable:$true] %s56
      %62 = dma.hbm_to_vmem [thread:$0]  %s2, 256, %s57, [#allocation6], 128, 128, 8
    $region13: #{decoder_layer_forward.1} parent=1 // pred_fallthru
      _
    // Predicated region
    $region14: #{decoder_layer_forward.1} parent=1 // pred_check
      _
    $region15: #{decoder_layer_forward.1} parent=1 // pred_check_branch
      %64 = sbr.rel (0) target = $region17
    $region16: #{decoder_layer_forward.1} parent=1 // pred_region
      _
    $region17: #{decoder_layer_forward.1} parent=1 // pred_fallthru
      _
    // Predicated region
    $region18: #{decoder_layer_forward.1} parent=1 // pred_check
      _
    $region19: #{decoder_layer_forward.1} parent=1 // pred_check_branch
      %66 = sbr.rel (0) target = $region21
    $region20: #{decoder_layer_forward.1} parent=1 // pred_region
      _
    $region21: #{decoder_layer_forward.1} parent=1 // pred_fallthru
      _
    // Predicated region
    $region22: #{decoder_layer_forward.1} parent=1 // pred_check
      _
    $region23: #{decoder_layer_forward.1} parent=1 // pred_check_branch
      %68 = sbr.rel (0) target = $region25
    $region24: #{decoder_layer_forward.1} parent=1 // pred_region
      _
    $region25: #{decoder_layer_forward.1} parent=1 // pred_fallthru
      _
    // Predicated region
    $region26: #{decoder_layer_forward.1} parent=1 // pred_check
      _
    $region27: #{decoder_layer_forward.1} parent=1 // pred_check_branch
      %70 = sbr.rel (0) target = $region29
    $region28: #{decoder_layer_forward.1} parent=1 // pred_region
      %s72 = ssub.s32 512, 512
      %73 = vsyncadd [#allocation9], %s72
      %s74 = sshll.u32 [#allocation8], 4
      %s75 = int_to_ptr.vmem [resolvable:$true] %s74
      %80 = dma.hbm_to_vmem [thread:$0]  %s6, 512, %s75, [#allocation9], 128, 128, 8
    $region29: #{decoder_layer_forward.1} parent=1 // pred_fallthru
      _
    // Predicated region
    $region30: #{decoder_layer_forward.1} parent=1 // pred_check
      _
    $region31: #{decoder_layer_forward.1} parent=1 // pred_check_branch
      %82 = sbr.rel (0) target = $region33
    $region32: #{decoder_layer_forward.1} parent=1 // pred_region
      _
    $region33: #{decoder_layer_forward.1} parent=1 // pred_fallthru
      _
    // Predicated region
    $region34: #{decoder_layer_forward.1} parent=1 // pred_check
      _
    $region35: #{decoder_layer_forward.1} parent=1 // pred_check_branch
      %84 = sbr.rel (0) target = $region37
    $region36: #{decoder_layer_forward.1} parent=1 // pred_region
      _
    $region37: #{decoder_layer_forward.1} parent=1 // pred_fallthru
      _
    // Predicated region
    $region38: #{decoder_layer_forward.1} parent=1 // pred_check
      _
    $region39: #{decoder_layer_forward.1} parent=1 // pred_check_branch
      %86 = sbr.rel (0) target = $region41
    $region40: #{decoder_layer_forward.1} parent=1 // pred_region
      %s88 = ssub.s32 512, 512
      %89 = vsyncadd [#allocation9], %s88
      %s90 = sshll.u32 [#allocation10], 4
      %s91 = int_to_ptr.vmem [resolvable:$true] %s90
      %96 = dma.hbm_to_vmem [thread:$0]  %s9, 512, %s91, [#allocation9], 128, 128, 8
    $region41: #{decoder_layer_forward.1} parent=1 // pred_fallthru
      _
    // Predicated region
    $region42: #{decoder_layer_forward.1} parent=1 // pred_check
      _
    $region43: #{decoder_layer_forward.1} parent=1 // pred_check_branch
      %98 = sbr.rel (0) target = $region45
    $region44: #{decoder_layer_forward.1} parent=1 // pred_region
      %s100 = ssub.s32 512, 512
      %101 = vsyncadd [#allocation12], %s100
      %s102 = sshll.u32 [#allocation11], 4
      %s103 = int_to_ptr.vmem [resolvable:$true] %s102
      %108 = dma.hbm_to_vmem [thread:$0]  %s10, 512, %s103, [#allocation12], 128, 128, 8
    $region45: #{decoder_layer_forward.1} parent=1 // pred_fallthru
      _
    // Predicated region
    $region46: #{decoder_layer_forward.1} parent=1 // pred_check
      _
    $region47: #{decoder_layer_forward.1} parent=1 // pred_check_branch
      %110 = sbr.rel (0) target = $region49
    $region48: #{decoder_layer_forward.1} parent=1 // pred_region
      _
    $region49: #{decoder_layer_forward.1} parent=1 // pred_fallthru
      _
    // Predicated region
    $region50: #{decoder_layer_forward.1} parent=1 // pred_check
      _
    $region51: #{decoder_layer_forward.1} parent=1 // pred_check_branch
      %112 = sbr.rel (0) target = $region53
    $region52: #{decoder_layer_forward.1} parent=1 // pred_region
      _
    $region53: #{decoder_layer_forward.1} parent=1 // pred_fallthru
      _
    // Predicated region
    $region54: #{decoder_layer_forward.1} parent=1 // pred_check
      _
    $region55: #{decoder_layer_forward.1} parent=1 // pred_check_branch
      %114 = sbr.rel (0) target = $region57
    $region56: #{decoder_layer_forward.1} parent=1 // pred_region
      %s116 = ssub.s32 256, 256
      %117 = vsyncadd [#allocation12], %s116
      %s118 = sshll.u32 [#allocation13], 4
      %s119 = int_to_ptr.vmem [resolvable:$true] %s118
      %124 = dma.hbm_to_vmem [thread:$0]  %s13, 256, %s119, [#allocation12], 128, 128, 8
    $region57: #{decoder_layer_forward.1} parent=1 // pred_fallthru
      _
    // Predicated region
    $region58: #{decoder_layer_forward.1} parent=1 // pred_check
      _
    $region59: #{decoder_layer_forward.1} parent=1 // pred_check_branch
      %126 = sbr.rel (0) target = $region61
    $region60: #{decoder_layer_forward.1} parent=1 // pred_region
      %127 = dma.done [#allocation3], 256
    $region61: #{decoder_layer_forward.1} parent=1 // pred_fallthru
      _
    // Predicated region
    $region62: #{decoder_layer_forward.1} parent=1 // pred_check
      _
    $region63: #{decoder_layer_forward.1} parent=1 // pred_check_branch
      %129 = sbr.rel (0) target = $region65
    $region64: #{decoder_layer_forward.1} parent=1 // pred_region
      %130 = dma.done [#allocation6], 384
    $region65: #{decoder_layer_forward.1} parent=1 // pred_fallthru
      _
    // Predicated region
    $region66: #{decoder_layer_forward.1} parent=1 // pred_check
      _
    $region67: #{decoder_layer_forward.1} parent=1 // pred_check_branch
      %132 = sbr.rel (0) target = $region69
    $region68: #{decoder_layer_forward.1} parent=1 // pred_region
      %133 = dma.done [#allocation6], 256
    $region69: #{decoder_layer_forward.1} parent=1 // pred_fallthru
      _
    // Predicated region
    $region70: #{decoder_layer_forward.1} parent=1 // pred_check
      _
    $region71: #{decoder_layer_forward.1} parent=1 // pred_check_branch
      %135 = sbr.rel (0) target = $region73
    $region72: #{decoder_layer_forward.1} parent=1 // pred_region
      %136 = dma.done [#allocation9], 512
    $region73: #{decoder_layer_forward.1} parent=1 // pred_fallthru
      _
    // Predicated region
    $region74: #{decoder_layer_forward.1} parent=1 // pred_check
      _
    $region75: #{decoder_layer_forward.1} parent=1 // pred_check_branch
      %138 = sbr.rel (0) target = $region77
    $region76: #{decoder_layer_forward.1} parent=1 // pred_region
      %139 = dma.done [#allocation9], 512
    $region77: #{decoder_layer_forward.1} parent=1 // pred_fallthru
      _
    // Predicated region
    $region78: #{decoder_layer_forward.1} parent=1 // pred_check
      _
    $region79: #{decoder_layer_forward.1} parent=1 // pred_check_branch
      %141 = sbr.rel (0) target = $region81
    $region80: #{decoder_layer_forward.1} parent=1 // pred_region
      %142 = dma.done [#allocation12], 512
    $region81: #{decoder_layer_forward.1} parent=1 // pred_fallthru
      _
    // Predicated region
    $region82: #{decoder_layer_forward.1} parent=1 // pred_check
      _
    $region83: #{decoder_layer_forward.1} parent=1 // pred_check_branch
      %144 = sbr.rel (0) target = $region85
    $region84: #{decoder_layer_forward.1} parent=1 // pred_region
      %145 = dma.done [#allocation12], 256
    $region85: #{decoder_layer_forward.1} parent=1 // pred_fallthru
      _
    %v146 = vld [vmem:[#allocation13] sm:$0xff]
    %v147 = vld [vmem:[#allocation13 + $0x8] sm:$0x3]
    %v148 = vld [vmem:[#allocation2] ss:$2 sm:$0xff]
    %s149 = scalar_lea.vmem [#allocation2], 1
    %v150 = vld [vmem:[%s149] ss:$2 sm:$0xff]
    %v151 = vld [vmem:[%s3] sm:$0xff]
    %v152 = vld [vmem:[%s3 + $0x8] sm:$0xff]
    %v153 = vld [vmem:[%s3 + $0x10] sm:$0xff]
    %v154 = vld [vmem:[%s3 + $0x18] sm:$0xff]
    %v155 = vld [vmem:[%s4] sm:$0x1]
    %v157 = vlaneseq
    %v158 = vshrl.u32 %v157, 7
    %v159 = vsub.s32 0, %v158
    %v160 = vrot.slane %v155, %v159
    %vm162 = vcmask 261120
    %v164 = vsel %vm162, %v148, 0
    %v167 = vsel %vm162, %v150, 0
    %169 = vmatprep.subr.mxu0 0.0
    %170 = vmatpush1.msra.mxu0 %v151
    %171 = vmatprep.subr.mxu0 0.0
    %172 = vmatpush1.msra.mxu0 %v152
    %173 = vmatprep.subr.mxu0 0.0
    %174 = vmatpush1.msra.mxu0 %v153
    %175 = vmatprep.subr.mxu0 0.0
    %176 = vmatpush1.msra.mxu0 %v154
    %177 = vmatprep.subr.mxu0 0.0
    %178 = vmatpush1.msra.mxu0 0.0
    %179 = vmatprep.subr.mxu0 0.0
    %180 = vmatpush1.msra.mxu0 0.0
    %181 = vmatprep.subr.mxu0 0.0
    %182 = vmatpush1.msra.mxu0 0.0
    %183 = vmatprep.subr.mxu0 0.0
    %184 = vmatpush1.msra.mxu0 0.0
    %185 = vmatprep.subr.mxu0 0.0
    %186 = vmatpush1.msra.mxu0 0.0
    %187 = vmatprep.subr.mxu0 0.0
    %188 = vmatpush1.msra.mxu0 0.0
    %189 = vmatprep.subr.mxu0 0.0
    %190 = vmatpush1.msra.mxu0 0.0
    %191 = vmatprep.subr.mxu0 0.0
    %192 = vmatpush1.msra.mxu0 0.0
    %193 = vmatprep.subr.mxu0 0.0
    %194 = vmatpush1.msra.mxu0 0.0
    %195 = vmatprep.subr.mxu0 0.0
    %196 = vmatpush1.msra.mxu0 0.0
    %197 = vmatprep.subr.mxu0 0.0
    %198 = vmatpush1.msra.mxu0 0.0
    %199 = vmatprep.subr.mxu0 0.0
    %200 = vmatpush1.msra.mxu0 0.0
    %201 = vmatprep.subr.mxu0 0.0
    %202 = vmatpush1.msra.mxu0 0.0
    %203 = vmatprep.subr.mxu0 0.0
    %204 = vmatpush1.msra.mxu0 0.0
    %205 = vmatprep.subr.mxu0 0.0
    %206 = vmatpush1.msra.mxu0 0.0
    %207 = vmatprep.subr.mxu0 0.0
    %208 = vmatpush1.msra.mxu0 0.0
    %209 = vmatprep.subr.mxu0 0.0
    %210 = vmatpush1.msra.mxu0 0.0
    %211 = vmatprep.subr.mxu0 0.0
    %212 = vmatpush1.msra.mxu0 0.0
    %213 = vmatprep.subr.mxu0 0.0
    %214 = vmatpush1.msra.mxu0 0.0
    %215 = vmatprep.subr.mxu0 0.0
    %216 = vmatpush1.msra.mxu0 0.0
    %217 = vmatprep.subr.mxu0 0.0
    %218 = vmatpush1.msra.mxu0 0.0
    %219 = vmatprep.subr.mxu0 0.0
    %220 = vmatpush1.msra.mxu0 0.0
    %221 = vmatprep.subr.mxu0 0.0
    %222 = vmatpush1.msra.mxu0 0.0
    %223 = vmatprep.subr.mxu0 0.0
    %224 = vmatpush1.msra.mxu0 0.0
    %225 = vmatprep.subr.mxu0 0.0
    %226 = vmatpush1.msra.mxu0 0.0
    %227 = vmatprep.subr.mxu0 0.0
    %228 = vmatpush1.msra.mxu0 0.0
    %229 = vmatprep.subr.mxu0 0.0
    %230 = vmatpush1.msra.mxu0 0.0
    %231 = vmatprep.subr.mxu0 0.0
    %232 = vmatpush1.msra.mxu0 0.0
    %233 = vmatprep.mubr.f32.mxu0 0.0
    %234 = vmatmul.mubr.f32.gmra.mrb[0].mxu0 %v164
    %v235 = vpop.f32.mrb[0].mxu0
    %v236 = vadd.f32 %v160, %v235
    %v237 = vpop.f32.mrb[0].mxu0
    %238 = vmatprep.mubr.f32.mxu0 0.0
    %239 = vmatmul.mubr.f32.gmra.mrb[0].mxu0 %v167
    %v240 = vpop.f32.mrb[0].mxu0
    %v241 = vadd.f32 %v160, %v240
    %v242 = vpop.f32.mrb[0].mxu0
    %243 = vdwg.mxu0
    %v244 = vld [vmem:[%s5] sm:$0xff]
    %v245 = vld [vmem:[%s5 + $0x8] sm:$0xff]
    %v246 = vld [vmem:[%s5 + $0x10] sm:$0xff]
    %v247 = vld [vmem:[%s5 + $0x18] sm:$0xff]
    %249 = vrot.lane.b32.xlu0 %v236, 96
    %v250 = vpop.permute.xlu0 %249
    %vm251 = vcmask 64512
    %v252 = vsel %vm251, %v236, 0
    %v254 = vsel %vm251, %v250, 0
    %256 = vmatprep.subr.mxu0 0.0
    %257 = vmatpush1.xpose.msra.mxu0 %v254
    %258 = vmatprep.subr.mxu0 0.0
    %259 = vmatpush1.xpose.msra.mxu0 0.0
    %260 = vmatprep.subr.mxu0 0.0
    %261 = vmatpush1.xpose.msra.mxu0 0.0
    %262 = vmatprep.subr.mxu0 0.0
    %263 = vmatpush1.xpose.msra.mxu0 0.0
    %264 = vmatprep.subr.mxu0 0.0
    %265 = vmatpush1.xpose.msra.mxu0 0.0
    %266 = vmatprep.subr.mxu0 0.0
    %267 = vmatpush1.xpose.msra.mxu0 0.0
    %268 = vmatprep.subr.mxu0 0.0
    %269 = vmatpush1.xpose.msra.mxu0 0.0
    %270 = vmatprep.subr.mxu0 0.0
    %271 = vmatpush1.xpose.msra.mxu0 0.0
    %272 = vmatprep.subr.mxu0 0.0
    %273 = vmatpush1.xpose.msra.mxu0 0.0
    %274 = vmatprep.subr.mxu0 0.0
    %275 = vmatpush1.xpose.msra.mxu0 0.0
    %276 = vmatprep.subr.mxu0 0.0
    %277 = vmatpush1.xpose.msra.mxu0 0.0
    %278 = vmatprep.subr.mxu0 0.0
    %279 = vmatpush1.xpose.msra.mxu0 0.0
    %280 = vmatprep.subr.mxu0 0.0
    %281 = vmatpush1.xpose.msra.mxu0 0.0
    %282 = vmatprep.subr.mxu0 0.0
    %283 = vmatpush1.xpose.msra.mxu0 0.0
    %284 = vmatprep.subr.mxu0 0.0
    %285 = vmatpush1.xpose.msra.mxu0 0.0
    %286 = vmatprep.subr.mxu0 0.0
    %287 = vmatpush1.xpose.msra.mxu0 0.0
    %288 = vmatprep.subr.mxu0 0.0
    %289 = vmatpush1.xpose.msra.mxu0 0.0
    %290 = vmatprep.subr.mxu0 0.0
    %291 = vmatpush1.xpose.msra.mxu0 0.0
    %292 = vmatprep.subr.mxu0 0.0
    %293 = vmatpush1.xpose.msra.mxu0 0.0
    %294 = vmatprep.subr.mxu0 0.0
    %295 = vmatpush1.xpose.msra.mxu0 0.0
    %296 = vmatprep.subr.mxu0 0.0
    %297 = vmatpush1.xpose.msra.mxu0 0.0
    %298 = vmatprep.subr.mxu0 0.0
    %299 = vmatpush1.xpose.msra.mxu0 0.0
    %300 = vmatprep.subr.mxu0 0.0
    %301 = vmatpush1.xpose.msra.mxu0 0.0
    %302 = vmatprep.subr.mxu0 0.0
    %303 = vmatpush1.xpose.msra.mxu0 0.0
    %304 = vmatprep.subr.mxu0 0.0
    %305 = vmatpush1.xpose.msra.mxu0 0.0
    %306 = vmatprep.subr.mxu0 0.0
    %307 = vmatpush1.xpose.msra.mxu0 0.0
    %308 = vmatprep.subr.mxu0 0.0
    %309 = vmatpush1.xpose.msra.mxu0 0.0
    %310 = vmatprep.subr.mxu0 0.0
    %311 = vmatpush1.xpose.msra.mxu0 0.0
    %312 = vmatprep.subr.mxu0 0.0
    %313 = vmatpush1.xpose.msra.mxu0 0.0
    %314 = vmatprep.subr.mxu0 0.0
    %315 = vmatpush1.xpose.msra.mxu0 0.0
    %316 = vmatprep.subr.mxu0 0.0
    %317 = vmatpush1.xpose.msra.mxu0 0.0
    %318 = vmatprep.subr.mxu0 0.0
    %319 = vmatpush1.xpose.msra.mxu0 0.0
    %320 = vmatprep.mubr.f32.mxu0 0.0
    %321 = vmatmul.mubr.f32.gmra.mrb[0].mxu0 %v252
    %v322 = vpop.f32.mrb[0].mxu0
    %v323 = vadd.f32 0.0, %v322
    %v324 = vpop.f32.mrb[0].mxu0
    %325 = vdwg.mxu0
    %326 = vrot.lane.b32.xlu0 %v236, 120
    %v327 = vpop.permute.xlu0 %326
    %328 = vrot.lane.b32.xlu0 %v236, 88
    %v329 = vpop.permute.xlu0 %328
    %v330 = vsel %vm251, %v327, 0
    %v332 = vsel %vm251, %v329, 0
    %334 = vmatprep.subr.mxu0 0.0
    %335 = vmatpush1.xpose.msra.mxu0 %v332
    %336 = vmatprep.subr.mxu0 0.0
    %337 = vmatpush1.xpose.msra.mxu0 0.0
    %338 = vmatprep.subr.mxu0 0.0
    %339 = vmatpush1.xpose.msra.mxu0 0.0
    %340 = vmatprep.subr.mxu0 0.0
    %341 = vmatpush1.xpose.msra.mxu0 0.0
    %342 = vmatprep.subr.mxu0 0.0
    %343 = vmatpush1.xpose.msra.mxu0 0.0
    %344 = vmatprep.subr.mxu0 0.0
    %345 = vmatpush1.xpose.msra.mxu0 0.0
    %346 = vmatprep.subr.mxu0 0.0
    %347 = vmatpush1.xpose.msra.mxu0 0.0
    %348 = vmatprep.subr.mxu0 0.0
    %349 = vmatpush1.xpose.msra.mxu0 0.0
    %350 = vmatprep.subr.mxu0 0.0
    %351 = vmatpush1.xpose.msra.mxu0 0.0
    %352 = vmatprep.subr.mxu0 0.0
    %353 = vmatpush1.xpose.msra.mxu0 0.0
    %354 = vmatprep.subr.mxu0 0.0
    %355 = vmatpush1.xpose.msra.mxu0 0.0
    %356 = vmatprep.subr.mxu0 0.0
    %357 = vmatpush1.xpose.msra.mxu0 0.0
    %358 = vmatprep.subr.mxu0 0.0
    %359 = vmatpush1.xpose.msra.mxu0 0.0
    %360 = vmatprep.subr.mxu0 0.0
    %361 = vmatpush1.xpose.msra.mxu0 0.0
    %362 = vmatprep.subr.mxu0 0.0
    %363 = vmatpush1.xpose.msra.mxu0 0.0
    %364 = vmatprep.subr.mxu0 0.0
    %365 = vmatpush1.xpose.msra.mxu0 0.0
    %366 = vmatprep.subr.mxu0 0.0
    %367 = vmatpush1.xpose.msra.mxu0 0.0
    %368 = vmatprep.subr.mxu0 0.0
    %369 = vmatpush1.xpose.msra.mxu0 0.0
    %370 = vmatprep.subr.mxu0 0.0
    %371 = vmatpush1.xpose.msra.mxu0 0.0
    %372 = vmatprep.subr.mxu0 0.0
    %373 = vmatpush1.xpose.msra.mxu0 0.0
    %374 = vmatprep.subr.mxu0 0.0
    %375 = vmatpush1.xpose.msra.mxu0 0.0
    %376 = vmatprep.subr.mxu0 0.0
    %377 = vmatpush1.xpose.msra.mxu0 0.0
    %378 = vmatprep.subr.mxu0 0.0
    %379 = vmatpush1.xpose.msra.mxu0 0.0
    %380 = vmatprep.subr.mxu0 0.0
    %381 = vmatpush1.xpose.msra.mxu0 0.0
    %382 = vmatprep.subr.mxu0 0.0
    %383 = vmatpush1.xpose.msra.mxu0 0.0
    %384 = vmatprep.subr.mxu0 0.0
    %385 = vmatpush1.xpose.msra.mxu0 0.0
    %386 = vmatprep.subr.mxu0 0.0
    %387 = vmatpush1.xpose.msra.mxu0 0.0
    %388 = vmatprep.subr.mxu0 0.0
    %389 = vmatpush1.xpose.msra.mxu0 0.0
    %390 = vmatprep.subr.mxu0 0.0
    %391 = vmatpush1.xpose.msra.mxu0 0.0
    %392 = vmatprep.subr.mxu0 0.0
    %393 = vmatpush1.xpose.msra.mxu0 0.0
    %394 = vmatprep.subr.mxu0 0.0
    %395 = vmatpush1.xpose.msra.mxu0 0.0
    %396 = vmatprep.subr.mxu0 0.0
    %397 = vmatpush1.xpose.msra.mxu0 0.0
    %398 = vmatprep.mubr.f32.mxu0 0.0
    %399 = vmatmul.mubr.f32.gmra.mrb[0].mxu0 %v330
    %v400 = vpop.f32.mrb[0].mxu0
    %v401 = vadd.f32 0.0, %v400
    %v402 = vpop.f32.mrb[0].mxu0
    %403 = vdwg.mxu0
    %404 = vrot.lane.b32.xlu0 %v236, 112
    %v405 = vpop.permute.xlu0 %404
    %406 = vrot.lane.b32.xlu0 %v236, 80
    %v407 = vpop.permute.xlu0 %406
    %v408 = vsel %vm251, %v405, 0
    %v410 = vsel %vm251, %v407, 0
    %412 = vmatprep.subr.mxu0 0.0
    %413 = vmatpush1.xpose.msra.mxu0 %v410
    %414 = vmatprep.subr.mxu0 0.0
    %415 = vmatpush1.xpose.msra.mxu0 0.0
    %416 = vmatprep.subr.mxu0 0.0
    %417 = vmatpush1.xpose.msra.mxu0 0.0
    %418 = vmatprep.subr.mxu0 0.0
    %419 = vmatpush1.xpose.msra.mxu0 0.0
    %420 = vmatprep.subr.mxu0 0.0
    %421 = vmatpush1.xpose.msra.mxu0 0.0
    %422 = vmatprep.subr.mxu0 0.0
    %423 = vmatpush1.xpose.msra.mxu0 0.0
    %424 = vmatprep.subr.mxu0 0.0
    %425 = vmatpush1.xpose.msra.mxu0 0.0
    %426 = vmatprep.subr.mxu0 0.0
    %427 = vmatpush1.xpose.msra.mxu0 0.0
    %428 = vmatprep.subr.mxu0 0.0
    %429 = vmatpush1.xpose.msra.mxu0 0.0
    %430 = vmatprep.subr.mxu0 0.0
    %431 = vmatpush1.xpose.msra.mxu0 0.0
    %432 = vmatprep.subr.mxu0 0.0
    %433 = vmatpush1.xpose.msra.mxu0 0.0
    %434 = vmatprep.subr.mxu0 0.0
    %435 = vmatpush1.xpose.msra.mxu0 0.0
    %436 = vmatprep.subr.mxu0 0.0
    %437 = vmatpush1.xpose.msra.mxu0 0.0
    %438 = vmatprep.subr.mxu0 0.0
    %439 = vmatpush1.xpose.msra.mxu0 0.0
    %440 = vmatprep.subr.mxu0 0.0
    %441 = vmatpush1.xpose.msra.mxu0 0.0
    %442 = vmatprep.subr.mxu0 0.0
    %443 = vmatpush1.xpose.msra.mxu0 0.0
    %444 = vmatprep.subr.mxu0 0.0
    %445 = vmatpush1.xpose.msra.mxu0 0.0
    %446 = vmatprep.subr.mxu0 0.0
    %447 = vmatpush1.xpose.msra.mxu0 0.0
    %448 = vmatprep.subr.mxu0 0.0
    %449 = vmatpush1.xpose.msra.mxu0 0.0
    %450 = vmatprep.subr.mxu0 0.0
    %451 = vmatpush1.xpose.msra.mxu0 0.0
    %452 = vmatprep.subr.mxu0 0.0
    %453 = vmatpush1.xpose.msra.mxu0 0.0
    %454 = vmatprep.subr.mxu0 0.0
    %455 = vmatpush1.xpose.msra.mxu0 0.0
    %456 = vmatprep.subr.mxu0 0.0
    %457 = vmatpush1.xpose.msra.mxu0 0.0
    %458 = vmatprep.subr.mxu0 0.0
    %459 = vmatpush1.xpose.msra.mxu0 0.0
    %460 = vmatprep.subr.mxu0 0.0
    %461 = vmatpush1.xpose.msra.mxu0 0.0
    %462 = vmatprep.subr.mxu0 0.0
    %463 = vmatpush1.xpose.msra.mxu0 0.0
    %464 = vmatprep.subr.mxu0 0.0
    %465 = vmatpush1.xpose.msra.mxu0 0.0
    %466 = vmatprep.subr.mxu0 0.0
    %467 = vmatpush1.xpose.msra.mxu0 0.0
    %468 = vmatprep.subr.mxu0 0.0
    %469 = vmatpush1.xpose.msra.mxu0 0.0
    %470 = vmatprep.subr.mxu0 0.0
    %471 = vmatpush1.xpose.msra.mxu0 0.0
    %472 = vmatprep.subr.mxu0 0.0
    %473 = vmatpush1.xpose.msra.mxu0 0.0
    %474 = vmatprep.subr.mxu0 0.0
    %475 = vmatpush1.xpose.msra.mxu0 0.0
    %476 = vmatprep.mubr.f32.mxu0 0.0
    %477 = vmatmul.mubr.f32.gmra.mrb[0].mxu0 %v408
    %v478 = vpop.f32.mrb[0].mxu0
    %v479 = vadd.f32 0.0, %v478
    %v480 = vpop.f32.mrb[0].mxu0
    %481 = vdwg.mxu0
    %482 = vrot.lane.b32.xlu0 %v236, 104
    %v483 = vpop.permute.xlu0 %482
    %484 = vrot.lane.b32.xlu0 %v236, 72
    %v485 = vpop.permute.xlu0 %484
    %v486 = vsel %vm251, %v483, 0
    %v488 = vsel %vm251, %v485, 0
    %490 = vmatprep.subr.mxu0 0.0
    %491 = vmatpush1.xpose.msra.mxu0 %v488
    %492 = vmatprep.subr.mxu0 0.0
    %493 = vmatpush1.xpose.msra.mxu0 0.0
    %494 = vmatprep.subr.mxu0 0.0
    %495 = vmatpush1.xpose.msra.mxu0 0.0
    %496 = vmatprep.subr.mxu0 0.0
    %497 = vmatpush1.xpose.msra.mxu0 0.0
    %498 = vmatprep.subr.mxu0 0.0
    %499 = vmatpush1.xpose.msra.mxu0 0.0
    %500 = vmatprep.subr.mxu0 0.0
    %501 = vmatpush1.xpose.msra.mxu0 0.0
    %502 = vmatprep.subr.mxu0 0.0
    %503 = vmatpush1.xpose.msra.mxu0 0.0
    %504 = vmatprep.subr.mxu0 0.0
    %505 = vmatpush1.xpose.msra.mxu0 0.0
    %506 = vmatprep.subr.mxu0 0.0
    %507 = vmatpush1.xpose.msra.mxu0 0.0
    %508 = vmatprep.subr.mxu0 0.0
    %509 = vmatpush1.xpose.msra.mxu0 0.0
    %510 = vmatprep.subr.mxu0 0.0
    %511 = vmatpush1.xpose.msra.mxu0 0.0
    %512 = vmatprep.subr.mxu0 0.0
    %513 = vmatpush1.xpose.msra.mxu0 0.0
    %514 = vmatprep.subr.mxu0 0.0
    %515 = vmatpush1.xpose.msra.mxu0 0.0
    %516 = vmatprep.subr.mxu0 0.0
    %517 = vmatpush1.xpose.msra.mxu0 0.0
    %518 = vmatprep.subr.mxu0 0.0
    %519 = vmatpush1.xpose.msra.mxu0 0.0
    %520 = vmatprep.subr.mxu0 0.0
    %521 = vmatpush1.xpose.msra.mxu0 0.0
    %522 = vmatprep.subr.mxu0 0.0
    %523 = vmatpush1.xpose.msra.mxu0 0.0
    %524 = vmatprep.subr.mxu0 0.0
    %525 = vmatpush1.xpose.msra.mxu0 0.0
    %526 = vmatprep.subr.mxu0 0.0
    %527 = vmatpush1.xpose.msra.mxu0 0.0
    %528 = vmatprep.subr.mxu0 0.0
    %529 = vmatpush1.xpose.msra.mxu0 0.0
    %530 = vmatprep.subr.mxu0 0.0
    %531 = vmatpush1.xpose.msra.mxu0 0.0
    %532 = vmatprep.subr.mxu0 0.0
    %533 = vmatpush1.xpose.msra.mxu0 0.0
    %534 = vmatprep.subr.mxu0 0.0
    %535 = vmatpush1.xpose.msra.mxu0 0.0
    %536 = vmatprep.subr.mxu0 0.0
    %537 = vmatpush1.xpose.msra.mxu0 0.0
    %538 = vmatprep.subr.mxu0 0.0
    %539 = vmatpush1.xpose.msra.mxu0 0.0
    %540 = vmatprep.subr.mxu0 0.0
    %541 = vmatpush1.xpose.msra.mxu0 0.0
    %542 = vmatprep.subr.mxu0 0.0
    %543 = vmatpush1.xpose.msra.mxu0 0.0
    %544 = vmatprep.subr.mxu0 0.0
    %545 = vmatpush1.xpose.msra.mxu0 0.0
    %546 = vmatprep.subr.mxu0 0.0
    %547 = vmatpush1.xpose.msra.mxu0 0.0
    %548 = vmatprep.subr.mxu0 0.0
    %549 = vmatpush1.xpose.msra.mxu0 0.0
    %550 = vmatprep.subr.mxu0 0.0
    %551 = vmatpush1.xpose.msra.mxu0 0.0
    %552 = vmatprep.subr.mxu0 0.0
    %553 = vmatpush1.xpose.msra.mxu0 0.0
    %554 = vmatprep.mubr.f32.mxu0 0.0
    %555 = vmatmul.mubr.f32.gmra.mrb[0].mxu0 %v486
    %v556 = vpop.f32.mrb[0].mxu0
    %v557 = vadd.f32 0.0, %v556
    %v558 = vpop.f32.mrb[0].mxu0
    %559 = vdwg.mxu0
    %561 = vrot.lane.b32.xlu0 %v241, 96
    %v562 = vpop.permute.xlu0 %561
    %v563 = vsel %vm251, %v241, 0
    %v565 = vsel %vm251, %v562, 0
    %567 = vmatprep.subr.mxu0 0.0
    %568 = vmatpush1.xpose.msra.mxu0 %v565
    %569 = vmatprep.subr.mxu0 0.0
    %570 = vmatpush1.xpose.msra.mxu0 0.0
    %571 = vmatprep.subr.mxu0 0.0
    %572 = vmatpush1.xpose.msra.mxu0 0.0
    %573 = vmatprep.subr.mxu0 0.0
    %574 = vmatpush1.xpose.msra.mxu0 0.0
    %575 = vmatprep.subr.mxu0 0.0
    %576 = vmatpush1.xpose.msra.mxu0 0.0
    %577 = vmatprep.subr.mxu0 0.0
    %578 = vmatpush1.xpose.msra.mxu0 0.0
    %579 = vmatprep.subr.mxu0 0.0
    %580 = vmatpush1.xpose.msra.mxu0 0.0
    %581 = vmatprep.subr.mxu0 0.0
    %582 = vmatpush1.xpose.msra.mxu0 0.0
    %583 = vmatprep.subr.mxu0 0.0
    %584 = vmatpush1.xpose.msra.mxu0 0.0
    %585 = vmatprep.subr.mxu0 0.0
    %586 = vmatpush1.xpose.msra.mxu0 0.0
    %587 = vmatprep.subr.mxu0 0.0
    %588 = vmatpush1.xpose.msra.mxu0 0.0
    %589 = vmatprep.subr.mxu0 0.0
    %590 = vmatpush1.xpose.msra.mxu0 0.0
    %591 = vmatprep.subr.mxu0 0.0
    %592 = vmatpush1.xpose.msra.mxu0 0.0
    %593 = vmatprep.subr.mxu0 0.0
    %594 = vmatpush1.xpose.msra.mxu0 0.0
    %595 = vmatprep.subr.mxu0 0.0
    %596 = vmatpush1.xpose.msra.mxu0 0.0
    %597 = vmatprep.subr.mxu0 0.0
    %598 = vmatpush1.xpose.msra.mxu0 0.0
    %599 = vmatprep.subr.mxu0 0.0
    %600 = vmatpush1.xpose.msra.mxu0 0.0
    %601 = vmatprep.subr.mxu0 0.0
    %602 = vmatpush1.xpose.msra.mxu0 0.0
    %603 = vmatprep.subr.mxu0 0.0
    %604 = vmatpush1.xpose.msra.mxu0 0.0
    %605 = vmatprep.subr.mxu0 0.0
    %606 = vmatpush1.xpose.msra.mxu0 0.0
    %607 = vmatprep.subr.mxu0 0.0
    %608 = vmatpush1.xpose.msra.mxu0 0.0
    %609 = vmatprep.subr.mxu0 0.0
    %610 = vmatpush1.xpose.msra.mxu0 0.0
    %611 = vmatprep.subr.mxu0 0.0
    %612 = vmatpush1.xpose.msra.mxu0 0.0
    %613 = vmatprep.subr.mxu0 0.0
    %614 = vmatpush1.xpose.msra.mxu0 0.0
    %615 = vmatprep.subr.mxu0 0.0
    %616 = vmatpush1.xpose.msra.mxu0 0.0
    %617 = vmatprep.subr.mxu0 0.0
    %618 = vmatpush1.xpose.msra.mxu0 0.0
    %619 = vmatprep.subr.mxu0 0.0
    %620 = vmatpush1.xpose.msra.mxu0 0.0
    %621 = vmatprep.subr.mxu0 0.0
    %622 = vmatpush1.xpose.msra.mxu0 0.0
    %623 = vmatprep.subr.mxu0 0.0
    %624 = vmatpush1.xpose.msra.mxu0 0.0
    %625 = vmatprep.subr.mxu0 0.0
    %626 = vmatpush1.xpose.msra.mxu0 0.0
    %627 = vmatprep.subr.mxu0 0.0
    %628 = vmatpush1.xpose.msra.mxu0 0.0
    %629 = vmatprep.subr.mxu0 0.0
    %630 = vmatpush1.xpose.msra.mxu0 0.0
    %631 = vmatprep.mubr.f32.mxu0 0.0
    %632 = vmatmul.mubr.f32.gmra.mrb[0].mxu0 %v563
    %v633 = vpop.f32.mrb[0].mxu0
    %v634 = vadd.f32 0.0, %v633
    %v635 = vpop.f32.mrb[0].mxu0
    %636 = vdwg.mxu0
    %637 = vrot.lane.b32.xlu0 %v241, 120
    %v638 = vpop.permute.xlu0 %637
    %639 = vrot.lane.b32.xlu0 %v241, 88
    %v640 = vpop.permute.xlu0 %639
    %v641 = vsel %vm251, %v638, 0
    %v643 = vsel %vm251, %v640, 0
    %645 = vmatprep.subr.mxu0 0.0
    %646 = vmatpush1.xpose.msra.mxu0 %v643
    %647 = vmatprep.subr.mxu0 0.0
    %648 = vmatpush1.xpose.msra.mxu0 0.0
    %649 = vmatprep.subr.mxu0 0.0
    %650 = vmatpush1.xpose.msra.mxu0 0.0
    %651 = vmatprep.subr.mxu0 0.0
    %652 = vmatpush1.xpose.msra.mxu0 0.0
    %653 = vmatprep.subr.mxu0 0.0
    %654 = vmatpush1.xpose.msra.mxu0 0.0
    %655 = vmatprep.subr.mxu0 0.0
    %656 = vmatpush1.xpose.msra.mxu0 0.0
    %657 = vmatprep.subr.mxu0 0.0
    %658 = vmatpush1.xpose.msra.mxu0 0.0
    %659 = vmatprep.subr.mxu0 0.0
    %660 = vmatpush1.xpose.msra.mxu0 0.0
    %661 = vmatprep.subr.mxu0 0.0
    %662 = vmatpush1.xpose.msra.mxu0 0.0
    %663 = vmatprep.subr.mxu0 0.0
    %664 = vmatpush1.xpose.msra.mxu0 0.0
    %665 = vmatprep.subr.mxu0 0.0
    %666 = vmatpush1.xpose.msra.mxu0 0.0
    %667 = vmatprep.subr.mxu0 0.0
    %668 = vmatpush1.xpose.msra.mxu0 0.0
    %669 = vmatprep.subr.mxu0 0.0
    %670 = vmatpush1.xpose.msra.mxu0 0.0
    %671 = vmatprep.subr.mxu0 0.0
    %672 = vmatpush1.xpose.msra.mxu0 0.0
    %673 = vmatprep.subr.mxu0 0.0
    %674 = vmatpush1.xpose.msra.mxu0 0.0
    %675 = vmatprep.subr.mxu0 0.0
    %676 = vmatpush1.xpose.msra.mxu0 0.0
    %677 = vmatprep.subr.mxu0 0.0
    %678 = vmatpush1.xpose.msra.mxu0 0.0
    %679 = vmatprep.subr.mxu0 0.0
    %680 = vmatpush1.xpose.msra.mxu0 0.0
    %681 = vmatprep.subr.mxu0 0.0
    %682 = vmatpush1.xpose.msra.mxu0 0.0
    %683 = vmatprep.subr.mxu0 0.0
    %684 = vmatpush1.xpose.msra.mxu0 0.0
    %685 = vmatprep.subr.mxu0 0.0
    %686 = vmatpush1.xpose.msra.mxu0 0.0
    %687 = vmatprep.subr.mxu0 0.0
    %688 = vmatpush1.xpose.msra.mxu0 0.0
    %689 = vmatprep.subr.mxu0 0.0
    %690 = vmatpush1.xpose.msra.mxu0 0.0
    %691 = vmatprep.subr.mxu0 0.0
    %692 = vmatpush1.xpose.msra.mxu0 0.0
    %693 = vmatprep.subr.mxu0 0.0
    %694 = vmatpush1.xpose.msra.mxu0 0.0
    %695 = vmatprep.subr.mxu0 0.0
    %696 = vmatpush1.xpose.msra.mxu0 0.0
    %697 = vmatprep.subr.mxu0 0.0
    %698 = vmatpush1.xpose.msra.mxu0 0.0
    %699 = vmatprep.subr.mxu0 0.0
    %700 = vmatpush1.xpose.msra.mxu0 0.0
    %701 = vmatprep.subr.mxu0 0.0
    %702 = vmatpush1.xpose.msra.mxu0 0.0
    %703 = vmatprep.subr.mxu0 0.0
    %704 = vmatpush1.xpose.msra.mxu0 0.0
    %705 = vmatprep.subr.mxu0 0.0
    %706 = vmatpush1.xpose.msra.mxu0 0.0
    %707 = vmatprep.subr.mxu0 0.0
    %708 = vmatpush1.xpose.msra.mxu0 0.0
    %709 = vmatprep.mubr.f32.mxu0 0.0
    %710 = vmatmul.mubr.f32.gmra.mrb[0].mxu0 %v641
    %v711 = vpop.f32.mrb[0].mxu0
    %v712 = vadd.f32 0.0, %v711
    %v713 = vpop.f32.mrb[0].mxu0
    %714 = vdwg.mxu0
    %715 = vrot.lane.b32.xlu0 %v241, 112
    %v716 = vpop.permute.xlu0 %715
    %717 = vrot.lane.b32.xlu0 %v241, 80
    %v718 = vpop.permute.xlu0 %717
    %v719 = vsel %vm251, %v716, 0
    %v721 = vsel %vm251, %v718, 0
    %723 = vmatprep.subr.mxu0 0.0
    %724 = vmatpush1.xpose.msra.mxu0 %v721
    %725 = vmatprep.subr.mxu0 0.0
    %726 = vmatpush1.xpose.msra.mxu0 0.0
    %727 = vmatprep.subr.mxu0 0.0
    %728 = vmatpush1.xpose.msra.mxu0 0.0
    %729 = vmatprep.subr.mxu0 0.0
    %730 = vmatpush1.xpose.msra.mxu0 0.0
    %731 = vmatprep.subr.mxu0 0.0
    %732 = vmatpush1.xpose.msra.mxu0 0.0
    %733 = vmatprep.subr.mxu0 0.0
    %734 = vmatpush1.xpose.msra.mxu0 0.0
    %735 = vmatprep.subr.mxu0 0.0
    %736 = vmatpush1.xpose.msra.mxu0 0.0
    %737 = vmatprep.subr.mxu0 0.0
    %738 = vmatpush1.xpose.msra.mxu0 0.0
    %739 = vmatprep.subr.mxu0 0.0
    %740 = vmatpush1.xpose.msra.mxu0 0.0
    %741 = vmatprep.subr.mxu0 0.0
    %742 = vmatpush1.xpose.msra.mxu0 0.0
    %743 = vmatprep.subr.mxu0 0.0
    %744 = vmatpush1.xpose.msra.mxu0 0.0
    %745 = vmatprep.subr.mxu0 0.0
    %746 = vmatpush1.xpose.msra.mxu0 0.0
    %747 = vmatprep.subr.mxu0 0.0
    %748 = vmatpush1.xpose.msra.mxu0 0.0
    %749 = vmatprep.subr.mxu0 0.0
    %750 = vmatpush1.xpose.msra.mxu0 0.0
    %751 = vmatprep.subr.mxu0 0.0
    %752 = vmatpush1.xpose.msra.mxu0 0.0
    %753 = vmatprep.subr.mxu0 0.0
    %754 = vmatpush1.xpose.msra.mxu0 0.0
    %755 = vmatprep.subr.mxu0 0.0
    %756 = vmatpush1.xpose.msra.mxu0 0.0
    %757 = vmatprep.subr.mxu0 0.0
    %758 = vmatpush1.xpose.msra.mxu0 0.0
    %759 = vmatprep.subr.mxu0 0.0
    %760 = vmatpush1.xpose.msra.mxu0 0.0
    %761 = vmatprep.subr.mxu0 0.0
    %762 = vmatpush1.xpose.msra.mxu0 0.0
    %763 = vmatprep.subr.mxu0 0.0
    %764 = vmatpush1.xpose.msra.mxu0 0.0
    %765 = vmatprep.subr.mxu0 0.0
    %766 = vmatpush1.xpose.msra.mxu0 0.0
    %767 = vmatprep.subr.mxu0 0.0
    %768 = vmatpush1.xpose.msra.mxu0 0.0
    %769 = vmatprep.subr.mxu0 0.0
    %770 = vmatpush1.xpose.msra.mxu0 0.0
    %771 = vmatprep.subr.mxu0 0.0
    %772 = vmatpush1.xpose.msra.mxu0 0.0
    %773 = vmatprep.subr.mxu0 0.0
    %774 = vmatpush1.xpose.msra.mxu0 0.0
    %775 = vmatprep.subr.mxu0 0.0
    %776 = vmatpush1.xpose.msra.mxu0 0.0
    %777 = vmatprep.subr.mxu0 0.0
    %778 = vmatpush1.xpose.msra.mxu0 0.0
    %779 = vmatprep.subr.mxu0 0.0
    %780 = vmatpush1.xpose.msra.mxu0 0.0
    %781 = vmatprep.subr.mxu0 0.0
    %782 = vmatpush1.xpose.msra.mxu0 0.0
    %783 = vmatprep.subr.mxu0 0.0
    %784 = vmatpush1.xpose.msra.mxu0 0.0
    %785 = vmatprep.subr.mxu0 0.0
    %786 = vmatpush1.xpose.msra.mxu0 0.0
    %787 = vmatprep.mubr.f32.mxu0 0.0
    %788 = vmatmul.mubr.f32.gmra.mrb[0].mxu0 %v719
    %v789 = vpop.f32.mrb[0].mxu0
    %v790 = vadd.f32 0.0, %v789
    %v791 = vpop.f32.mrb[0].mxu0
    %792 = vdwg.mxu0
    %793 = vrot.lane.b32.xlu0 %v241, 104
    %v794 = vpop.permute.xlu0 %793
    %795 = vrot.lane.b32.xlu0 %v241, 72
    %v796 = vpop.permute.xlu0 %795
    %v797 = vsel %vm251, %v794, 0
    %v799 = vsel %vm251, %v796, 0
    %801 = vmatprep.subr.mxu0 0.0
    %802 = vmatpush1.xpose.msra.mxu0 %v799
    %803 = vmatprep.subr.mxu0 0.0
    %804 = vmatpush1.xpose.msra.mxu0 0.0
    %805 = vmatprep.subr.mxu0 0.0
    %806 = vmatpush1.xpose.msra.mxu0 0.0
    %807 = vmatprep.subr.mxu0 0.0
    %808 = vmatpush1.xpose.msra.mxu0 0.0
    %809 = vmatprep.subr.mxu0 0.0
    %810 = vmatpush1.xpose.msra.mxu0 0.0
    %811 = vmatprep.subr.mxu0 0.0
    %812 = vmatpush1.xpose.msra.mxu0 0.0
    %813 = vmatprep.subr.mxu0 0.0
    %814 = vmatpush1.xpose.msra.mxu0 0.0
    %815 = vmatprep.subr.mxu0 0.0
    %816 = vmatpush1.xpose.msra.mxu0 0.0
    %817 = vmatprep.subr.mxu0 0.0
    %818 = vmatpush1.xpose.msra.mxu0 0.0
    %819 = vmatprep.subr.mxu0 0.0
    %820 = vmatpush1.xpose.msra.mxu0 0.0
    %821 = vmatprep.subr.mxu0 0.0
    %822 = vmatpush1.xpose.msra.mxu0 0.0
    %823 = vmatprep.subr.mxu0 0.0
    %824 = vmatpush1.xpose.msra.mxu0 0.0
    %825 = vmatprep.subr.mxu0 0.0
    %826 = vmatpush1.xpose.msra.mxu0 0.0
    %827 = vmatprep.subr.mxu0 0.0
    %828 = vmatpush1.xpose.msra.mxu0 0.0
    %829 = vmatprep.subr.mxu0 0.0
    %830 = vmatpush1.xpose.msra.mxu0 0.0
    %831 = vmatprep.subr.mxu0 0.0
    %832 = vmatpush1.xpose.msra.mxu0 0.0
    %833 = vmatprep.subr.mxu0 0.0
    %834 = vmatpush1.xpose.msra.mxu0 0.0
    %835 = vmatprep.subr.mxu0 0.0
    %836 = vmatpush1.xpose.msra.mxu0 0.0
    %837 = vmatprep.subr.mxu0 0.0
    %838 = vmatpush1.xpose.msra.mxu0 0.0
    %839 = vmatprep.subr.mxu0 0.0
    %840 = vmatpush1.xpose.msra.mxu0 0.0
    %841 = vmatprep.subr.mxu0 0.0
    %842 = vmatpush1.xpose.msra.mxu0 0.0
    %843 = vmatprep.subr.mxu0 0.0
    %844 = vmatpush1.xpose.msra.mxu0 0.0
    %845 = vmatprep.subr.mxu0 0.0
    %846 = vmatpush1.xpose.msra.mxu0 0.0
    %847 = vmatprep.subr.mxu0 0.0
    %848 = vmatpush1.xpose.msra.mxu0 0.0
    %849 = vmatprep.subr.mxu0 0.0
    %850 = vmatpush1.xpose.msra.mxu0 0.0
    %851 = vmatprep.subr.mxu0 0.0
    %852 = vmatpush1.xpose.msra.mxu0 0.0
    %853 = vmatprep.subr.mxu0 0.0
    %854 = vmatpush1.xpose.msra.mxu0 0.0
    %855 = vmatprep.subr.mxu0 0.0
    %856 = vmatpush1.xpose.msra.mxu0 0.0
    %857 = vmatprep.subr.mxu0 0.0
    %858 = vmatpush1.xpose.msra.mxu0 0.0
    %859 = vmatprep.subr.mxu0 0.0
    %860 = vmatpush1.xpose.msra.mxu0 0.0
    %861 = vmatprep.subr.mxu0 0.0
    %862 = vmatpush1.xpose.msra.mxu0 0.0
    %863 = vmatprep.subr.mxu0 0.0
    %864 = vmatpush1.xpose.msra.mxu0 0.0
    %865 = vmatprep.mubr.f32.mxu0 0.0
    %866 = vmatmul.mubr.f32.gmra.mrb[0].mxu0 %v797
    %v867 = vpop.f32.mrb[0].mxu0
    %v868 = vadd.f32 0.0, %v867
    %v869 = vpop.f32.mrb[0].mxu0
    %870 = vdwg.mxu0
    %v871 = vsel %vm251, %v323, -inf
    %872 = vmax.xlane.f32.xlu0 %v871
    %v873 = vpop.xlane.xlu0 %872
    %v874 = vsel %vm251, %v401, -inf
    %875 = vmax.xlane.f32.xlu0 %v874
    %v876 = vpop.xlane.xlu0 %875
    %v877 = vsel %vm251, %v479, -inf
    %878 = vmax.xlane.f32.xlu0 %v877
    %v879 = vpop.xlane.xlu0 %878
    %v880 = vsel %vm251, %v557, -inf
    %881 = vmax.xlane.f32.xlu0 %v880
    %v882 = vpop.xlane.xlu0 %881
    %v883 = vsel %vm251, %v634, -inf
    %884 = vmax.xlane.f32.xlu0 %v883
    %v885 = vpop.xlane.xlu0 %884
    %v886 = vsel %vm251, %v712, -inf
    %887 = vmax.xlane.f32.xlu0 %v886
    %v888 = vpop.xlane.xlu0 %887
    %v889 = vsel %vm251, %v790, -inf
    %890 = vmax.xlane.f32.xlu0 %v889
    %v891 = vpop.xlane.xlu0 %890
    %v892 = vsel %vm251, %v868, -inf
    %893 = vmax.xlane.f32.xlu0 %v892
    %v894 = vpop.xlane.xlu0 %893
    %v895 = vsub.f32 %v323, %v873
    %v896 = vsub.f32 %v401, %v876
    %v897 = vsub.f32 %v479, %v879
    %v898 = vsub.f32 %v557, %v882
    %v899 = vsub.f32 %v634, %v885
    %v900 = vsub.f32 %v712, %v888
    %v901 = vsub.f32 %v790, %v891
    %v902 = vsub.f32 %v868, %v894
    %v903 = vmul.f32 %v895, 1.442695
    %v904 = vpow.pop %v903
    %v905 = vmul.f32 %v896, 1.442695
    %v906 = vpow.pop %v905
    %v907 = vmul.f32 %v897, 1.442695
    %v908 = vpow.pop %v907
    %v909 = vmul.f32 %v898, 1.442695
    %v910 = vpow.pop %v909
    %v911 = vmul.f32 %v899, 1.442695
    %v912 = vpow.pop %v911
    %v913 = vmul.f32 %v900, 1.442695
    %v914 = vpow.pop %v913
    %v915 = vmul.f32 %v901, 1.442695
    %v916 = vpow.pop %v915
    %v917 = vmul.f32 %v902, 1.442695
    %v918 = vpow.pop %v917
    %v919 = vsel %vm251, %v904, 0.0
    %920 = vadd.xlane.f32.xlu0 %v919
    %v921 = vpop.xlane.xlu0 %920
    %v922 = vsel %vm251, %v906, 0.0
    %923 = vadd.xlane.f32.xlu0 %v922
    %v924 = vpop.xlane.xlu0 %923
    %v925 = vsel %vm251, %v908, 0.0
    %926 = vadd.xlane.f32.xlu0 %v925
    %v927 = vpop.xlane.xlu0 %926
    %v928 = vsel %vm251, %v910, 0.0
    %929 = vadd.xlane.f32.xlu0 %v928
    %v930 = vpop.xlane.xlu0 %929
    %v931 = vsel %vm251, %v912, 0.0
    %932 = vadd.xlane.f32.xlu0 %v931
    %v933 = vpop.xlane.xlu0 %932
    %v934 = vsel %vm251, %v914, 0.0
    %935 = vadd.xlane.f32.xlu0 %v934
    %v936 = vpop.xlane.xlu0 %935
    %v937 = vsel %vm251, %v916, 0.0
    %938 = vadd.xlane.f32.xlu0 %v937
    %v939 = vpop.xlane.xlu0 %938
    %v940 = vsel %vm251, %v918, 0.0
    %941 = vadd.xlane.f32.xlu0 %v940
    %v942 = vpop.xlane.xlu0 %941
    %v943 = vrcp.pop %v921
    %v944 = vrcp.pop %v924
    %v945 = vrcp.pop %v927
    %v946 = vrcp.pop %v930
    %v947 = vrcp.pop %v933
    %v948 = vrcp.pop %v936
    %v949 = vrcp.pop %v939
    %v950 = vrcp.pop %v942
    %v951 = vmul.f32 %v904, %v943
    %v952 = vmul.f32 %v906, %v944
    %v953 = vmul.f32 %v908, %v945
    %v954 = vmul.f32 %v910, %v946
    %v955 = vmul.f32 %v912, %v947
    %v956 = vmul.f32 %v914, %v948
    %v957 = vmul.f32 %v916, %v949
    %v958 = vmul.f32 %v918, %v950
    %959 = vrot.lane.b32.xlu0 %v236, 64
    %v960 = vpop.permute.xlu0 %959
    %v963 = vsel %vm251, %v951, 0
    %965 = vmatprep.subr.mxu0 0.0
    %966 = vmatpush1.msra.mxu0 %v960
    %967 = vmatprep.subr.mxu0 0.0
    %968 = vmatpush1.msra.mxu0 0.0
    %969 = vmatprep.subr.mxu0 0.0
    %970 = vmatpush1.msra.mxu0 0.0
    %971 = vmatprep.subr.mxu0 0.0
    %972 = vmatpush1.msra.mxu0 0.0
    %973 = vmatprep.subr.mxu0 0.0
    %974 = vmatpush1.msra.mxu0 0.0
    %975 = vmatprep.subr.mxu0 0.0
    %976 = vmatpush1.msra.mxu0 0.0
    %977 = vmatprep.subr.mxu0 0.0
    %978 = vmatpush1.msra.mxu0 0.0
    %979 = vmatprep.subr.mxu0 0.0
    %980 = vmatpush1.msra.mxu0 0.0
    %981 = vmatprep.subr.mxu0 0.0
    %982 = vmatpush1.msra.mxu0 0.0
    %983 = vmatprep.subr.mxu0 0.0
    %984 = vmatpush1.msra.mxu0 0.0
    %985 = vmatprep.subr.mxu0 0.0
    %986 = vmatpush1.msra.mxu0 0.0
    %987 = vmatprep.subr.mxu0 0.0
    %988 = vmatpush1.msra.mxu0 0.0
    %989 = vmatprep.subr.mxu0 0.0
    %990 = vmatpush1.msra.mxu0 0.0
    %991 = vmatprep.subr.mxu0 0.0
    %992 = vmatpush1.msra.mxu0 0.0
    %993 = vmatprep.subr.mxu0 0.0
    %994 = vmatpush1.msra.mxu0 0.0
    %995 = vmatprep.subr.mxu0 0.0
    %996 = vmatpush1.msra.mxu0 0.0
    %997 = vmatprep.subr.mxu0 0.0
    %998 = vmatpush1.msra.mxu0 0.0
    %999 = vmatprep.subr.mxu0 0.0
    %1000 = vmatpush1.msra.mxu0 0.0
    %1001 = vmatprep.subr.mxu0 0.0
    %1002 = vmatpush1.msra.mxu0 0.0
    %1003 = vmatprep.subr.mxu0 0.0
    %1004 = vmatpush1.msra.mxu0 0.0
    %1005 = vmatprep.subr.mxu0 0.0
    %1006 = vmatpush1.msra.mxu0 0.0
    %1007 = vmatprep.subr.mxu0 0.0
    %1008 = vmatpush1.msra.mxu0 0.0
    %1009 = vmatprep.subr.mxu0 0.0
    %1010 = vmatpush1.msra.mxu0 0.0
    %1011 = vmatprep.subr.mxu0 0.0
    %1012 = vmatpush1.msra.mxu0 0.0
    %1013 = vmatprep.subr.mxu0 0.0
    %1014 = vmatpush1.msra.mxu0 0.0
    %1015 = vmatprep.subr.mxu0 0.0
    %1016 = vmatpush1.msra.mxu0 0.0
    %1017 = vmatprep.subr.mxu0 0.0
    %1018 = vmatpush1.msra.mxu0 0.0
    %1019 = vmatprep.subr.mxu0 0.0
    %1020 = vmatpush1.msra.mxu0 0.0
    %1021 = vmatprep.subr.mxu0 0.0
    %1022 = vmatpush1.msra.mxu0 0.0
    %1023 = vmatprep.subr.mxu0 0.0
    %1024 = vmatpush1.msra.mxu0 0.0
    %1025 = vmatprep.subr.mxu0 0.0
    %1026 = vmatpush1.msra.mxu0 0.0
    %1027 = vmatprep.subr.mxu0 0.0
    %1028 = vmatpush1.msra.mxu0 0.0
    %1029 = vmatprep.mubr.f32.mxu0 0.0
    %1030 = vmatmul.mubr.f32.gmra.mrb[0].mxu0 %v963
    %v1031 = vpop.f32.mrb[0].mxu0
    %v1032 = vadd.f32 0.0, %v1031
    %v1033 = vpop.f32.mrb[0].mxu0
    %1034 = vdwg.mxu0
    %1035 = vrot.lane.b32.xlu0 %v236, 56
    %v1036 = vpop.permute.xlu0 %1035
    %v1039 = vsel %vm251, %v952, 0
    %1041 = vmatprep.subr.mxu0 0.0
    %1042 = vmatpush1.msra.mxu0 %v1036
    %1043 = vmatprep.subr.mxu0 0.0
    %1044 = vmatpush1.msra.mxu0 0.0
    %1045 = vmatprep.subr.mxu0 0.0
    %1046 = vmatpush1.msra.mxu0 0.0
    %1047 = vmatprep.subr.mxu0 0.0
    %1048 = vmatpush1.msra.mxu0 0.0
    %1049 = vmatprep.subr.mxu0 0.0
    %1050 = vmatpush1.msra.mxu0 0.0
    %1051 = vmatprep.subr.mxu0 0.0
    %1052 = vmatpush1.msra.mxu0 0.0
    %1053 = vmatprep.subr.mxu0 0.0
    %1054 = vmatpush1.msra.mxu0 0.0
    %1055 = vmatprep.subr.mxu0 0.0
    %1056 = vmatpush1.msra.mxu0 0.0
    %1057 = vmatprep.subr.mxu0 0.0
    %1058 = vmatpush1.msra.mxu0 0.0
    %1059 = vmatprep.subr.mxu0 0.0
    %1060 = vmatpush1.msra.mxu0 0.0
    %1061 = vmatprep.subr.mxu0 0.0
    %1062 = vmatpush1.msra.mxu0 0.0
    %1063 = vmatprep.subr.mxu0 0.0
    %1064 = vmatpush1.msra.mxu0 0.0
    %1065 = vmatprep.subr.mxu0 0.0
    %1066 = vmatpush1.msra.mxu0 0.0
    %1067 = vmatprep.subr.mxu0 0.0
    %1068 = vmatpush1.msra.mxu0 0.0
    %1069 = vmatprep.subr.mxu0 0.0
    %1070 = vmatpush1.msra.mxu0 0.0
    %1071 = vmatprep.subr.mxu0 0.0
    %1072 = vmatpush1.msra.mxu0 0.0
    %1073 = vmatprep.subr.mxu0 0.0
    %1074 = vmatpush1.msra.mxu0 0.0
    %1075 = vmatprep.subr.mxu0 0.0
    %1076 = vmatpush1.msra.mxu0 0.0
    %1077 = vmatprep.subr.mxu0 0.0
    %1078 = vmatpush1.msra.mxu0 0.0
    %1079 = vmatprep.subr.mxu0 0.0
    %1080 = vmatpush1.msra.mxu0 0.0
    %1081 = vmatprep.subr.mxu0 0.0
    %1082 = vmatpush1.msra.mxu0 0.0
    %1083 = vmatprep.subr.mxu0 0.0
    %1084 = vmatpush1.msra.mxu0 0.0
    %1085 = vmatprep.subr.mxu0 0.0
    %1086 = vmatpush1.msra.mxu0 0.0
    %1087 = vmatprep.subr.mxu0 0.0
    %1088 = vmatpush1.msra.mxu0 0.0
    %1089 = vmatprep.subr.mxu0 0.0
    %1090 = vmatpush1.msra.mxu0 0.0
    %1091 = vmatprep.subr.mxu0 0.0
    %1092 = vmatpush1.msra.mxu0 0.0
    %1093 = vmatprep.subr.mxu0 0.0
    %1094 = vmatpush1.msra.mxu0 0.0
    %1095 = vmatprep.subr.mxu0 0.0
    %1096 = vmatpush1.msra.mxu0 0.0
    %1097 = vmatprep.subr.mxu0 0.0
    %1098 = vmatpush1.msra.mxu0 0.0
    %1099 = vmatprep.subr.mxu0 0.0
    %1100 = vmatpush1.msra.mxu0 0.0
    %1101 = vmatprep.subr.mxu0 0.0
    %1102 = vmatpush1.msra.mxu0 0.0
    %1103 = vmatprep.subr.mxu0 0.0
    %1104 = vmatpush1.msra.mxu0 0.0
    %1105 = vmatprep.mubr.f32.mxu0 0.0
    %1106 = vmatmul.mubr.f32.gmra.mrb[0].mxu0 %v1039
    %v1107 = vpop.f32.mrb[0].mxu0
    %v1108 = vadd.f32 0.0, %v1107
    %v1109 = vpop.f32.mrb[0].mxu0
    %1110 = vdwg.mxu0
    %v1112 = vsel %vm251, %v1108, 0
    %1114 = vmatprep.subr.mxu0 0.0
    %1115 = vmatpush1.msra.mxu0 %v245
    %1116 = vmatprep.subr.mxu0 0.0
    %1117 = vmatpush1.msra.mxu0 0.0
    %1118 = vmatprep.subr.mxu0 0.0
    %1119 = vmatpush1.msra.mxu0 0.0
    %1120 = vmatprep.subr.mxu0 0.0
    %1121 = vmatpush1.msra.mxu0 0.0
    %1122 = vmatprep.subr.mxu0 0.0
    %1123 = vmatpush1.msra.mxu0 0.0
    %1124 = vmatprep.subr.mxu0 0.0
    %1125 = vmatpush1.msra.mxu0 0.0
    %1126 = vmatprep.subr.mxu0 0.0
    %1127 = vmatpush1.msra.mxu0 0.0
    %1128 = vmatprep.subr.mxu0 0.0
    %1129 = vmatpush1.msra.mxu0 0.0
    %1130 = vmatprep.subr.mxu0 0.0
    %1131 = vmatpush1.msra.mxu0 0.0
    %1132 = vmatprep.subr.mxu0 0.0
    %1133 = vmatpush1.msra.mxu0 0.0
    %1134 = vmatprep.subr.mxu0 0.0
    %1135 = vmatpush1.msra.mxu0 0.0
    %1136 = vmatprep.subr.mxu0 0.0
    %1137 = vmatpush1.msra.mxu0 0.0
    %1138 = vmatprep.subr.mxu0 0.0
    %1139 = vmatpush1.msra.mxu0 0.0
    %1140 = vmatprep.subr.mxu0 0.0
    %1141 = vmatpush1.msra.mxu0 0.0
    %1142 = vmatprep.subr.mxu0 0.0
    %1143 = vmatpush1.msra.mxu0 0.0
    %1144 = vmatprep.subr.mxu0 0.0
    %1145 = vmatpush1.msra.mxu0 0.0
    %1146 = vmatprep.subr.mxu0 0.0
    %1147 = vmatpush1.msra.mxu0 0.0
    %1148 = vmatprep.subr.mxu0 0.0
    %1149 = vmatpush1.msra.mxu0 0.0
    %1150 = vmatprep.subr.mxu0 0.0
    %1151 = vmatpush1.msra.mxu0 0.0
    %1152 = vmatprep.subr.mxu0 0.0
    %1153 = vmatpush1.msra.mxu0 0.0
    %1154 = vmatprep.subr.mxu0 0.0
    %1155 = vmatpush1.msra.mxu0 0.0
    %1156 = vmatprep.subr.mxu0 0.0
    %1157 = vmatpush1.msra.mxu0 0.0
    %1158 = vmatprep.subr.mxu0 0.0
    %1159 = vmatpush1.msra.mxu0 0.0
    %1160 = vmatprep.subr.mxu0 0.0
    %1161 = vmatpush1.msra.mxu0 0.0
    %1162 = vmatprep.subr.mxu0 0.0
    %1163 = vmatpush1.msra.mxu0 0.0
    %1164 = vmatprep.subr.mxu0 0.0
    %1165 = vmatpush1.msra.mxu0 0.0
    %1166 = vmatprep.subr.mxu0 0.0
    %1167 = vmatpush1.msra.mxu0 0.0
    %1168 = vmatprep.subr.mxu0 0.0
    %1169 = vmatpush1.msra.mxu0 0.0
    %1170 = vmatprep.subr.mxu0 0.0
    %1171 = vmatpush1.msra.mxu0 0.0
    %1172 = vmatprep.subr.mxu0 0.0
    %1173 = vmatpush1.msra.mxu0 0.0
    %1174 = vmatprep.subr.mxu0 0.0
    %1175 = vmatpush1.msra.mxu0 0.0
    %1176 = vmatprep.subr.mxu0 0.0
    %1177 = vmatpush1.msra.mxu0 0.0
    %1178 = vmatprep.mubr.f32.mxu0 0.0
    %1179 = vmatmul.mubr.f32.gmra.mrb[0].mxu0 %v1112
    %v1180 = vpop.f32.mrb[0].mxu0
    %v1181 = vadd.f32 0.0, %v1180
    %v1182 = vpop.f32.mrb[0].mxu0
    %1183 = vdwg.mxu0
    %v1185 = vsel %vm251, %v1032, 0
    %1187 = vmatprep.subr.mxu0 0.0
    %1188 = vmatpush1.msra.mxu0 %v244
    %1189 = vmatprep.subr.mxu0 0.0
    %1190 = vmatpush1.msra.mxu0 0.0
    %1191 = vmatprep.subr.mxu0 0.0
    %1192 = vmatpush1.msra.mxu0 0.0
    %1193 = vmatprep.subr.mxu0 0.0
    %1194 = vmatpush1.msra.mxu0 0.0
    %1195 = vmatprep.subr.mxu0 0.0
    %1196 = vmatpush1.msra.mxu0 0.0
    %1197 = vmatprep.subr.mxu0 0.0
    %1198 = vmatpush1.msra.mxu0 0.0
    %1199 = vmatprep.subr.mxu0 0.0
    %1200 = vmatpush1.msra.mxu0 0.0
    %1201 = vmatprep.subr.mxu0 0.0
    %1202 = vmatpush1.msra.mxu0 0.0
    %1203 = vmatprep.subr.mxu0 0.0
    %1204 = vmatpush1.msra.mxu0 0.0
    %1205 = vmatprep.subr.mxu0 0.0
    %1206 = vmatpush1.msra.mxu0 0.0
    %1207 = vmatprep.subr.mxu0 0.0
    %1208 = vmatpush1.msra.mxu0 0.0
    %1209 = vmatprep.subr.mxu0 0.0
    %1210 = vmatpush1.msra.mxu0 0.0
    %1211 = vmatprep.subr.mxu0 0.0
    %1212 = vmatpush1.msra.mxu0 0.0
    %1213 = vmatprep.subr.mxu0 0.0
    %1214 = vmatpush1.msra.mxu0 0.0
    %1215 = vmatprep.subr.mxu0 0.0
    %1216 = vmatpush1.msra.mxu0 0.0
    %1217 = vmatprep.subr.mxu0 0.0
    %1218 = vmatpush1.msra.mxu0 0.0
    %1219 = vmatprep.subr.mxu0 0.0
    %1220 = vmatpush1.msra.mxu0 0.0
    %1221 = vmatprep.subr.mxu0 0.0
    %1222 = vmatpush1.msra.mxu0 0.0
    %1223 = vmatprep.subr.mxu0 0.0
    %1224 = vmatpush1.msra.mxu0 0.0
    %1225 = vmatprep.subr.mxu0 0.0
    %1226 = vmatpush1.msra.mxu0 0.0
    %1227 = vmatprep.subr.mxu0 0.0
    %1228 = vmatpush1.msra.mxu0 0.0
    %1229 = vmatprep.subr.mxu0 0.0
    %1230 = vmatpush1.msra.mxu0 0.0
    %1231 = vmatprep.subr.mxu0 0.0
    %1232 = vmatpush1.msra.mxu0 0.0
    %1233 = vmatprep.subr.mxu0 0.0
    %1234 = vmatpush1.msra.mxu0 0.0
    %1235 = vmatprep.subr.mxu0 0.0
    %1236 = vmatpush1.msra.mxu0 0.0
    %1237 = vmatprep.subr.mxu0 0.0
    %1238 = vmatpush1.msra.mxu0 0.0
    %1239 = vmatprep.subr.mxu0 0.0
    %1240 = vmatpush1.msra.mxu0 0.0
    %1241 = vmatprep.subr.mxu0 0.0
    %1242 = vmatpush1.msra.mxu0 0.0
    %1243 = vmatprep.subr.mxu0 0.0
    %1244 = vmatpush1.msra.mxu0 0.0
    %1245 = vmatprep.subr.mxu0 0.0
    %1246 = vmatpush1.msra.mxu0 0.0
    %1247 = vmatprep.subr.mxu0 0.0
    %1248 = vmatpush1.msra.mxu0 0.0
    %1249 = vmatprep.subr.mxu0 0.0
    %1250 = vmatpush1.msra.mxu0 0.0
    %1251 = vmatprep.mubr.f32.mxu0 0.0
    %1252 = vmatmul.mubr.f32.gmra.mrb[0].mxu0 %v1185
    %v1253 = vpop.f32.mrb[0].mxu0
    %v1254 = vadd.f32 %v1181, %v1253
    %v1255 = vpop.f32.mrb[0].mxu0
    %1256 = vdwg.mxu0
    %1257 = vrot.lane.b32.xlu0 %v236, 48
    %v1258 = vpop.permute.xlu0 %1257
    %v1261 = vsel %vm251, %v953, 0
    %1263 = vmatprep.subr.mxu0 0.0
    %1264 = vmatpush1.msra.mxu0 %v1258
    %1265 = vmatprep.subr.mxu0 0.0
    %1266 = vmatpush1.msra.mxu0 0.0
    %1267 = vmatprep.subr.mxu0 0.0
    %1268 = vmatpush1.msra.mxu0 0.0
    %1269 = vmatprep.subr.mxu0 0.0
    %1270 = vmatpush1.msra.mxu0 0.0
    %1271 = vmatprep.subr.mxu0 0.0
    %1272 = vmatpush1.msra.mxu0 0.0
    %1273 = vmatprep.subr.mxu0 0.0
    %1274 = vmatpush1.msra.mxu0 0.0
    %1275 = vmatprep.subr.mxu0 0.0
    %1276 = vmatpush1.msra.mxu0 0.0
    %1277 = vmatprep.subr.mxu0 0.0
    %1278 = vmatpush1.msra.mxu0 0.0
    %1279 = vmatprep.subr.mxu0 0.0
    %1280 = vmatpush1.msra.mxu0 0.0
    %1281 = vmatprep.subr.mxu0 0.0
    %1282 = vmatpush1.msra.mxu0 0.0
    %1283 = vmatprep.subr.mxu0 0.0
    %1284 = vmatpush1.msra.mxu0 0.0
    %1285 = vmatprep.subr.mxu0 0.0
    %1286 = vmatpush1.msra.mxu0 0.0
    %1287 = vmatprep.subr.mxu0 0.0
    %1288 = vmatpush1.msra.mxu0 0.0
    %1289 = vmatprep.subr.mxu0 0.0
    %1290 = vmatpush1.msra.mxu0 0.0
    %1291 = vmatprep.subr.mxu0 0.0
    %1292 = vmatpush1.msra.mxu0 0.0
    %1293 = vmatprep.subr.mxu0 0.0
    %1294 = vmatpush1.msra.mxu0 0.0
    %1295 = vmatprep.subr.mxu0 0.0
    %1296 = vmatpush1.msra.mxu0 0.0
    %1297 = vmatprep.subr.mxu0 0.0
    %1298 = vmatpush1.msra.mxu0 0.0
    %1299 = vmatprep.subr.mxu0 0.0
    %1300 = vmatpush1.msra.mxu0 0.0
    %1301 = vmatprep.subr.mxu0 0.0
    %1302 = vmatpush1.msra.mxu0 0.0
    %1303 = vmatprep.subr.mxu0 0.0
    %1304 = vmatpush1.msra.mxu0 0.0
    %1305 = vmatprep.subr.mxu0 0.0
    %1306 = vmatpush1.msra.mxu0 0.0
    %1307 = vmatprep.subr.mxu0 0.0
    %1308 = vmatpush1.msra.mxu0 0.0
    %1309 = vmatprep.subr.mxu0 0.0
    %1310 = vmatpush1.msra.mxu0 0.0
    %1311 = vmatprep.subr.mxu0 0.0
    %1312 = vmatpush1.msra.mxu0 0.0
    %1313 = vmatprep.subr.mxu0 0.0
    %1314 = vmatpush1.msra.mxu0 0.0
    %1315 = vmatprep.subr.mxu0 0.0
    %1316 = vmatpush1.msra.mxu0 0.0
    %1317 = vmatprep.subr.mxu0 0.0
    %1318 = vmatpush1.msra.mxu0 0.0
    %1319 = vmatprep.subr.mxu0 0.0
    %1320 = vmatpush1.msra.mxu0 0.0
    %1321 = vmatprep.subr.mxu0 0.0
    %1322 = vmatpush1.msra.mxu0 0.0
    %1323 = vmatprep.subr.mxu0 0.0
    %1324 = vmatpush1.msra.mxu0 0.0
    %1325 = vmatprep.subr.mxu0 0.0
    %1326 = vmatpush1.msra.mxu0 0.0
    %1327 = vmatprep.mubr.f32.mxu0 0.0
    %1328 = vmatmul.mubr.f32.gmra.mrb[0].mxu0 %v1261
    %v1329 = vpop.f32.mrb[0].mxu0
    %v1330 = vadd.f32 0.0, %v1329
    %v1331 = vpop.f32.mrb[0].mxu0
    %1332 = vdwg.mxu0
    %v1334 = vsel %vm251, %v1330, 0
    %1336 = vmatprep.subr.mxu0 0.0
    %1337 = vmatpush1.msra.mxu0 %v246
    %1338 = vmatprep.subr.mxu0 0.0
    %1339 = vmatpush1.msra.mxu0 0.0
    %1340 = vmatprep.subr.mxu0 0.0
    %1341 = vmatpush1.msra.mxu0 0.0
    %1342 = vmatprep.subr.mxu0 0.0
    %1343 = vmatpush1.msra.mxu0 0.0
    %1344 = vmatprep.subr.mxu0 0.0
    %1345 = vmatpush1.msra.mxu0 0.0
    %1346 = vmatprep.subr.mxu0 0.0
    %1347 = vmatpush1.msra.mxu0 0.0
    %1348 = vmatprep.subr.mxu0 0.0
    %1349 = vmatpush1.msra.mxu0 0.0
    %1350 = vmatprep.subr.mxu0 0.0
    %1351 = vmatpush1.msra.mxu0 0.0
    %1352 = vmatprep.subr.mxu0 0.0
    %1353 = vmatpush1.msra.mxu0 0.0
    %1354 = vmatprep.subr.mxu0 0.0
    %1355 = vmatpush1.msra.mxu0 0.0
    %1356 = vmatprep.subr.mxu0 0.0
    %1357 = vmatpush1.msra.mxu0 0.0
    %1358 = vmatprep.subr.mxu0 0.0
    %1359 = vmatpush1.msra.mxu0 0.0
    %1360 = vmatprep.subr.mxu0 0.0
    %1361 = vmatpush1.msra.mxu0 0.0
    %1362 = vmatprep.subr.mxu0 0.0
    %1363 = vmatpush1.msra.mxu0 0.0
    %1364 = vmatprep.subr.mxu0 0.0
    %1365 = vmatpush1.msra.mxu0 0.0
    %1366 = vmatprep.subr.mxu0 0.0
    %1367 = vmatpush1.msra.mxu0 0.0
    %1368 = vmatprep.subr.mxu0 0.0
    %1369 = vmatpush1.msra.mxu0 0.0
    %1370 = vmatprep.subr.mxu0 0.0
    %1371 = vmatpush1.msra.mxu0 0.0
    %1372 = vmatprep.subr.mxu0 0.0
    %1373 = vmatpush1.msra.mxu0 0.0
    %1374 = vmatprep.subr.mxu0 0.0
    %1375 = vmatpush1.msra.mxu0 0.0
    %1376 = vmatprep.subr.mxu0 0.0
    %1377 = vmatpush1.msra.mxu0 0.0
    %1378 = vmatprep.subr.mxu0 0.0
    %1379 = vmatpush1.msra.mxu0 0.0
    %1380 = vmatprep.subr.mxu0 0.0
    %1381 = vmatpush1.msra.mxu0 0.0
    %1382 = vmatprep.subr.mxu0 0.0
    %1383 = vmatpush1.msra.mxu0 0.0
    %1384 = vmatprep.subr.mxu0 0.0
    %1385 = vmatpush1.msra.mxu0 0.0
    %1386 = vmatprep.subr.mxu0 0.0
    %1387 = vmatpush1.msra.mxu0 0.0
    %1388 = vmatprep.subr.mxu0 0.0
    %1389 = vmatpush1.msra.mxu0 0.0
    %1390 = vmatprep.subr.mxu0 0.0
    %1391 = vmatpush1.msra.mxu0 0.0
    %1392 = vmatprep.subr.mxu0 0.0
    %1393 = vmatpush1.msra.mxu0 0.0
    %1394 = vmatprep.subr.mxu0 0.0
    %1395 = vmatpush1.msra.mxu0 0.0
    %1396 = vmatprep.subr.mxu0 0.0
    %1397 = vmatpush1.msra.mxu0 0.0
    %1398 = vmatprep.subr.mxu0 0.0
    %1399 = vmatpush1.msra.mxu0 0.0
    %1400 = vmatprep.mubr.f32.mxu0 0.0
    %1401 = vmatmul.mubr.f32.gmra.mrb[0].mxu0 %v1334
    %v1402 = vpop.f32.mrb[0].mxu0
    %v1403 = vadd.f32 0.0, %v1402
    %v1404 = vpop.f32.mrb[0].mxu0
    %1405 = vdwg.mxu0
    %v1406 = vadd.f32 %v1254, %v1403
    %1407 = vrot.lane.b32.xlu0 %v236, 40
    %v1408 = vpop.permute.xlu0 %1407
    %v1411 = vsel %vm251, %v954, 0
    %1413 = vmatprep.subr.mxu0 0.0
    %1414 = vmatpush1.msra.mxu0 %v1408
    %1415 = vmatprep.subr.mxu0 0.0
    %1416 = vmatpush1.msra.mxu0 0.0
    %1417 = vmatprep.subr.mxu0 0.0
    %1418 = vmatpush1.msra.mxu0 0.0
    %1419 = vmatprep.subr.mxu0 0.0
    %1420 = vmatpush1.msra.mxu0 0.0
    %1421 = vmatprep.subr.mxu0 0.0
    %1422 = vmatpush1.msra.mxu0 0.0
    %1423 = vmatprep.subr.mxu0 0.0
    %1424 = vmatpush1.msra.mxu0 0.0
    %1425 = vmatprep.subr.mxu0 0.0
    %1426 = vmatpush1.msra.mxu0 0.0
    %1427 = vmatprep.subr.mxu0 0.0
    %1428 = vmatpush1.msra.mxu0 0.0
    %1429 = vmatprep.subr.mxu0 0.0
    %1430 = vmatpush1.msra.mxu0 0.0
    %1431 = vmatprep.subr.mxu0 0.0
    %1432 = vmatpush1.msra.mxu0 0.0
    %1433 = vmatprep.subr.mxu0 0.0
    %1434 = vmatpush1.msra.mxu0 0.0
    %1435 = vmatprep.subr.mxu0 0.0
    %1436 = vmatpush1.msra.mxu0 0.0
    %1437 = vmatprep.subr.mxu0 0.0
    %1438 = vmatpush1.msra.mxu0 0.0
    %1439 = vmatprep.subr.mxu0 0.0
    %1440 = vmatpush1.msra.mxu0 0.0
    %1441 = vmatprep.subr.mxu0 0.0
    %1442 = vmatpush1.msra.mxu0 0.0
    %1443 = vmatprep.subr.mxu0 0.0
    %1444 = vmatpush1.msra.mxu0 0.0
    %1445 = vmatprep.subr.mxu0 0.0
    %1446 = vmatpush1.msra.mxu0 0.0
    %1447 = vmatprep.subr.mxu0 0.0
    %1448 = vmatpush1.msra.mxu0 0.0
    %1449 = vmatprep.subr.mxu0 0.0
    %1450 = vmatpush1.msra.mxu0 0.0
    %1451 = vmatprep.subr.mxu0 0.0
    %1452 = vmatpush1.msra.mxu0 0.0
    %1453 = vmatprep.subr.mxu0 0.0
    %1454 = vmatpush1.msra.mxu0 0.0
    %1455 = vmatprep.subr.mxu0 0.0
    %1456 = vmatpush1.msra.mxu0 0.0
    %1457 = vmatprep.subr.mxu0 0.0
    %1458 = vmatpush1.msra.mxu0 0.0
    %1459 = vmatprep.subr.mxu0 0.0
    %1460 = vmatpush1.msra.mxu0 0.0
    %1461 = vmatprep.subr.mxu0 0.0
    %1462 = vmatpush1.msra.mxu0 0.0
    %1463 = vmatprep.subr.mxu0 0.0
    %1464 = vmatpush1.msra.mxu0 0.0
    %1465 = vmatprep.subr.mxu0 0.0
    %1466 = vmatpush1.msra.mxu0 0.0
    %1467 = vmatprep.subr.mxu0 0.0
    %1468 = vmatpush1.msra.mxu0 0.0
    %1469 = vmatprep.subr.mxu0 0.0
    %1470 = vmatpush1.msra.mxu0 0.0
    %1471 = vmatprep.subr.mxu0 0.0
    %1472 = vmatpush1.msra.mxu0 0.0
    %1473 = vmatprep.subr.mxu0 0.0
    %1474 = vmatpush1.msra.mxu0 0.0
    %1475 = vmatprep.subr.mxu0 0.0
    %1476 = vmatpush1.msra.mxu0 0.0
    %1477 = vmatprep.mubr.f32.mxu0 0.0
    %1478 = vmatmul.mubr.f32.gmra.mrb[0].mxu0 %v1411
    %v1479 = vpop.f32.mrb[0].mxu0
    %v1480 = vadd.f32 0.0, %v1479
    %v1481 = vpop.f32.mrb[0].mxu0
    %1482 = vdwg.mxu0
    %v1484 = vsel %vm251, %v1480, 0
    %1486 = vmatprep.subr.mxu0 0.0
    %1487 = vmatpush1.msra.mxu0 %v247
    %1488 = vmatprep.subr.mxu0 0.0
    %1489 = vmatpush1.msra.mxu0 0.0
    %1490 = vmatprep.subr.mxu0 0.0
    %1491 = vmatpush1.msra.mxu0 0.0
    %1492 = vmatprep.subr.mxu0 0.0
    %1493 = vmatpush1.msra.mxu0 0.0
    %1494 = vmatprep.subr.mxu0 0.0
    %1495 = vmatpush1.msra.mxu0 0.0
    %1496 = vmatprep.subr.mxu0 0.0
    %1497 = vmatpush1.msra.mxu0 0.0
    %1498 = vmatprep.subr.mxu0 0.0
    %1499 = vmatpush1.msra.mxu0 0.0
    %1500 = vmatprep.subr.mxu0 0.0
    %1501 = vmatpush1.msra.mxu0 0.0
    %1502 = vmatprep.subr.mxu0 0.0
    %1503 = vmatpush1.msra.mxu0 0.0
    %1504 = vmatprep.subr.mxu0 0.0
    %1505 = vmatpush1.msra.mxu0 0.0
    %1506 = vmatprep.subr.mxu0 0.0
    %1507 = vmatpush1.msra.mxu0 0.0
    %1508 = vmatprep.subr.mxu0 0.0
    %1509 = vmatpush1.msra.mxu0 0.0
    %1510 = vmatprep.subr.mxu0 0.0
    %1511 = vmatpush1.msra.mxu0 0.0
    %1512 = vmatprep.subr.mxu0 0.0
    %1513 = vmatpush1.msra.mxu0 0.0
    %1514 = vmatprep.subr.mxu0 0.0
    %1515 = vmatpush1.msra.mxu0 0.0
    %1516 = vmatprep.subr.mxu0 0.0
    %1517 = vmatpush1.msra.mxu0 0.0
    %1518 = vmatprep.subr.mxu0 0.0
    %1519 = vmatpush1.msra.mxu0 0.0
    %1520 = vmatprep.subr.mxu0 0.0
    %1521 = vmatpush1.msra.mxu0 0.0
    %1522 = vmatprep.subr.mxu0 0.0
    %1523 = vmatpush1.msra.mxu0 0.0
    %1524 = vmatprep.subr.mxu0 0.0
    %1525 = vmatpush1.msra.mxu0 0.0
    %1526 = vmatprep.subr.mxu0 0.0
    %1527 = vmatpush1.msra.mxu0 0.0
    %1528 = vmatprep.subr.mxu0 0.0
    %1529 = vmatpush1.msra.mxu0 0.0
    %1530 = vmatprep.subr.mxu0 0.0
    %1531 = vmatpush1.msra.mxu0 0.0
    %1532 = vmatprep.subr.mxu0 0.0
    %1533 = vmatpush1.msra.mxu0 0.0
    %1534 = vmatprep.subr.mxu0 0.0
    %1535 = vmatpush1.msra.mxu0 0.0
    %1536 = vmatprep.subr.mxu0 0.0
    %1537 = vmatpush1.msra.mxu0 0.0
    %1538 = vmatprep.subr.mxu0 0.0
    %1539 = vmatpush1.msra.mxu0 0.0
    %1540 = vmatprep.subr.mxu0 0.0
    %1541 = vmatpush1.msra.mxu0 0.0
    %1542 = vmatprep.subr.mxu0 0.0
    %1543 = vmatpush1.msra.mxu0 0.0
    %1544 = vmatprep.subr.mxu0 0.0
    %1545 = vmatpush1.msra.mxu0 0.0
    %1546 = vmatprep.subr.mxu0 0.0
    %1547 = vmatpush1.msra.mxu0 0.0
    %1548 = vmatprep.subr.mxu0 0.0
    %1549 = vmatpush1.msra.mxu0 0.0
    %1550 = vmatprep.mubr.f32.mxu0 0.0
    %1551 = vmatmul.mubr.f32.gmra.mrb[0].mxu0 %v1484
    %v1552 = vpop.f32.mrb[0].mxu0
    %v1553 = vadd.f32 0.0, %v1552
    %v1554 = vpop.f32.mrb[0].mxu0
    %1555 = vdwg.mxu0
    %v1556 = vadd.f32 %v1406, %v1553
    %1557 = vrot.lane.b32.xlu0 %v241, 64
    %v1558 = vpop.permute.xlu0 %1557
    %v1561 = vsel %vm251, %v955, 0
    %1563 = vmatprep.subr.mxu0 0.0
    %1564 = vmatpush1.msra.mxu0 %v1558
    %1565 = vmatprep.subr.mxu0 0.0
    %1566 = vmatpush1.msra.mxu0 0.0
    %1567 = vmatprep.subr.mxu0 0.0
    %1568 = vmatpush1.msra.mxu0 0.0
    %1569 = vmatprep.subr.mxu0 0.0
    %1570 = vmatpush1.msra.mxu0 0.0
    %1571 = vmatprep.subr.mxu0 0.0
    %1572 = vmatpush1.msra.mxu0 0.0
    %1573 = vmatprep.subr.mxu0 0.0
    %1574 = vmatpush1.msra.mxu0 0.0
    %1575 = vmatprep.subr.mxu0 0.0
    %1576 = vmatpush1.msra.mxu0 0.0
    %1577 = vmatprep.subr.mxu0 0.0
    %1578 = vmatpush1.msra.mxu0 0.0
    %1579 = vmatprep.subr.mxu0 0.0
    %1580 = vmatpush1.msra.mxu0 0.0
    %1581 = vmatprep.subr.mxu0 0.0
    %1582 = vmatpush1.msra.mxu0 0.0
    %1583 = vmatprep.subr.mxu0 0.0
    %1584 = vmatpush1.msra.mxu0 0.0
    %1585 = vmatprep.subr.mxu0 0.0
    %1586 = vmatpush1.msra.mxu0 0.0
    %1587 = vmatprep.subr.mxu0 0.0
    %1588 = vmatpush1.msra.mxu0 0.0
    %1589 = vmatprep.subr.mxu0 0.0
    %1590 = vmatpush1.msra.mxu0 0.0
    %1591 = vmatprep.subr.mxu0 0.0
    %1592 = vmatpush1.msra.mxu0 0.0
    %1593 = vmatprep.subr.mxu0 0.0
    %1594 = vmatpush1.msra.mxu0 0.0
    %1595 = vmatprep.subr.mxu0 0.0
    %1596 = vmatpush1.msra.mxu0 0.0
    %1597 = vmatprep.subr.mxu0 0.0
    %1598 = vmatpush1.msra.mxu0 0.0
    %1599 = vmatprep.subr.mxu0 0.0
    %1600 = vmatpush1.msra.mxu0 0.0
    %1601 = vmatprep.subr.mxu0 0.0
    %1602 = vmatpush1.msra.mxu0 0.0
    %1603 = vmatprep.subr.mxu0 0.0
    %1604 = vmatpush1.msra.mxu0 0.0
    %1605 = vmatprep.subr.mxu0 0.0
    %1606 = vmatpush1.msra.mxu0 0.0
    %1607 = vmatprep.subr.mxu0 0.0
    %1608 = vmatpush1.msra.mxu0 0.0
    %1609 = vmatprep.subr.mxu0 0.0
    %1610 = vmatpush1.msra.mxu0 0.0
    %1611 = vmatprep.subr.mxu0 0.0
    %1612 = vmatpush1.msra.mxu0 0.0
    %1613 = vmatprep.subr.mxu0 0.0
    %1614 = vmatpush1.msra.mxu0 0.0
    %1615 = vmatprep.subr.mxu0 0.0
    %1616 = vmatpush1.msra.mxu0 0.0
    %1617 = vmatprep.subr.mxu0 0.0
    %1618 = vmatpush1.msra.mxu0 0.0
    %1619 = vmatprep.subr.mxu0 0.0
    %1620 = vmatpush1.msra.mxu0 0.0
    %1621 = vmatprep.subr.mxu0 0.0
    %1622 = vmatpush1.msra.mxu0 0.0
    %1623 = vmatprep.subr.mxu0 0.0
    %1624 = vmatpush1.msra.mxu0 0.0
    %1625 = vmatprep.subr.mxu0 0.0
    %1626 = vmatpush1.msra.mxu0 0.0
    %1627 = vmatprep.mubr.f32.mxu0 0.0
    %1628 = vmatmul.mubr.f32.gmra.mrb[0].mxu0 %v1561
    %v1629 = vpop.f32.mrb[0].mxu0
    %v1630 = vadd.f32 0.0, %v1629
    %v1631 = vpop.f32.mrb[0].mxu0
    %1632 = vdwg.mxu0
    %1633 = vrot.lane.b32.xlu0 %v241, 56
    %v1634 = vpop.permute.xlu0 %1633
    %v1637 = vsel %vm251, %v956, 0
    %1639 = vmatprep.subr.mxu0 0.0
    %1640 = vmatpush1.msra.mxu0 %v1634
    %1641 = vmatprep.subr.mxu0 0.0
    %1642 = vmatpush1.msra.mxu0 0.0
    %1643 = vmatprep.subr.mxu0 0.0
    %1644 = vmatpush1.msra.mxu0 0.0
    %1645 = vmatprep.subr.mxu0 0.0
    %1646 = vmatpush1.msra.mxu0 0.0
    %1647 = vmatprep.subr.mxu0 0.0
    %1648 = vmatpush1.msra.mxu0 0.0
    %1649 = vmatprep.subr.mxu0 0.0
    %1650 = vmatpush1.msra.mxu0 0.0
    %1651 = vmatprep.subr.mxu0 0.0
    %1652 = vmatpush1.msra.mxu0 0.0
    %1653 = vmatprep.subr.mxu0 0.0
    %1654 = vmatpush1.msra.mxu0 0.0
    %1655 = vmatprep.subr.mxu0 0.0
    %1656 = vmatpush1.msra.mxu0 0.0
    %1657 = vmatprep.subr.mxu0 0.0
    %1658 = vmatpush1.msra.mxu0 0.0
    %1659 = vmatprep.subr.mxu0 0.0
    %1660 = vmatpush1.msra.mxu0 0.0
    %1661 = vmatprep.subr.mxu0 0.0
    %1662 = vmatpush1.msra.mxu0 0.0
    %1663 = vmatprep.subr.mxu0 0.0
    %1664 = vmatpush1.msra.mxu0 0.0
    %1665 = vmatprep.subr.mxu0 0.0
    %1666 = vmatpush1.msra.mxu0 0.0
    %1667 = vmatprep.subr.mxu0 0.0
    %1668 = vmatpush1.msra.mxu0 0.0
    %1669 = vmatprep.subr.mxu0 0.0
    %1670 = vmatpush1.msra.mxu0 0.0
    %1671 = vmatprep.subr.mxu0 0.0
    %1672 = vmatpush1.msra.mxu0 0.0
    %1673 = vmatprep.subr.mxu0 0.0
    %1674 = vmatpush1.msra.mxu0 0.0
    %1675 = vmatprep.subr.mxu0 0.0
    %1676 = vmatpush1.msra.mxu0 0.0
    %1677 = vmatprep.subr.mxu0 0.0
    %1678 = vmatpush1.msra.mxu0 0.0
    %1679 = vmatprep.subr.mxu0 0.0
    %1680 = vmatpush1.msra.mxu0 0.0
    %1681 = vmatprep.subr.mxu0 0.0
    %1682 = vmatpush1.msra.mxu0 0.0
    %1683 = vmatprep.subr.mxu0 0.0
    %1684 = vmatpush1.msra.mxu0 0.0
    %1685 = vmatprep.subr.mxu0 0.0
    %1686 = vmatpush1.msra.mxu0 0.0
    %1687 = vmatprep.subr.mxu0 0.0
    %1688 = vmatpush1.msra.mxu0 0.0
    %1689 = vmatprep.subr.mxu0 0.0
    %1690 = vmatpush1.msra.mxu0 0.0
    %1691 = vmatprep.subr.mxu0 0.0
    %1692 = vmatpush1.msra.mxu0 0.0
    %1693 = vmatprep.subr.mxu0 0.0
    %1694 = vmatpush1.msra.mxu0 0.0
    %1695 = vmatprep.subr.mxu0 0.0
    %1696 = vmatpush1.msra.mxu0 0.0
    %1697 = vmatprep.subr.mxu0 0.0
    %1698 = vmatpush1.msra.mxu0 0.0
    %1699 = vmatprep.subr.mxu0 0.0
    %1700 = vmatpush1.msra.mxu0 0.0
    %1701 = vmatprep.subr.mxu0 0.0
    %1702 = vmatpush1.msra.mxu0 0.0
    %1703 = vmatprep.mubr.f32.mxu0 0.0
    %1704 = vmatmul.mubr.f32.gmra.mrb[0].mxu0 %v1637
    %v1705 = vpop.f32.mrb[0].mxu0
    %v1706 = vadd.f32 0.0, %v1705
    %v1707 = vpop.f32.mrb[0].mxu0
    %1708 = vdwg.mxu0
    %v1710 = vsel %vm251, %v1706, 0
    %1712 = vmatprep.subr.mxu0 0.0
    %1713 = vmatpush1.msra.mxu0 %v245
    %1714 = vmatprep.subr.mxu0 0.0
    %1715 = vmatpush1.msra.mxu0 0.0
    %1716 = vmatprep.subr.mxu0 0.0
    %1717 = vmatpush1.msra.mxu0 0.0
    %1718 = vmatprep.subr.mxu0 0.0
    %1719 = vmatpush1.msra.mxu0 0.0
    %1720 = vmatprep.subr.mxu0 0.0
    %1721 = vmatpush1.msra.mxu0 0.0
    %1722 = vmatprep.subr.mxu0 0.0
    %1723 = vmatpush1.msra.mxu0 0.0
    %1724 = vmatprep.subr.mxu0 0.0
    %1725 = vmatpush1.msra.mxu0 0.0
    %1726 = vmatprep.subr.mxu0 0.0
    %1727 = vmatpush1.msra.mxu0 0.0
    %1728 = vmatprep.subr.mxu0 0.0
    %1729 = vmatpush1.msra.mxu0 0.0
    %1730 = vmatprep.subr.mxu0 0.0
    %1731 = vmatpush1.msra.mxu0 0.0
    %1732 = vmatprep.subr.mxu0 0.0
    %1733 = vmatpush1.msra.mxu0 0.0
    %1734 = vmatprep.subr.mxu0 0.0
    %1735 = vmatpush1.msra.mxu0 0.0
    %1736 = vmatprep.subr.mxu0 0.0
    %1737 = vmatpush1.msra.mxu0 0.0
    %1738 = vmatprep.subr.mxu0 0.0
    %1739 = vmatpush1.msra.mxu0 0.0
    %1740 = vmatprep.subr.mxu0 0.0
    %1741 = vmatpush1.msra.mxu0 0.0
    %1742 = vmatprep.subr.mxu0 0.0
    %1743 = vmatpush1.msra.mxu0 0.0
    %1744 = vmatprep.subr.mxu0 0.0
    %1745 = vmatpush1.msra.mxu0 0.0
    %1746 = vmatprep.subr.mxu0 0.0
    %1747 = vmatpush1.msra.mxu0 0.0
    %1748 = vmatprep.subr.mxu0 0.0
    %1749 = vmatpush1.msra.mxu0 0.0
    %1750 = vmatprep.subr.mxu0 0.0
    %1751 = vmatpush1.msra.mxu0 0.0
    %1752 = vmatprep.subr.mxu0 0.0
    %1753 = vmatpush1.msra.mxu0 0.0
    %1754 = vmatprep.subr.mxu0 0.0
    %1755 = vmatpush1.msra.mxu0 0.0
    %1756 = vmatprep.subr.mxu0 0.0
    %1757 = vmatpush1.msra.mxu0 0.0
    %1758 = vmatprep.subr.mxu0 0.0
    %1759 = vmatpush1.msra.mxu0 0.0
    %1760 = vmatprep.subr.mxu0 0.0
    %1761 = vmatpush1.msra.mxu0 0.0
    %1762 = vmatprep.subr.mxu0 0.0
    %1763 = vmatpush1.msra.mxu0 0.0
    %1764 = vmatprep.subr.mxu0 0.0
    %1765 = vmatpush1.msra.mxu0 0.0
    %1766 = vmatprep.subr.mxu0 0.0
    %1767 = vmatpush1.msra.mxu0 0.0
    %1768 = vmatprep.subr.mxu0 0.0
    %1769 = vmatpush1.msra.mxu0 0.0
    %1770 = vmatprep.subr.mxu0 0.0
    %1771 = vmatpush1.msra.mxu0 0.0
    %1772 = vmatprep.subr.mxu0 0.0
    %1773 = vmatpush1.msra.mxu0 0.0
    %1774 = vmatprep.subr.mxu0 0.0
    %1775 = vmatpush1.msra.mxu0 0.0
    %1776 = vmatprep.mubr.f32.mxu0 0.0
    %1777 = vmatmul.mubr.f32.gmra.mrb[0].mxu0 %v1710
    %v1778 = vpop.f32.mrb[0].mxu0
    %v1779 = vadd.f32 0.0, %v1778
    %v1780 = vpop.f32.mrb[0].mxu0
    %1781 = vdwg.mxu0
    %v1783 = vsel %vm251, %v1630, 0
    %1785 = vmatprep.subr.mxu0 0.0
    %1786 = vmatpush1.msra.mxu0 %v244
    %1787 = vmatprep.subr.mxu0 0.0
    %1788 = vmatpush1.msra.mxu0 0.0
    %1789 = vmatprep.subr.mxu0 0.0
    %1790 = vmatpush1.msra.mxu0 0.0
    %1791 = vmatprep.subr.mxu0 0.0
    %1792 = vmatpush1.msra.mxu0 0.0
    %1793 = vmatprep.subr.mxu0 0.0
    %1794 = vmatpush1.msra.mxu0 0.0
    %1795 = vmatprep.subr.mxu0 0.0
    %1796 = vmatpush1.msra.mxu0 0.0
    %1797 = vmatprep.subr.mxu0 0.0
    %1798 = vmatpush1.msra.mxu0 0.0
    %1799 = vmatprep.subr.mxu0 0.0
    %1800 = vmatpush1.msra.mxu0 0.0
    %1801 = vmatprep.subr.mxu0 0.0
    %1802 = vmatpush1.msra.mxu0 0.0
    %1803 = vmatprep.subr.mxu0 0.0
    %1804 = vmatpush1.msra.mxu0 0.0
    %1805 = vmatprep.subr.mxu0 0.0
    %1806 = vmatpush1.msra.mxu0 0.0
    %1807 = vmatprep.subr.mxu0 0.0
    %1808 = vmatpush1.msra.mxu0 0.0
    %1809 = vmatprep.subr.mxu0 0.0
    %1810 = vmatpush1.msra.mxu0 0.0
    %1811 = vmatprep.subr.mxu0 0.0
    %1812 = vmatpush1.msra.mxu0 0.0
    %1813 = vmatprep.subr.mxu0 0.0
    %1814 = vmatpush1.msra.mxu0 0.0
    %1815 = vmatprep.subr.mxu0 0.0
    %1816 = vmatpush1.msra.mxu0 0.0
    %1817 = vmatprep.subr.mxu0 0.0
    %1818 = vmatpush1.msra.mxu0 0.0
    %1819 = vmatprep.subr.mxu0 0.0
    %1820 = vmatpush1.msra.mxu0 0.0
    %1821 = vmatprep.subr.mxu0 0.0
    %1822 = vmatpush1.msra.mxu0 0.0
    %1823 = vmatprep.subr.mxu0 0.0
    %1824 = vmatpush1.msra.mxu0 0.0
    %1825 = vmatprep.subr.mxu0 0.0
    %1826 = vmatpush1.msra.mxu0 0.0
    %1827 = vmatprep.subr.mxu0 0.0
    %1828 = vmatpush1.msra.mxu0 0.0
    %1829 = vmatprep.subr.mxu0 0.0
    %1830 = vmatpush1.msra.mxu0 0.0
    %1831 = vmatprep.subr.mxu0 0.0
    %1832 = vmatpush1.msra.mxu0 0.0
    %1833 = vmatprep.subr.mxu0 0.0
    %1834 = vmatpush1.msra.mxu0 0.0
    %1835 = vmatprep.subr.mxu0 0.0
    %1836 = vmatpush1.msra.mxu0 0.0
    %1837 = vmatprep.subr.mxu0 0.0
    %1838 = vmatpush1.msra.mxu0 0.0
    %1839 = vmatprep.subr.mxu0 0.0
    %1840 = vmatpush1.msra.mxu0 0.0
    %1841 = vmatprep.subr.mxu0 0.0
    %1842 = vmatpush1.msra.mxu0 0.0
    %1843 = vmatprep.subr.mxu0 0.0
    %1844 = vmatpush1.msra.mxu0 0.0
    %1845 = vmatprep.subr.mxu0 0.0
    %1846 = vmatpush1.msra.mxu0 0.0
    %1847 = vmatprep.subr.mxu0 0.0
    %1848 = vmatpush1.msra.mxu0 0.0
    %1849 = vmatprep.mubr.f32.mxu0 0.0
    %1850 = vmatmul.mubr.f32.gmra.mrb[0].mxu0 %v1783
    %v1851 = vpop.f32.mrb[0].mxu0
    %v1852 = vadd.f32 %v1779, %v1851
    %v1853 = vpop.f32.mrb[0].mxu0
    %1854 = vdwg.mxu0
    %1855 = vrot.lane.b32.xlu0 %v241, 48
    %v1856 = vpop.permute.xlu0 %1855
    %v1859 = vsel %vm251, %v957, 0
    %1861 = vmatprep.subr.mxu0 0.0
    %1862 = vmatpush1.msra.mxu0 %v1856
    %1863 = vmatprep.subr.mxu0 0.0
    %1864 = vmatpush1.msra.mxu0 0.0
    %1865 = vmatprep.subr.mxu0 0.0
    %1866 = vmatpush1.msra.mxu0 0.0
    %1867 = vmatprep.subr.mxu0 0.0
    %1868 = vmatpush1.msra.mxu0 0.0
    %1869 = vmatprep.subr.mxu0 0.0
    %1870 = vmatpush1.msra.mxu0 0.0
    %1871 = vmatprep.subr.mxu0 0.0
    %1872 = vmatpush1.msra.mxu0 0.0
    %1873 = vmatprep.subr.mxu0 0.0
    %1874 = vmatpush1.msra.mxu0 0.0
    %1875 = vmatprep.subr.mxu0 0.0
    %1876 = vmatpush1.msra.mxu0 0.0
    %1877 = vmatprep.subr.mxu0 0.0
    %1878 = vmatpush1.msra.mxu0 0.0
    %1879 = vmatprep.subr.mxu0 0.0
    %1880 = vmatpush1.msra.mxu0 0.0
    %1881 = vmatprep.subr.mxu0 0.0
    %1882 = vmatpush1.msra.mxu0 0.0
    %1883 = vmatprep.subr.mxu0 0.0
    %1884 = vmatpush1.msra.mxu0 0.0
    %1885 = vmatprep.subr.mxu0 0.0
    %1886 = vmatpush1.msra.mxu0 0.0
    %1887 = vmatprep.subr.mxu0 0.0
    %1888 = vmatpush1.msra.mxu0 0.0
    %1889 = vmatprep.subr.mxu0 0.0
    %1890 = vmatpush1.msra.mxu0 0.0
    %1891 = vmatprep.subr.mxu0 0.0
    %1892 = vmatpush1.msra.mxu0 0.0
    %1893 = vmatprep.subr.mxu0 0.0
    %1894 = vmatpush1.msra.mxu0 0.0
    %1895 = vmatprep.subr.mxu0 0.0
    %1896 = vmatpush1.msra.mxu0 0.0
    %1897 = vmatprep.subr.mxu0 0.0
    %1898 = vmatpush1.msra.mxu0 0.0
    %1899 = vmatprep.subr.mxu0 0.0
    %1900 = vmatpush1.msra.mxu0 0.0
    %1901 = vmatprep.subr.mxu0 0.0
    %1902 = vmatpush1.msra.mxu0 0.0
    %1903 = vmatprep.subr.mxu0 0.0
    %1904 = vmatpush1.msra.mxu0 0.0
    %1905 = vmatprep.subr.mxu0 0.0
    %1906 = vmatpush1.msra.mxu0 0.0
    %1907 = vmatprep.subr.mxu0 0.0
    %1908 = vmatpush1.msra.mxu0 0.0
    %1909 = vmatprep.subr.mxu0 0.0
    %1910 = vmatpush1.msra.mxu0 0.0
    %1911 = vmatprep.subr.mxu0 0.0
    %1912 = vmatpush1.msra.mxu0 0.0
    %1913 = vmatprep.subr.mxu0 0.0
    %1914 = vmatpush1.msra.mxu0 0.0
    %1915 = vmatprep.subr.mxu0 0.0
    %1916 = vmatpush1.msra.mxu0 0.0
    %1917 = vmatprep.subr.mxu0 0.0
    %1918 = vmatpush1.msra.mxu0 0.0
    %1919 = vmatprep.subr.mxu0 0.0
    %1920 = vmatpush1.msra.mxu0 0.0
    %1921 = vmatprep.subr.mxu0 0.0
    %1922 = vmatpush1.msra.mxu0 0.0
    %1923 = vmatprep.subr.mxu0 0.0
    %1924 = vmatpush1.msra.mxu0 0.0
    %1925 = vmatprep.mubr.f32.mxu0 0.0
    %1926 = vmatmul.mubr.f32.gmra.mrb[0].mxu0 %v1859
    %v1927 = vpop.f32.mrb[0].mxu0
    %v1928 = vadd.f32 0.0, %v1927
    %v1929 = vpop.f32.mrb[0].mxu0
    %1930 = vdwg.mxu0
    %v1932 = vsel %vm251, %v1928, 0
    %1934 = vmatprep.subr.mxu0 0.0
    %1935 = vmatpush1.msra.mxu0 %v246
    %1936 = vmatprep.subr.mxu0 0.0
    %1937 = vmatpush1.msra.mxu0 0.0
    %1938 = vmatprep.subr.mxu0 0.0
    %1939 = vmatpush1.msra.mxu0 0.0
    %1940 = vmatprep.subr.mxu0 0.0
    %1941 = vmatpush1.msra.mxu0 0.0
    %1942 = vmatprep.subr.mxu0 0.0
    %1943 = vmatpush1.msra.mxu0 0.0
    %1944 = vmatprep.subr.mxu0 0.0
    %1945 = vmatpush1.msra.mxu0 0.0
    %1946 = vmatprep.subr.mxu0 0.0
    %1947 = vmatpush1.msra.mxu0 0.0
    %1948 = vmatprep.subr.mxu0 0.0
    %1949 = vmatpush1.msra.mxu0 0.0
    %1950 = vmatprep.subr.mxu0 0.0
    %1951 = vmatpush1.msra.mxu0 0.0
    %1952 = vmatprep.subr.mxu0 0.0
    %1953 = vmatpush1.msra.mxu0 0.0
    %1954 = vmatprep.subr.mxu0 0.0
    %1955 = vmatpush1.msra.mxu0 0.0
    %1956 = vmatprep.subr.mxu0 0.0
    %1957 = vmatpush1.msra.mxu0 0.0
    %1958 = vmatprep.subr.mxu0 0.0
    %1959 = vmatpush1.msra.mxu0 0.0
    %1960 = vmatprep.subr.mxu0 0.0
    %1961 = vmatpush1.msra.mxu0 0.0
    %1962 = vmatprep.subr.mxu0 0.0
    %1963 = vmatpush1.msra.mxu0 0.0
    %1964 = vmatprep.subr.mxu0 0.0
    %1965 = vmatpush1.msra.mxu0 0.0
    %1966 = vmatprep.subr.mxu0 0.0
    %1967 = vmatpush1.msra.mxu0 0.0
    %1968 = vmatprep.subr.mxu0 0.0
    %1969 = vmatpush1.msra.mxu0 0.0
    %1970 = vmatprep.subr.mxu0 0.0
    %1971 = vmatpush1.msra.mxu0 0.0
    %1972 = vmatprep.subr.mxu0 0.0
    %1973 = vmatpush1.msra.mxu0 0.0
    %1974 = vmatprep.subr.mxu0 0.0
    %1975 = vmatpush1.msra.mxu0 0.0
    %1976 = vmatprep.subr.mxu0 0.0
    %1977 = vmatpush1.msra.mxu0 0.0
    %1978 = vmatprep.subr.mxu0 0.0
    %1979 = vmatpush1.msra.mxu0 0.0
    %1980 = vmatprep.subr.mxu0 0.0
    %1981 = vmatpush1.msra.mxu0 0.0
    %1982 = vmatprep.subr.mxu0 0.0
    %1983 = vmatpush1.msra.mxu0 0.0
    %1984 = vmatprep.subr.mxu0 0.0
    %1985 = vmatpush1.msra.mxu0 0.0
    %1986 = vmatprep.subr.mxu0 0.0
    %1987 = vmatpush1.msra.mxu0 0.0
    %1988 = vmatprep.subr.mxu0 0.0
    %1989 = vmatpush1.msra.mxu0 0.0
    %1990 = vmatprep.subr.mxu0 0.0
    %1991 = vmatpush1.msra.mxu0 0.0
    %1992 = vmatprep.subr.mxu0 0.0
    %1993 = vmatpush1.msra.mxu0 0.0
    %1994 = vmatprep.subr.mxu0 0.0
    %1995 = vmatpush1.msra.mxu0 0.0
    %1996 = vmatprep.subr.mxu0 0.0
    %1997 = vmatpush1.msra.mxu0 0.0
    %1998 = vmatprep.mubr.f32.mxu0 0.0
    %1999 = vmatmul.mubr.f32.gmra.mrb[0].mxu0 %v1932
    %v2000 = vpop.f32.mrb[0].mxu0
    %v2001 = vadd.f32 0.0, %v2000
    %v2002 = vpop.f32.mrb[0].mxu0
    %2003 = vdwg.mxu0
    %v2004 = vadd.f32 %v1852, %v2001
    %2005 = vrot.lane.b32.xlu0 %v241, 40
    %v2006 = vpop.permute.xlu0 %2005
    %v2009 = vsel %vm251, %v958, 0
    %2011 = vmatprep.subr.mxu0 0.0
    %2012 = vmatpush1.msra.mxu0 %v2006
    %2013 = vmatprep.subr.mxu0 0.0
    %2014 = vmatpush1.msra.mxu0 0.0
    %2015 = vmatprep.subr.mxu0 0.0
    %2016 = vmatpush1.msra.mxu0 0.0
    %2017 = vmatprep.subr.mxu0 0.0
    %2018 = vmatpush1.msra.mxu0 0.0
    %2019 = vmatprep.subr.mxu0 0.0
    %2020 = vmatpush1.msra.mxu0 0.0
    %2021 = vmatprep.subr.mxu0 0.0
    %2022 = vmatpush1.msra.mxu0 0.0
    %2023 = vmatprep.subr.mxu0 0.0
    %2024 = vmatpush1.msra.mxu0 0.0
    %2025 = vmatprep.subr.mxu0 0.0
    %2026 = vmatpush1.msra.mxu0 0.0
    %2027 = vmatprep.subr.mxu0 0.0
    %2028 = vmatpush1.msra.mxu0 0.0
    %2029 = vmatprep.subr.mxu0 0.0
    %2030 = vmatpush1.msra.mxu0 0.0
    %2031 = vmatprep.subr.mxu0 0.0
    %2032 = vmatpush1.msra.mxu0 0.0
    %2033 = vmatprep.subr.mxu0 0.0
    %2034 = vmatpush1.msra.mxu0 0.0
    %2035 = vmatprep.subr.mxu0 0.0
    %2036 = vmatpush1.msra.mxu0 0.0
    %2037 = vmatprep.subr.mxu0 0.0
    %2038 = vmatpush1.msra.mxu0 0.0
    %2039 = vmatprep.subr.mxu0 0.0
    %2040 = vmatpush1.msra.mxu0 0.0
    %2041 = vmatprep.subr.mxu0 0.0
    %2042 = vmatpush1.msra.mxu0 0.0
    %2043 = vmatprep.subr.mxu0 0.0
    %2044 = vmatpush1.msra.mxu0 0.0
    %2045 = vmatprep.subr.mxu0 0.0
    %2046 = vmatpush1.msra.mxu0 0.0
    %2047 = vmatprep.subr.mxu0 0.0
    %2048 = vmatpush1.msra.mxu0 0.0
    %2049 = vmatprep.subr.mxu0 0.0
    %2050 = vmatpush1.msra.mxu0 0.0
    %2051 = vmatprep.subr.mxu0 0.0
    %2052 = vmatpush1.msra.mxu0 0.0
    %2053 = vmatprep.subr.mxu0 0.0
    %2054 = vmatpush1.msra.mxu0 0.0
    %2055 = vmatprep.subr.mxu0 0.0
    %2056 = vmatpush1.msra.mxu0 0.0
    %2057 = vmatprep.subr.mxu0 0.0
    %2058 = vmatpush1.msra.mxu0 0.0
    %2059 = vmatprep.subr.mxu0 0.0
    %2060 = vmatpush1.msra.mxu0 0.0
    %2061 = vmatprep.subr.mxu0 0.0
    %2062 = vmatpush1.msra.mxu0 0.0
    %2063 = vmatprep.subr.mxu0 0.0
    %2064 = vmatpush1.msra.mxu0 0.0
    %2065 = vmatprep.subr.mxu0 0.0
    %2066 = vmatpush1.msra.mxu0 0.0
    %2067 = vmatprep.subr.mxu0 0.0
    %2068 = vmatpush1.msra.mxu0 0.0
    %2069 = vmatprep.subr.mxu0 0.0
    %2070 = vmatpush1.msra.mxu0 0.0
    %2071 = vmatprep.subr.mxu0 0.0
    %2072 = vmatpush1.msra.mxu0 0.0
    %2073 = vmatprep.subr.mxu0 0.0
    %2074 = vmatpush1.msra.mxu0 0.0
    %2075 = vmatprep.mubr.f32.mxu0 0.0
    %2076 = vmatmul.mubr.f32.gmra.mrb[0].mxu0 %v2009
    %v2077 = vpop.f32.mrb[0].mxu0
    %v2078 = vadd.f32 0.0, %v2077
    %v2079 = vpop.f32.mrb[0].mxu0
    %2080 = vdwg.mxu0
    %v2082 = vsel %vm251, %v2078, 0
    %2084 = vmatprep.subr.mxu0 0.0
    %2085 = vmatpush1.msra.mxu0 %v247
    %2086 = vmatprep.subr.mxu0 0.0
    %2087 = vmatpush1.msra.mxu0 0.0
    %2088 = vmatprep.subr.mxu0 0.0
    %2089 = vmatpush1.msra.mxu0 0.0
    %2090 = vmatprep.subr.mxu0 0.0
    %2091 = vmatpush1.msra.mxu0 0.0
    %2092 = vmatprep.subr.mxu0 0.0
    %2093 = vmatpush1.msra.mxu0 0.0
    %2094 = vmatprep.subr.mxu0 0.0
    %2095 = vmatpush1.msra.mxu0 0.0
    %2096 = vmatprep.subr.mxu0 0.0
    %2097 = vmatpush1.msra.mxu0 0.0
    %2098 = vmatprep.subr.mxu0 0.0
    %2099 = vmatpush1.msra.mxu0 0.0
    %2100 = vmatprep.subr.mxu0 0.0
    %2101 = vmatpush1.msra.mxu0 0.0
    %2102 = vmatprep.subr.mxu0 0.0
    %2103 = vmatpush1.msra.mxu0 0.0
    %2104 = vmatprep.subr.mxu0 0.0
    %2105 = vmatpush1.msra.mxu0 0.0
    %2106 = vmatprep.subr.mxu0 0.0
    %2107 = vmatpush1.msra.mxu0 0.0
    %2108 = vmatprep.subr.mxu0 0.0
    %2109 = vmatpush1.msra.mxu0 0.0
    %2110 = vmatprep.subr.mxu0 0.0
    %2111 = vmatpush1.msra.mxu0 0.0
    %2112 = vmatprep.subr.mxu0 0.0
    %2113 = vmatpush1.msra.mxu0 0.0
    %2114 = vmatprep.subr.mxu0 0.0
    %2115 = vmatpush1.msra.mxu0 0.0
    %2116 = vmatprep.subr.mxu0 0.0
    %2117 = vmatpush1.msra.mxu0 0.0
    %2118 = vmatprep.subr.mxu0 0.0
    %2119 = vmatpush1.msra.mxu0 0.0
    %2120 = vmatprep.subr.mxu0 0.0
    %2121 = vmatpush1.msra.mxu0 0.0
    %2122 = vmatprep.subr.mxu0 0.0
    %2123 = vmatpush1.msra.mxu0 0.0
    %2124 = vmatprep.subr.mxu0 0.0
    %2125 = vmatpush1.msra.mxu0 0.0
    %2126 = vmatprep.subr.mxu0 0.0
    %2127 = vmatpush1.msra.mxu0 0.0
    %2128 = vmatprep.subr.mxu0 0.0
    %2129 = vmatpush1.msra.mxu0 0.0
    %2130 = vmatprep.subr.mxu0 0.0
    %2131 = vmatpush1.msra.mxu0 0.0
    %2132 = vmatprep.subr.mxu0 0.0
    %2133 = vmatpush1.msra.mxu0 0.0
    %2134 = vmatprep.subr.mxu0 0.0
    %2135 = vmatpush1.msra.mxu0 0.0
    %2136 = vmatprep.subr.mxu0 0.0
    %2137 = vmatpush1.msra.mxu0 0.0
    %2138 = vmatprep.subr.mxu0 0.0
    %2139 = vmatpush1.msra.mxu0 0.0
    %2140 = vmatprep.subr.mxu0 0.0
    %2141 = vmatpush1.msra.mxu0 0.0
    %2142 = vmatprep.subr.mxu0 0.0
    %2143 = vmatpush1.msra.mxu0 0.0
    %2144 = vmatprep.subr.mxu0 0.0
    %2145 = vmatpush1.msra.mxu0 0.0
    %2146 = vmatprep.subr.mxu0 0.0
    %2147 = vmatpush1.msra.mxu0 0.0
    %2148 = vmatprep.mubr.f32.mxu0 0.0
    %2149 = vmatmul.mubr.f32.gmra.mrb[0].mxu0 %v2082
    %v2150 = vpop.f32.mrb[0].mxu0
    %v2151 = vadd.f32 0.0, %v2150
    %v2152 = vpop.f32.mrb[0].mxu0
    %2153 = vdwg.mxu0
    %v2154 = vadd.f32 %v2004, %v2151
    %v2155 = vlaneseq
    %v2156 = vshrl.u32 %v2155, 7
    %v2157 = vsub.s32 0, %v2156
    %v2158 = vrot.slane %v146, %v2157
    %v2159 = vadd.f32 %v1556, %v2158
    %v2160 = vadd.f32 %v2154, %v2158
    %v2161 = vadd.f32 %v2159, %v148
    %v2162 = vadd.f32 %v2160, %v150
    %v2163 = vsel %vm162, %v2161, 0.0
    %2164 = vadd.xlane.f32.xlu0 %v2163
    %v2165 = vpop.xlane.xlu0 %2164
    %v2166 = vsel %vm162, %v2162, 0.0
    %2167 = vadd.xlane.f32.xlu0 %v2166
    %v2168 = vpop.xlane.xlu0 %2167
    %v2169 = vrcp.pop 32.0
    %v2170 = vmul.f32 %v2165, %v2169
    %v2171 = vmul.f32 %v2168, %v2169
    %v2172 = vsub.f32 %v2161, %v2170
    %v2173 = vsub.f32 %v2162, %v2171
    %v2174 = vmul.f32 %v2172, %v2172
    %v2175 = vmul.f32 %v2173, %v2173
    %v2176 = vsel %vm162, %v2174, 0.0
    %2177 = vadd.xlane.f32.xlu0 %v2176
    %v2178 = vpop.xlane.xlu0 %2177
    %v2179 = vsel %vm162, %v2175, 0.0
    %2180 = vadd.xlane.f32.xlu0 %v2179
    %v2181 = vpop.xlane.xlu0 %2180
    %v2182 = vmul.f32 %v2178, %v2169
    %v2183 = vmul.f32 %v2181, %v2169
    %v2184 = vadd.f32 %v2182, 1e-05
    %v2185 = vadd.f32 %v2183, 1e-05
    %v2186 = vrsqrt.pop %v2184
    %v2187 = vrsqrt.pop %v2185
    %v2188 = vmul.f32 %v2172, %v2186
    %v2189 = vmul.f32 %v2173, %v2187
    %v2190 = vlaneseq
    %v2191 = vshrl.u32 %v2190, 7
    %v2192 = vsub.s32 1, %v2191
    %v2193 = vrot.slane %v146, %v2192
    %v2194 = vmul.f32 %v2188, %v2193
    %v2195 = vmul.f32 %v2189, %v2193
    %v2196 = vlaneseq
    %v2197 = vshrl.u32 %v2196, 7
    %v2198 = vsub.s32 2, %v2197
    %v2199 = vrot.slane %v146, %v2198
    %v2200 = vadd.f32 %v2194, %v2199
    %v2201 = vadd.f32 %v2195, %v2199
    %v2202 = vld [vmem:[#allocation5] ss:$2 sm:$0xff]
    %s2203 = scalar_lea.vmem [#allocation5], 16
    %v2204 = vld [vmem:[%s2203] ss:$2 sm:$0xf]
    %s2205 = scalar_lea.vmem [#allocation5], 1
    %v2206 = vld [vmem:[%s2205] ss:$2 sm:$0xff]
    %s2207 = scalar_lea.vmem [#allocation5], 17
    %v2208 = vld [vmem:[%s2207] ss:$2 sm:$0xf]
    %vm2211 = vcmask 1043456
    %v2212 = vrot.slane %v2206, 4
    %v2213 = vrot.slane %v2208, 4
    %v2214 = vsel %vm2211, %v2212, %v2213
    %v2216 = vsel %vm2211, %v2204, %v2212
    %v2217 = vld [vmem:[#allocation8] sm:$0xff]
    %v2218 = vld [vmem:[#allocation8 + $0x8] sm:$0xff]
    %v2219 = vld [vmem:[#allocation8 + $0x10] sm:$0xff]
    %v2220 = vld [vmem:[#allocation8 + $0x18] sm:$0xff]
    %v2221 = vlaneseq
    %v2222 = vshrl.u32 %v2221, 7
    %v2223 = vsub.s32 3, %v2222
    %v2224 = vrot.slane %v146, %v2223
    %v2226 = vsel %vm162, %v2200, 0
    %v2229 = vsel %vm162, %v2201, 0
    %2231 = vmatprep.subr.mxu0 0.0
    %2232 = vmatpush1.msra.mxu0 %v2217
    %2233 = vmatprep.subr.mxu0 0.0
    %2234 = vmatpush1.msra.mxu0 %v2218
    %2235 = vmatprep.subr.mxu0 0.0
    %2236 = vmatpush1.msra.mxu0 %v2219
    %2237 = vmatprep.subr.mxu0 0.0
    %2238 = vmatpush1.msra.mxu0 %v2220
    %2239 = vmatprep.subr.mxu0 0.0
    %2240 = vmatpush1.msra.mxu0 0.0
    %2241 = vmatprep.subr.mxu0 0.0
    %2242 = vmatpush1.msra.mxu0 0.0
    %2243 = vmatprep.subr.mxu0 0.0
    %2244 = vmatpush1.msra.mxu0 0.0
    %2245 = vmatprep.subr.mxu0 0.0
    %2246 = vmatpush1.msra.mxu0 0.0
    %2247 = vmatprep.subr.mxu0 0.0
    %2248 = vmatpush1.msra.mxu0 0.0
    %2249 = vmatprep.subr.mxu0 0.0
    %2250 = vmatpush1.msra.mxu0 0.0
    %2251 = vmatprep.subr.mxu0 0.0
    %2252 = vmatpush1.msra.mxu0 0.0
    %2253 = vmatprep.subr.mxu0 0.0
    %2254 = vmatpush1.msra.mxu0 0.0
    %2255 = vmatprep.subr.mxu0 0.0
    %2256 = vmatpush1.msra.mxu0 0.0
    %2257 = vmatprep.subr.mxu0 0.0
    %2258 = vmatpush1.msra.mxu0 0.0
    %2259 = vmatprep.subr.mxu0 0.0
    %2260 = vmatpush1.msra.mxu0 0.0
    %2261 = vmatprep.subr.mxu0 0.0
    %2262 = vmatpush1.msra.mxu0 0.0
    %2263 = vmatprep.subr.mxu0 0.0
    %2264 = vmatpush1.msra.mxu0 0.0
    %2265 = vmatprep.subr.mxu0 0.0
    %2266 = vmatpush1.msra.mxu0 0.0
    %2267 = vmatprep.subr.mxu0 0.0
    %2268 = vmatpush1.msra.mxu0 0.0
    %2269 = vmatprep.subr.mxu0 0.0
    %2270 = vmatpush1.msra.mxu0 0.0
    %2271 = vmatprep.subr.mxu0 0.0
    %2272 = vmatpush1.msra.mxu0 0.0
    %2273 = vmatprep.subr.mxu0 0.0
    %2274 = vmatpush1.msra.mxu0 0.0
    %2275 = vmatprep.subr.mxu0 0.0
    %2276 = vmatpush1.msra.mxu0 0.0
    %2277 = vmatprep.subr.mxu0 0.0
    %2278 = vmatpush1.msra.mxu0 0.0
    %2279 = vmatprep.subr.mxu0 0.0
    %2280 = vmatpush1.msra.mxu0 0.0
    %2281 = vmatprep.subr.mxu0 0.0
    %2282 = vmatpush1.msra.mxu0 0.0
    %2283 = vmatprep.subr.mxu0 0.0
    %2284 = vmatpush1.msra.mxu0 0.0
    %2285 = vmatprep.subr.mxu0 0.0
    %2286 = vmatpush1.msra.mxu0 0.0
    %2287 = vmatprep.subr.mxu0 0.0
    %2288 = vmatpush1.msra.mxu0 0.0
    %2289 = vmatprep.subr.mxu0 0.0
    %2290 = vmatpush1.msra.mxu0 0.0
    %2291 = vmatprep.subr.mxu0 0.0
    %2292 = vmatpush1.msra.mxu0 0.0
    %2293 = vmatprep.subr.mxu0 0.0
    %2294 = vmatpush1.msra.mxu0 0.0
    %2295 = vmatprep.mubr.f32.mxu0 0.0
    %2296 = vmatmul.mubr.f32.gmra.mrb[0].mxu0 %v2226
    %v2297 = vpop.f32.mrb[0].mxu0
    %v2298 = vadd.f32 %v2224, %v2297
    %v2299 = vpop.f32.mrb[0].mxu0
    %2300 = vmatprep.mubr.f32.mxu0 0.0
    %2301 = vmatmul.mubr.f32.gmra.mrb[0].mxu0 %v2229
    %v2302 = vpop.f32.mrb[0].mxu0
    %v2303 = vadd.f32 %v2224, %v2302
    %v2304 = vpop.f32.mrb[0].mxu0
    %2305 = vdwg.mxu0
    %v2306 = vld [vmem:[%s7] sm:$0xff]
    %v2307 = vld [vmem:[%s7 + $0x8] sm:$0xff]
    %v2308 = vld [vmem:[%s7 + $0x10] sm:$0xff]
    %v2309 = vld [vmem:[%s7 + $0x18] sm:$0xff]
    %v2310 = vld [vmem:[%s7 + $0x20] sm:$0xff]
    %v2311 = vld [vmem:[%s7 + $0x28] sm:$0xff]
    %v2312 = vld [vmem:[%s8] sm:$0x1]
    %v2314 = vlaneseq
    %v2315 = vshrl.u32 %v2314, 7
    %v2316 = vsub.s32 0, %v2315
    %v2317 = vrot.slane %v2312, %v2316
    %vm2319 = vcmask 392192
    %v2321 = vsel %vm2319, %v2202, 0
    %v2324 = vsel %vm2319, %v2216, 0
    %v2326 = vsel %vm2319, %v2214, 0
    %2328 = vmatprep.subr.mxu0 0.0
    %2329 = vmatpush1.msra.mxu0 %v2306
    %2330 = vmatprep.subr.mxu0 0.0
    %2331 = vmatpush1.msra.mxu0 %v2307
    %2332 = vmatprep.subr.mxu0 0.0
    %2333 = vmatpush1.msra.mxu0 %v2308
    %2334 = vmatprep.subr.mxu0 0.0
    %2335 = vmatpush1.msra.mxu0 %v2309
    %2336 = vmatprep.subr.mxu0 0.0
    %2337 = vmatpush1.msra.mxu0 %v2310
    %2338 = vmatprep.subr.mxu0 0.0
    %2339 = vmatpush1.msra.mxu0 %v2311
    %2340 = vmatprep.subr.mxu0 0.0
    %2341 = vmatpush1.msra.mxu0 0.0
    %2342 = vmatprep.subr.mxu0 0.0
    %2343 = vmatpush1.msra.mxu0 0.0
    %2344 = vmatprep.subr.mxu0 0.0
    %2345 = vmatpush1.msra.mxu0 0.0
    %2346 = vmatprep.subr.mxu0 0.0
    %2347 = vmatpush1.msra.mxu0 0.0
    %2348 = vmatprep.subr.mxu0 0.0
    %2349 = vmatpush1.msra.mxu0 0.0
    %2350 = vmatprep.subr.mxu0 0.0
    %2351 = vmatpush1.msra.mxu0 0.0
    %2352 = vmatprep.subr.mxu0 0.0
    %2353 = vmatpush1.msra.mxu0 0.0
    %2354 = vmatprep.subr.mxu0 0.0
    %2355 = vmatpush1.msra.mxu0 0.0
    %2356 = vmatprep.subr.mxu0 0.0
    %2357 = vmatpush1.msra.mxu0 0.0
    %2358 = vmatprep.subr.mxu0 0.0
    %2359 = vmatpush1.msra.mxu0 0.0
    %2360 = vmatprep.subr.mxu0 0.0
    %2361 = vmatpush1.msra.mxu0 0.0
    %2362 = vmatprep.subr.mxu0 0.0
    %2363 = vmatpush1.msra.mxu0 0.0
    %2364 = vmatprep.subr.mxu0 0.0
    %2365 = vmatpush1.msra.mxu0 0.0
    %2366 = vmatprep.subr.mxu0 0.0
    %2367 = vmatpush1.msra.mxu0 0.0
    %2368 = vmatprep.subr.mxu0 0.0
    %2369 = vmatpush1.msra.mxu0 0.0
    %2370 = vmatprep.subr.mxu0 0.0
    %2371 = vmatpush1.msra.mxu0 0.0
    %2372 = vmatprep.subr.mxu0 0.0
    %2373 = vmatpush1.msra.mxu0 0.0
    %2374 = vmatprep.subr.mxu0 0.0
    %2375 = vmatpush1.msra.mxu0 0.0
    %2376 = vmatprep.subr.mxu0 0.0
    %2377 = vmatpush1.msra.mxu0 0.0
    %2378 = vmatprep.subr.mxu0 0.0
    %2379 = vmatpush1.msra.mxu0 0.0
    %2380 = vmatprep.subr.mxu0 0.0
    %2381 = vmatpush1.msra.mxu0 0.0
    %2382 = vmatprep.subr.mxu0 0.0
    %2383 = vmatpush1.msra.mxu0 0.0
    %2384 = vmatprep.subr.mxu0 0.0
    %2385 = vmatpush1.msra.mxu0 0.0
    %2386 = vmatprep.subr.mxu0 0.0
    %2387 = vmatpush1.msra.mxu0 0.0
    %2388 = vmatprep.subr.mxu0 0.0
    %2389 = vmatpush1.msra.mxu0 0.0
    %2390 = vmatprep.subr.mxu0 0.0
    %2391 = vmatpush1.msra.mxu0 0.0
    %2392 = vmatprep.mubr.f32.mxu0 0.0
    %2393 = vmatmul.mubr.f32.gmra.mrb[0].mxu0 %v2321
    %v2394 = vpop.f32.mrb[0].mxu0
    %v2395 = vadd.f32 %v2317, %v2394
    %v2396 = vpop.f32.mrb[0].mxu0
    %2397 = vmatprep.mubr.f32.mxu0 0.0
    %2398 = vmatmul.mubr.f32.gmra.mrb[0].mxu0 %v2324
    %v2399 = vpop.f32.mrb[0].mxu0
    %v2400 = vadd.f32 %v2317, %v2399
    %v2401 = vpop.f32.mrb[0].mxu0
    %2402 = vmatprep.mubr.f32.mxu0 0.0
    %2403 = vmatmul.mubr.f32.gmra.mrb[0].mxu0 %v2326
    %v2404 = vpop.f32.mrb[0].mxu0
    %v2405 = vadd.f32 %v2317, %v2404
    %v2406 = vpop.f32.mrb[0].mxu0
    %2407 = vdwg.mxu0
    %v2408 = vld [vmem:[#allocation10] sm:$0xff]
    %v2409 = vld [vmem:[#allocation10 + $0x8] sm:$0xff]
    %v2410 = vld [vmem:[#allocation10 + $0x10] sm:$0xff]
    %v2411 = vld [vmem:[#allocation10 + $0x18] sm:$0xff]
    %v2413 = vsel %vm251, %v2298, 0
    %v2416 = vsel %vm251, %v2395, 0
    %v2419 = vsel %vm251, %v2400, 0
    %2421 = vmatprep.subr.mxu0 0.0
    %2422 = vmatpush1.xpose.msra.mxu0 %v2416
    %2423 = vmatprep.subr.mxu0 0.0
    %2424 = vmatpush1.xpose.msra.mxu0 %v2419
    %2425 = vmatprep.subr.mxu0 0.0
    %2426 = vmatpush1.xpose.msra.mxu0 0.0
    %2427 = vmatprep.subr.mxu0 0.0
    %2428 = vmatpush1.xpose.msra.mxu0 0.0
    %2429 = vmatprep.subr.mxu0 0.0
    %2430 = vmatpush1.xpose.msra.mxu0 0.0
    %2431 = vmatprep.subr.mxu0 0.0
    %2432 = vmatpush1.xpose.msra.mxu0 0.0
    %2433 = vmatprep.subr.mxu0 0.0
    %2434 = vmatpush1.xpose.msra.mxu0 0.0
    %2435 = vmatprep.subr.mxu0 0.0
    %2436 = vmatpush1.xpose.msra.mxu0 0.0
    %2437 = vmatprep.subr.mxu0 0.0
    %2438 = vmatpush1.xpose.msra.mxu0 0.0
    %2439 = vmatprep.subr.mxu0 0.0
    %2440 = vmatpush1.xpose.msra.mxu0 0.0
    %2441 = vmatprep.subr.mxu0 0.0
    %2442 = vmatpush1.xpose.msra.mxu0 0.0
    %2443 = vmatprep.subr.mxu0 0.0
    %2444 = vmatpush1.xpose.msra.mxu0 0.0
    %2445 = vmatprep.subr.mxu0 0.0
    %2446 = vmatpush1.xpose.msra.mxu0 0.0
    %2447 = vmatprep.subr.mxu0 0.0
    %2448 = vmatpush1.xpose.msra.mxu0 0.0
    %2449 = vmatprep.subr.mxu0 0.0
    %2450 = vmatpush1.xpose.msra.mxu0 0.0
    %2451 = vmatprep.subr.mxu0 0.0
    %2452 = vmatpush1.xpose.msra.mxu0 0.0
    %2453 = vmatprep.subr.mxu0 0.0
    %2454 = vmatpush1.xpose.msra.mxu0 0.0
    %2455 = vmatprep.subr.mxu0 0.0
    %2456 = vmatpush1.xpose.msra.mxu0 0.0
    %2457 = vmatprep.subr.mxu0 0.0
    %2458 = vmatpush1.xpose.msra.mxu0 0.0
    %2459 = vmatprep.subr.mxu0 0.0
    %2460 = vmatpush1.xpose.msra.mxu0 0.0
    %2461 = vmatprep.subr.mxu0 0.0
    %2462 = vmatpush1.xpose.msra.mxu0 0.0
    %2463 = vmatprep.subr.mxu0 0.0
    %2464 = vmatpush1.xpose.msra.mxu0 0.0
    %2465 = vmatprep.subr.mxu0 0.0
    %2466 = vmatpush1.xpose.msra.mxu0 0.0
    %2467 = vmatprep.subr.mxu0 0.0
    %2468 = vmatpush1.xpose.msra.mxu0 0.0
    %2469 = vmatprep.subr.mxu0 0.0
    %2470 = vmatpush1.xpose.msra.mxu0 0.0
    %2471 = vmatprep.subr.mxu0 0.0
    %2472 = vmatpush1.xpose.msra.mxu0 0.0
    %2473 = vmatprep.subr.mxu0 0.0
    %2474 = vmatpush1.xpose.msra.mxu0 0.0
    %2475 = vmatprep.subr.mxu0 0.0
    %2476 = vmatpush1.xpose.msra.mxu0 0.0
    %2477 = vmatprep.subr.mxu0 0.0
    %2478 = vmatpush1.xpose.msra.mxu0 0.0
    %2479 = vmatprep.subr.mxu0 0.0
    %2480 = vmatpush1.xpose.msra.mxu0 0.0
    %2481 = vmatprep.subr.mxu0 0.0
    %2482 = vmatpush1.xpose.msra.mxu0 0.0
    %2483 = vmatprep.subr.mxu0 0.0
    %2484 = vmatpush1.xpose.msra.mxu0 0.0
    %2485 = vmatprep.mubr.f32.mxu0 0.0
    %2486 = vmatmul.mubr.f32.gmra.mrb[0].mxu0 %v2413
    %v2487 = vpop.f32.mrb[0].mxu0
    %v2488 = vadd.f32 0.0, %v2487
    %v2489 = vpop.f32.mrb[0].mxu0
    %2490 = vdwg.mxu0
    %2491 = vrot.lane.b32.xlu0 %v2298, 120
    %v2492 = vpop.permute.xlu0 %2491
    %2493 = vrot.lane.b32.xlu0 %v2395, 120
    %v2494 = vpop.permute.xlu0 %2493
    %2495 = vrot.lane.b32.xlu0 %v2400, 120
    %v2496 = vpop.permute.xlu0 %2495
    %v2497 = vsel %vm251, %v2492, 0
    %v2499 = vsel %vm251, %v2494, 0
    %v2501 = vsel %vm251, %v2496, 0
    %2503 = vmatprep.subr.mxu0 0.0
    %2504 = vmatpush1.xpose.msra.mxu0 %v2499
    %2505 = vmatprep.subr.mxu0 0.0
    %2506 = vmatpush1.xpose.msra.mxu0 %v2501
    %2507 = vmatprep.subr.mxu0 0.0
    %2508 = vmatpush1.xpose.msra.mxu0 0.0
    %2509 = vmatprep.subr.mxu0 0.0
    %2510 = vmatpush1.xpose.msra.mxu0 0.0
    %2511 = vmatprep.subr.mxu0 0.0
    %2512 = vmatpush1.xpose.msra.mxu0 0.0
    %2513 = vmatprep.subr.mxu0 0.0
    %2514 = vmatpush1.xpose.msra.mxu0 0.0
    %2515 = vmatprep.subr.mxu0 0.0
    %2516 = vmatpush1.xpose.msra.mxu0 0.0
    %2517 = vmatprep.subr.mxu0 0.0
    %2518 = vmatpush1.xpose.msra.mxu0 0.0
    %2519 = vmatprep.subr.mxu0 0.0
    %2520 = vmatpush1.xpose.msra.mxu0 0.0
    %2521 = vmatprep.subr.mxu0 0.0
    %2522 = vmatpush1.xpose.msra.mxu0 0.0
    %2523 = vmatprep.subr.mxu0 0.0
    %2524 = vmatpush1.xpose.msra.mxu0 0.0
    %2525 = vmatprep.subr.mxu0 0.0
    %2526 = vmatpush1.xpose.msra.mxu0 0.0
    %2527 = vmatprep.subr.mxu0 0.0
    %2528 = vmatpush1.xpose.msra.mxu0 0.0
    %2529 = vmatprep.subr.mxu0 0.0
    %2530 = vmatpush1.xpose.msra.mxu0 0.0
    %2531 = vmatprep.subr.mxu0 0.0
    %2532 = vmatpush1.xpose.msra.mxu0 0.0
    %2533 = vmatprep.subr.mxu0 0.0
    %2534 = vmatpush1.xpose.msra.mxu0 0.0
    %2535 = vmatprep.subr.mxu0 0.0
    %2536 = vmatpush1.xpose.msra.mxu0 0.0
    %2537 = vmatprep.subr.mxu0 0.0
    %2538 = vmatpush1.xpose.msra.mxu0 0.0
    %2539 = vmatprep.subr.mxu0 0.0
    %2540 = vmatpush1.xpose.msra.mxu0 0.0
    %2541 = vmatprep.subr.mxu0 0.0
    %2542 = vmatpush1.xpose.msra.mxu0 0.0
    %2543 = vmatprep.subr.mxu0 0.0
    %2544 = vmatpush1.xpose.msra.mxu0 0.0
    %2545 = vmatprep.subr.mxu0 0.0
    %2546 = vmatpush1.xpose.msra.mxu0 0.0
    %2547 = vmatprep.subr.mxu0 0.0
    %2548 = vmatpush1.xpose.msra.mxu0 0.0
    %2549 = vmatprep.subr.mxu0 0.0
    %2550 = vmatpush1.xpose.msra.mxu0 0.0
    %2551 = vmatprep.subr.mxu0 0.0
    %2552 = vmatpush1.xpose.msra.mxu0 0.0
    %2553 = vmatprep.subr.mxu0 0.0
    %2554 = vmatpush1.xpose.msra.mxu0 0.0
    %2555 = vmatprep.subr.mxu0 0.0
    %2556 = vmatpush1.xpose.msra.mxu0 0.0
    %2557 = vmatprep.subr.mxu0 0.0
    %2558 = vmatpush1.xpose.msra.mxu0 0.0
    %2559 = vmatprep.subr.mxu0 0.0
    %2560 = vmatpush1.xpose.msra.mxu0 0.0
    %2561 = vmatprep.subr.mxu0 0.0
    %2562 = vmatpush1.xpose.msra.mxu0 0.0
    %2563 = vmatprep.subr.mxu0 0.0
    %2564 = vmatpush1.xpose.msra.mxu0 0.0
    %2565 = vmatprep.subr.mxu0 0.0
    %2566 = vmatpush1.xpose.msra.mxu0 0.0
    %2567 = vmatprep.mubr.f32.mxu0 0.0
    %2568 = vmatmul.mubr.f32.gmra.mrb[0].mxu0 %v2497
    %v2569 = vpop.f32.mrb[0].mxu0
    %v2570 = vadd.f32 0.0, %v2569
    %v2571 = vpop.f32.mrb[0].mxu0
    %2572 = vdwg.mxu0
    %2573 = vrot.lane.b32.xlu0 %v2298, 112
    %v2574 = vpop.permute.xlu0 %2573
    %2575 = vrot.lane.b32.xlu0 %v2395, 112
    %v2576 = vpop.permute.xlu0 %2575
    %2577 = vrot.lane.b32.xlu0 %v2400, 112
    %v2578 = vpop.permute.xlu0 %2577
    %v2579 = vsel %vm251, %v2574, 0
    %v2581 = vsel %vm251, %v2576, 0
    %v2583 = vsel %vm251, %v2578, 0
    %2585 = vmatprep.subr.mxu0 0.0
    %2586 = vmatpush1.xpose.msra.mxu0 %v2581
    %2587 = vmatprep.subr.mxu0 0.0
    %2588 = vmatpush1.xpose.msra.mxu0 %v2583
    %2589 = vmatprep.subr.mxu0 0.0
    %2590 = vmatpush1.xpose.msra.mxu0 0.0
    %2591 = vmatprep.subr.mxu0 0.0
    %2592 = vmatpush1.xpose.msra.mxu0 0.0
    %2593 = vmatprep.subr.mxu0 0.0
    %2594 = vmatpush1.xpose.msra.mxu0 0.0
    %2595 = vmatprep.subr.mxu0 0.0
    %2596 = vmatpush1.xpose.msra.mxu0 0.0
    %2597 = vmatprep.subr.mxu0 0.0
    %2598 = vmatpush1.xpose.msra.mxu0 0.0
    %2599 = vmatprep.subr.mxu0 0.0
    %2600 = vmatpush1.xpose.msra.mxu0 0.0
    %2601 = vmatprep.subr.mxu0 0.0
    %2602 = vmatpush1.xpose.msra.mxu0 0.0
    %2603 = vmatprep.subr.mxu0 0.0
    %2604 = vmatpush1.xpose.msra.mxu0 0.0
    %2605 = vmatprep.subr.mxu0 0.0
    %2606 = vmatpush1.xpose.msra.mxu0 0.0
    %2607 = vmatprep.subr.mxu0 0.0
    %2608 = vmatpush1.xpose.msra.mxu0 0.0
    %2609 = vmatprep.subr.mxu0 0.0
    %2610 = vmatpush1.xpose.msra.mxu0 0.0
    %2611 = vmatprep.subr.mxu0 0.0
    %2612 = vmatpush1.xpose.msra.mxu0 0.0
    %2613 = vmatprep.subr.mxu0 0.0
    %2614 = vmatpush1.xpose.msra.mxu0 0.0
    %2615 = vmatprep.subr.mxu0 0.0
    %2616 = vmatpush1.xpose.msra.mxu0 0.0
    %2617 = vmatprep.subr.mxu0 0.0
    %2618 = vmatpush1.xpose.msra.mxu0 0.0
    %2619 = vmatprep.subr.mxu0 0.0
    %2620 = vmatpush1.xpose.msra.mxu0 0.0
    %2621 = vmatprep.subr.mxu0 0.0
    %2622 = vmatpush1.xpose.msra.mxu0 0.0
    %2623 = vmatprep.subr.mxu0 0.0
    %2624 = vmatpush1.xpose.msra.mxu0 0.0
    %2625 = vmatprep.subr.mxu0 0.0
    %2626 = vmatpush1.xpose.msra.mxu0 0.0
    %2627 = vmatprep.subr.mxu0 0.0
    %2628 = vmatpush1.xpose.msra.mxu0 0.0
    %2629 = vmatprep.subr.mxu0 0.0
    %2630 = vmatpush1.xpose.msra.mxu0 0.0
    %2631 = vmatprep.subr.mxu0 0.0
    %2632 = vmatpush1.xpose.msra.mxu0 0.0
    %2633 = vmatprep.subr.mxu0 0.0
    %2634 = vmatpush1.xpose.msra.mxu0 0.0
    %2635 = vmatprep.subr.mxu0 0.0
    %2636 = vmatpush1.xpose.msra.mxu0 0.0
    %2637 = vmatprep.subr.mxu0 0.0
    %2638 = vmatpush1.xpose.msra.mxu0 0.0
    %2639 = vmatprep.subr.mxu0 0.0
    %2640 = vmatpush1.xpose.msra.mxu0 0.0
    %2641 = vmatprep.subr.mxu0 0.0
    %2642 = vmatpush1.xpose.msra.mxu0 0.0
    %2643 = vmatprep.subr.mxu0 0.0
    %2644 = vmatpush1.xpose.msra.mxu0 0.0
    %2645 = vmatprep.subr.mxu0 0.0
    %2646 = vmatpush1.xpose.msra.mxu0 0.0
    %2647 = vmatprep.subr.mxu0 0.0
    %2648 = vmatpush1.xpose.msra.mxu0 0.0
    %2649 = vmatprep.mubr.f32.mxu0 0.0
    %2650 = vmatmul.mubr.f32.gmra.mrb[0].mxu0 %v2579
    %v2651 = vpop.f32.mrb[0].mxu0
    %v2652 = vadd.f32 0.0, %v2651
    %v2653 = vpop.f32.mrb[0].mxu0
    %2654 = vdwg.mxu0
    %2655 = vrot.lane.b32.xlu0 %v2298, 104
    %v2656 = vpop.permute.xlu0 %2655
    %2657 = vrot.lane.b32.xlu0 %v2395, 104
    %v2658 = vpop.permute.xlu0 %2657
    %2659 = vrot.lane.b32.xlu0 %v2400, 104
    %v2660 = vpop.permute.xlu0 %2659
    %v2661 = vsel %vm251, %v2656, 0
    %v2663 = vsel %vm251, %v2658, 0
    %v2665 = vsel %vm251, %v2660, 0
    %2667 = vmatprep.subr.mxu0 0.0
    %2668 = vmatpush1.xpose.msra.mxu0 %v2663
    %2669 = vmatprep.subr.mxu0 0.0
    %2670 = vmatpush1.xpose.msra.mxu0 %v2665
    %2671 = vmatprep.subr.mxu0 0.0
    %2672 = vmatpush1.xpose.msra.mxu0 0.0
    %2673 = vmatprep.subr.mxu0 0.0
    %2674 = vmatpush1.xpose.msra.mxu0 0.0
    %2675 = vmatprep.subr.mxu0 0.0
    %2676 = vmatpush1.xpose.msra.mxu0 0.0
    %2677 = vmatprep.subr.mxu0 0.0
    %2678 = vmatpush1.xpose.msra.mxu0 0.0
    %2679 = vmatprep.subr.mxu0 0.0
    %2680 = vmatpush1.xpose.msra.mxu0 0.0
    %2681 = vmatprep.subr.mxu0 0.0
    %2682 = vmatpush1.xpose.msra.mxu0 0.0
    %2683 = vmatprep.subr.mxu0 0.0
    %2684 = vmatpush1.xpose.msra.mxu0 0.0
    %2685 = vmatprep.subr.mxu0 0.0
    %2686 = vmatpush1.xpose.msra.mxu0 0.0
    %2687 = vmatprep.subr.mxu0 0.0
    %2688 = vmatpush1.xpose.msra.mxu0 0.0
    %2689 = vmatprep.subr.mxu0 0.0
    %2690 = vmatpush1.xpose.msra.mxu0 0.0
    %2691 = vmatprep.subr.mxu0 0.0
    %2692 = vmatpush1.xpose.msra.mxu0 0.0
    %2693 = vmatprep.subr.mxu0 0.0
    %2694 = vmatpush1.xpose.msra.mxu0 0.0
    %2695 = vmatprep.subr.mxu0 0.0
    %2696 = vmatpush1.xpose.msra.mxu0 0.0
    %2697 = vmatprep.subr.mxu0 0.0
    %2698 = vmatpush1.xpose.msra.mxu0 0.0
    %2699 = vmatprep.subr.mxu0 0.0
    %2700 = vmatpush1.xpose.msra.mxu0 0.0
    %2701 = vmatprep.subr.mxu0 0.0
    %2702 = vmatpush1.xpose.msra.mxu0 0.0
    %2703 = vmatprep.subr.mxu0 0.0
    %2704 = vmatpush1.xpose.msra.mxu0 0.0
    %2705 = vmatprep.subr.mxu0 0.0
    %2706 = vmatpush1.xpose.msra.mxu0 0.0
    %2707 = vmatprep.subr.mxu0 0.0
    %2708 = vmatpush1.xpose.msra.mxu0 0.0
    %2709 = vmatprep.subr.mxu0 0.0
    %2710 = vmatpush1.xpose.msra.mxu0 0.0
    %2711 = vmatprep.subr.mxu0 0.0
    %2712 = vmatpush1.xpose.msra.mxu0 0.0
    %2713 = vmatprep.subr.mxu0 0.0
    %2714 = vmatpush1.xpose.msra.mxu0 0.0
    %2715 = vmatprep.subr.mxu0 0.0
    %2716 = vmatpush1.xpose.msra.mxu0 0.0
    %2717 = vmatprep.subr.mxu0 0.0
    %2718 = vmatpush1.xpose.msra.mxu0 0.0
    %2719 = vmatprep.subr.mxu0 0.0
    %2720 = vmatpush1.xpose.msra.mxu0 0.0
    %2721 = vmatprep.subr.mxu0 0.0
    %2722 = vmatpush1.xpose.msra.mxu0 0.0
    %2723 = vmatprep.subr.mxu0 0.0
    %2724 = vmatpush1.xpose.msra.mxu0 0.0
    %2725 = vmatprep.subr.mxu0 0.0
    %2726 = vmatpush1.xpose.msra.mxu0 0.0
    %2727 = vmatprep.subr.mxu0 0.0
    %2728 = vmatpush1.xpose.msra.mxu0 0.0
    %2729 = vmatprep.subr.mxu0 0.0
    %2730 = vmatpush1.xpose.msra.mxu0 0.0
    %2731 = vmatprep.mubr.f32.mxu0 0.0
    %2732 = vmatmul.mubr.f32.gmra.mrb[0].mxu0 %v2661
    %v2733 = vpop.f32.mrb[0].mxu0
    %v2734 = vadd.f32 0.0, %v2733
    %v2735 = vpop.f32.mrb[0].mxu0
    %2736 = vdwg.mxu0
    %v2738 = vrot.slane %v2400, 4
    %v2739 = vrot.slane %v2405, 4
    %v2740 = vsel %vm2211, %v2738, %v2739
    %v2742 = vsel %vm251, %v2303, 0
    %v2744 = vsel %vm251, %v2740, 0
    %v2746 = vsel %vm251, %v2739, 0
    %2748 = vmatprep.subr.mxu0 0.0
    %2749 = vmatpush1.xpose.msra.mxu0 %v2744
    %2750 = vmatprep.subr.mxu0 0.0
    %2751 = vmatpush1.xpose.msra.mxu0 %v2746
    %2752 = vmatprep.subr.mxu0 0.0
    %2753 = vmatpush1.xpose.msra.mxu0 0.0
    %2754 = vmatprep.subr.mxu0 0.0
    %2755 = vmatpush1.xpose.msra.mxu0 0.0
    %2756 = vmatprep.subr.mxu0 0.0
    %2757 = vmatpush1.xpose.msra.mxu0 0.0
    %2758 = vmatprep.subr.mxu0 0.0
    %2759 = vmatpush1.xpose.msra.mxu0 0.0
    %2760 = vmatprep.subr.mxu0 0.0
    %2761 = vmatpush1.xpose.msra.mxu0 0.0
    %2762 = vmatprep.subr.mxu0 0.0
    %2763 = vmatpush1.xpose.msra.mxu0 0.0
    %2764 = vmatprep.subr.mxu0 0.0
    %2765 = vmatpush1.xpose.msra.mxu0 0.0
    %2766 = vmatprep.subr.mxu0 0.0
    %2767 = vmatpush1.xpose.msra.mxu0 0.0
    %2768 = vmatprep.subr.mxu0 0.0
    %2769 = vmatpush1.xpose.msra.mxu0 0.0
    %2770 = vmatprep.subr.mxu0 0.0
    %2771 = vmatpush1.xpose.msra.mxu0 0.0
    %2772 = vmatprep.subr.mxu0 0.0
    %2773 = vmatpush1.xpose.msra.mxu0 0.0
    %2774 = vmatprep.subr.mxu0 0.0
    %2775 = vmatpush1.xpose.msra.mxu0 0.0
    %2776 = vmatprep.subr.mxu0 0.0
    %2777 = vmatpush1.xpose.msra.mxu0 0.0
    %2778 = vmatprep.subr.mxu0 0.0
    %2779 = vmatpush1.xpose.msra.mxu0 0.0
    %2780 = vmatprep.subr.mxu0 0.0
    %2781 = vmatpush1.xpose.msra.mxu0 0.0
    %2782 = vmatprep.subr.mxu0 0.0
    %2783 = vmatpush1.xpose.msra.mxu0 0.0
    %2784 = vmatprep.subr.mxu0 0.0
    %2785 = vmatpush1.xpose.msra.mxu0 0.0
    %2786 = vmatprep.subr.mxu0 0.0
    %2787 = vmatpush1.xpose.msra.mxu0 0.0
    %2788 = vmatprep.subr.mxu0 0.0
    %2789 = vmatpush1.xpose.msra.mxu0 0.0
    %2790 = vmatprep.subr.mxu0 0.0
    %2791 = vmatpush1.xpose.msra.mxu0 0.0
    %2792 = vmatprep.subr.mxu0 0.0
    %2793 = vmatpush1.xpose.msra.mxu0 0.0
    %2794 = vmatprep.subr.mxu0 0.0
    %2795 = vmatpush1.xpose.msra.mxu0 0.0
    %2796 = vmatprep.subr.mxu0 0.0
    %2797 = vmatpush1.xpose.msra.mxu0 0.0
    %2798 = vmatprep.subr.mxu0 0.0
    %2799 = vmatpush1.xpose.msra.mxu0 0.0
    %2800 = vmatprep.subr.mxu0 0.0
    %2801 = vmatpush1.xpose.msra.mxu0 0.0
    %2802 = vmatprep.subr.mxu0 0.0
    %2803 = vmatpush1.xpose.msra.mxu0 0.0
    %2804 = vmatprep.subr.mxu0 0.0
    %2805 = vmatpush1.xpose.msra.mxu0 0.0
    %2806 = vmatprep.subr.mxu0 0.0
    %2807 = vmatpush1.xpose.msra.mxu0 0.0
    %2808 = vmatprep.subr.mxu0 0.0
    %2809 = vmatpush1.xpose.msra.mxu0 0.0
    %2810 = vmatprep.subr.mxu0 0.0
    %2811 = vmatpush1.xpose.msra.mxu0 0.0
    %2812 = vmatprep.mubr.f32.mxu0 0.0
    %2813 = vmatmul.mubr.f32.gmra.mrb[0].mxu0 %v2742
    %v2814 = vpop.f32.mrb[0].mxu0
    %v2815 = vadd.f32 0.0, %v2814
    %v2816 = vpop.f32.mrb[0].mxu0
    %2817 = vdwg.mxu0
    %2818 = vrot.lane.b32.xlu0 %v2303, 120
    %v2819 = vpop.permute.xlu0 %2818
    %2820 = vrot.lane.b32.xlu0 %v2740, 120
    %v2821 = vpop.permute.xlu0 %2820
    %2822 = vrot.lane.b32.xlu0 %v2739, 120
    %v2823 = vpop.permute.xlu0 %2822
    %v2824 = vsel %vm251, %v2819, 0
    %v2826 = vsel %vm251, %v2821, 0
    %v2828 = vsel %vm251, %v2823, 0
    %2830 = vmatprep.subr.mxu0 0.0
    %2831 = vmatpush1.xpose.msra.mxu0 %v2826
    %2832 = vmatprep.subr.mxu0 0.0
    %2833 = vmatpush1.xpose.msra.mxu0 %v2828
    %2834 = vmatprep.subr.mxu0 0.0
    %2835 = vmatpush1.xpose.msra.mxu0 0.0
    %2836 = vmatprep.subr.mxu0 0.0
    %2837 = vmatpush1.xpose.msra.mxu0 0.0
    %2838 = vmatprep.subr.mxu0 0.0
    %2839 = vmatpush1.xpose.msra.mxu0 0.0
    %2840 = vmatprep.subr.mxu0 0.0
    %2841 = vmatpush1.xpose.msra.mxu0 0.0
    %2842 = vmatprep.subr.mxu0 0.0
    %2843 = vmatpush1.xpose.msra.mxu0 0.0
    %2844 = vmatprep.subr.mxu0 0.0
    %2845 = vmatpush1.xpose.msra.mxu0 0.0
    %2846 = vmatprep.subr.mxu0 0.0
    %2847 = vmatpush1.xpose.msra.mxu0 0.0
    %2848 = vmatprep.subr.mxu0 0.0
    %2849 = vmatpush1.xpose.msra.mxu0 0.0
    %2850 = vmatprep.subr.mxu0 0.0
    %2851 = vmatpush1.xpose.msra.mxu0 0.0
    %2852 = vmatprep.subr.mxu0 0.0
    %2853 = vmatpush1.xpose.msra.mxu0 0.0
    %2854 = vmatprep.subr.mxu0 0.0
    %2855 = vmatpush1.xpose.msra.mxu0 0.0
    %2856 = vmatprep.subr.mxu0 0.0
    %2857 = vmatpush1.xpose.msra.mxu0 0.0
    %2858 = vmatprep.subr.mxu0 0.0
    %2859 = vmatpush1.xpose.msra.mxu0 0.0
    %2860 = vmatprep.subr.mxu0 0.0
    %2861 = vmatpush1.xpose.msra.mxu0 0.0
    %2862 = vmatprep.subr.mxu0 0.0
    %2863 = vmatpush1.xpose.msra.mxu0 0.0
    %2864 = vmatprep.subr.mxu0 0.0
    %2865 = vmatpush1.xpose.msra.mxu0 0.0
    %2866 = vmatprep.subr.mxu0 0.0
    %2867 = vmatpush1.xpose.msra.mxu0 0.0
    %2868 = vmatprep.subr.mxu0 0.0
    %2869 = vmatpush1.xpose.msra.mxu0 0.0
    %2870 = vmatprep.subr.mxu0 0.0
    %2871 = vmatpush1.xpose.msra.mxu0 0.0
    %2872 = vmatprep.subr.mxu0 0.0
    %2873 = vmatpush1.xpose.msra.mxu0 0.0
    %2874 = vmatprep.subr.mxu0 0.0
    %2875 = vmatpush1.xpose.msra.mxu0 0.0
    %2876 = vmatprep.subr.mxu0 0.0
    %2877 = vmatpush1.xpose.msra.mxu0 0.0
    %2878 = vmatprep.subr.mxu0 0.0
    %2879 = vmatpush1.xpose.msra.mxu0 0.0
    %2880 = vmatprep.subr.mxu0 0.0
    %2881 = vmatpush1.xpose.msra.mxu0 0.0
    %2882 = vmatprep.subr.mxu0 0.0
    %2883 = vmatpush1.xpose.msra.mxu0 0.0
    %2884 = vmatprep.subr.mxu0 0.0
    %2885 = vmatpush1.xpose.msra.mxu0 0.0
    %2886 = vmatprep.subr.mxu0 0.0
    %2887 = vmatpush1.xpose.msra.mxu0 0.0
    %2888 = vmatprep.subr.mxu0 0.0
    %2889 = vmatpush1.xpose.msra.mxu0 0.0
    %2890 = vmatprep.subr.mxu0 0.0
    %2891 = vmatpush1.xpose.msra.mxu0 0.0
    %2892 = vmatprep.subr.mxu0 0.0
    %2893 = vmatpush1.xpose.msra.mxu0 0.0
    %2894 = vmatprep.mubr.f32.mxu0 0.0
    %2895 = vmatmul.mubr.f32.gmra.mrb[0].mxu0 %v2824
    %v2896 = vpop.f32.mrb[0].mxu0
    %v2897 = vadd.f32 0.0, %v2896
    %v2898 = vpop.f32.mrb[0].mxu0
    %2899 = vdwg.mxu0
    %2900 = vrot.lane.b32.xlu0 %v2303, 112
    %v2901 = vpop.permute.xlu0 %2900
    %2902 = vrot.lane.b32.xlu0 %v2740, 112
    %v2903 = vpop.permute.xlu0 %2902
    %2904 = vrot.lane.b32.xlu0 %v2739, 112
    %v2905 = vpop.permute.xlu0 %2904
    %v2906 = vsel %vm251, %v2901, 0
    %v2908 = vsel %vm251, %v2903, 0
    %v2910 = vsel %vm251, %v2905, 0
    %2912 = vmatprep.subr.mxu0 0.0
    %2913 = vmatpush1.xpose.msra.mxu0 %v2908
    %2914 = vmatprep.subr.mxu0 0.0
    %2915 = vmatpush1.xpose.msra.mxu0 %v2910
    %2916 = vmatprep.subr.mxu0 0.0
    %2917 = vmatpush1.xpose.msra.mxu0 0.0
    %2918 = vmatprep.subr.mxu0 0.0
    %2919 = vmatpush1.xpose.msra.mxu0 0.0
    %2920 = vmatprep.subr.mxu0 0.0
    %2921 = vmatpush1.xpose.msra.mxu0 0.0
    %2922 = vmatprep.subr.mxu0 0.0
    %2923 = vmatpush1.xpose.msra.mxu0 0.0
    %2924 = vmatprep.subr.mxu0 0.0
    %2925 = vmatpush1.xpose.msra.mxu0 0.0
    %2926 = vmatprep.subr.mxu0 0.0
    %2927 = vmatpush1.xpose.msra.mxu0 0.0
    %2928 = vmatprep.subr.mxu0 0.0
    %2929 = vmatpush1.xpose.msra.mxu0 0.0
    %2930 = vmatprep.subr.mxu0 0.0
    %2931 = vmatpush1.xpose.msra.mxu0 0.0
    %2932 = vmatprep.subr.mxu0 0.0
    %2933 = vmatpush1.xpose.msra.mxu0 0.0
    %2934 = vmatprep.subr.mxu0 0.0
    %2935 = vmatpush1.xpose.msra.mxu0 0.0
    %2936 = vmatprep.subr.mxu0 0.0
    %2937 = vmatpush1.xpose.msra.mxu0 0.0
    %2938 = vmatprep.subr.mxu0 0.0
    %2939 = vmatpush1.xpose.msra.mxu0 0.0
    %2940 = vmatprep.subr.mxu0 0.0
    %2941 = vmatpush1.xpose.msra.mxu0 0.0
    %2942 = vmatprep.subr.mxu0 0.0
    %2943 = vmatpush1.xpose.msra.mxu0 0.0
    %2944 = vmatprep.subr.mxu0 0.0
    %2945 = vmatpush1.xpose.msra.mxu0 0.0
    %2946 = vmatprep.subr.mxu0 0.0
    %2947 = vmatpush1.xpose.msra.mxu0 0.0
    %2948 = vmatprep.subr.mxu0 0.0
    %2949 = vmatpush1.xpose.msra.mxu0 0.0
    %2950 = vmatprep.subr.mxu0 0.0
    %2951 = vmatpush1.xpose.msra.mxu0 0.0
    %2952 = vmatprep.subr.mxu0 0.0
    %2953 = vmatpush1.xpose.msra.mxu0 0.0
    %2954 = vmatprep.subr.mxu0 0.0
    %2955 = vmatpush1.xpose.msra.mxu0 0.0
    %2956 = vmatprep.subr.mxu0 0.0
    %2957 = vmatpush1.xpose.msra.mxu0 0.0
    %2958 = vmatprep.subr.mxu0 0.0
    %2959 = vmatpush1.xpose.msra.mxu0 0.0
    %2960 = vmatprep.subr.mxu0 0.0
    %2961 = vmatpush1.xpose.msra.mxu0 0.0
    %2962 = vmatprep.subr.mxu0 0.0
    %2963 = vmatpush1.xpose.msra.mxu0 0.0
    %2964 = vmatprep.subr.mxu0 0.0
    %2965 = vmatpush1.xpose.msra.mxu0 0.0
    %2966 = vmatprep.subr.mxu0 0.0
    %2967 = vmatpush1.xpose.msra.mxu0 0.0
    %2968 = vmatprep.subr.mxu0 0.0
    %2969 = vmatpush1.xpose.msra.mxu0 0.0
    %2970 = vmatprep.subr.mxu0 0.0
    %2971 = vmatpush1.xpose.msra.mxu0 0.0
    %2972 = vmatprep.subr.mxu0 0.0
    %2973 = vmatpush1.xpose.msra.mxu0 0.0
    %2974 = vmatprep.subr.mxu0 0.0
    %2975 = vmatpush1.xpose.msra.mxu0 0.0
    %2976 = vmatprep.mubr.f32.mxu0 0.0
    %2977 = vmatmul.mubr.f32.gmra.mrb[0].mxu0 %v2906
    %v2978 = vpop.f32.mrb[0].mxu0
    %v2979 = vadd.f32 0.0, %v2978
    %v2980 = vpop.f32.mrb[0].mxu0
    %2981 = vdwg.mxu0
    %2982 = vrot.lane.b32.xlu0 %v2303, 104
    %v2983 = vpop.permute.xlu0 %2982
    %2984 = vrot.lane.b32.xlu0 %v2740, 104
    %v2985 = vpop.permute.xlu0 %2984
    %2986 = vrot.lane.b32.xlu0 %v2739, 104
    %v2987 = vpop.permute.xlu0 %2986
    %v2988 = vsel %vm251, %v2983, 0
    %v2990 = vsel %vm251, %v2985, 0
    %v2992 = vsel %vm251, %v2987, 0
    %2994 = vmatprep.subr.mxu0 0.0
    %2995 = vmatpush1.xpose.msra.mxu0 %v2990
    %2996 = vmatprep.subr.mxu0 0.0
    %2997 = vmatpush1.xpose.msra.mxu0 %v2992
    %2998 = vmatprep.subr.mxu0 0.0
    %2999 = vmatpush1.xpose.msra.mxu0 0.0
    %3000 = vmatprep.subr.mxu0 0.0
    %3001 = vmatpush1.xpose.msra.mxu0 0.0
    %3002 = vmatprep.subr.mxu0 0.0
    %3003 = vmatpush1.xpose.msra.mxu0 0.0
    %3004 = vmatprep.subr.mxu0 0.0
    %3005 = vmatpush1.xpose.msra.mxu0 0.0
    %3006 = vmatprep.subr.mxu0 0.0
    %3007 = vmatpush1.xpose.msra.mxu0 0.0
    %3008 = vmatprep.subr.mxu0 0.0
    %3009 = vmatpush1.xpose.msra.mxu0 0.0
    %3010 = vmatprep.subr.mxu0 0.0
    %3011 = vmatpush1.xpose.msra.mxu0 0.0
    %3012 = vmatprep.subr.mxu0 0.0
    %3013 = vmatpush1.xpose.msra.mxu0 0.0
    %3014 = vmatprep.subr.mxu0 0.0
    %3015 = vmatpush1.xpose.msra.mxu0 0.0
    %3016 = vmatprep.subr.mxu0 0.0
    %3017 = vmatpush1.xpose.msra.mxu0 0.0
    %3018 = vmatprep.subr.mxu0 0.0
    %3019 = vmatpush1.xpose.msra.mxu0 0.0
    %3020 = vmatprep.subr.mxu0 0.0
    %3021 = vmatpush1.xpose.msra.mxu0 0.0
    %3022 = vmatprep.subr.mxu0 0.0
    %3023 = vmatpush1.xpose.msra.mxu0 0.0
    %3024 = vmatprep.subr.mxu0 0.0
    %3025 = vmatpush1.xpose.msra.mxu0 0.0
    %3026 = vmatprep.subr.mxu0 0.0
    %3027 = vmatpush1.xpose.msra.mxu0 0.0
    %3028 = vmatprep.subr.mxu0 0.0
    %3029 = vmatpush1.xpose.msra.mxu0 0.0
    %3030 = vmatprep.subr.mxu0 0.0
    %3031 = vmatpush1.xpose.msra.mxu0 0.0
    %3032 = vmatprep.subr.mxu0 0.0
    %3033 = vmatpush1.xpose.msra.mxu0 0.0
    %3034 = vmatprep.subr.mxu0 0.0
    %3035 = vmatpush1.xpose.msra.mxu0 0.0
    %3036 = vmatprep.subr.mxu0 0.0
    %3037 = vmatpush1.xpose.msra.mxu0 0.0
    %3038 = vmatprep.subr.mxu0 0.0
    %3039 = vmatpush1.xpose.msra.mxu0 0.0
    %3040 = vmatprep.subr.mxu0 0.0
    %3041 = vmatpush1.xpose.msra.mxu0 0.0
    %3042 = vmatprep.subr.mxu0 0.0
    %3043 = vmatpush1.xpose.msra.mxu0 0.0
    %3044 = vmatprep.subr.mxu0 0.0
    %3045 = vmatpush1.xpose.msra.mxu0 0.0
    %3046 = vmatprep.subr.mxu0 0.0
    %3047 = vmatpush1.xpose.msra.mxu0 0.0
    %3048 = vmatprep.subr.mxu0 0.0
    %3049 = vmatpush1.xpose.msra.mxu0 0.0
    %3050 = vmatprep.subr.mxu0 0.0
    %3051 = vmatpush1.xpose.msra.mxu0 0.0
    %3052 = vmatprep.subr.mxu0 0.0
    %3053 = vmatpush1.xpose.msra.mxu0 0.0
    %3054 = vmatprep.subr.mxu0 0.0
    %3055 = vmatpush1.xpose.msra.mxu0 0.0
    %3056 = vmatprep.subr.mxu0 0.0
    %3057 = vmatpush1.xpose.msra.mxu0 0.0
    %3058 = vmatprep.mubr.f32.mxu0 0.0
    %3059 = vmatmul.mubr.f32.gmra.mrb[0].mxu0 %v2988
    %v3060 = vpop.f32.mrb[0].mxu0
    %v3061 = vadd.f32 0.0, %v3060
    %v3062 = vpop.f32.mrb[0].mxu0
    %3063 = vdwg.mxu0
    %vm3064 = vcmask 97280
    %v3065 = vsel %vm3064, %v2488, -inf
    %3066 = vmax.xlane.f32.xlu0 %v3065
    %v3067 = vpop.xlane.xlu0 %3066
    %v3068 = vsel %vm3064, %v2570, -inf
    %3069 = vmax.xlane.f32.xlu0 %v3068
    %v3070 = vpop.xlane.xlu0 %3069
    %v3071 = vsel %vm3064, %v2652, -inf
    %3072 = vmax.xlane.f32.xlu0 %v3071
    %v3073 = vpop.xlane.xlu0 %3072
    %v3074 = vsel %vm3064, %v2734, -inf
    %3075 = vmax.xlane.f32.xlu0 %v3074
    %v3076 = vpop.xlane.xlu0 %3075
    %v3077 = vsel %vm3064, %v2815, -inf
    %3078 = vmax.xlane.f32.xlu0 %v3077
    %v3079 = vpop.xlane.xlu0 %3078
    %v3080 = vsel %vm3064, %v2897, -inf
    %3081 = vmax.xlane.f32.xlu0 %v3080
    %v3082 = vpop.xlane.xlu0 %3081
    %v3083 = vsel %vm3064, %v2979, -inf
    %3084 = vmax.xlane.f32.xlu0 %v3083
    %v3085 = vpop.xlane.xlu0 %3084
    %v3086 = vsel %vm3064, %v3061, -inf
    %3087 = vmax.xlane.f32.xlu0 %v3086
    %v3088 = vpop.xlane.xlu0 %3087
    %v3089 = vsub.f32 %v2488, %v3067
    %v3090 = vsub.f32 %v2570, %v3070
    %v3091 = vsub.f32 %v2652, %v3073
    %v3092 = vsub.f32 %v2734, %v3076
    %v3093 = vsub.f32 %v2815, %v3079
    %v3094 = vsub.f32 %v2897, %v3082
    %v3095 = vsub.f32 %v2979, %v3085
    %v3096 = vsub.f32 %v3061, %v3088
    %v3097 = vmul.f32 %v3089, 1.442695
    %v3098 = vpow.pop %v3097
    %v3099 = vmul.f32 %v3090, 1.442695
    %v3100 = vpow.pop %v3099
    %v3101 = vmul.f32 %v3091, 1.442695
    %v3102 = vpow.pop %v3101
    %v3103 = vmul.f32 %v3092, 1.442695
    %v3104 = vpow.pop %v3103
    %v3105 = vmul.f32 %v3093, 1.442695
    %v3106 = vpow.pop %v3105
    %v3107 = vmul.f32 %v3094, 1.442695
    %v3108 = vpow.pop %v3107
    %v3109 = vmul.f32 %v3095, 1.442695
    %v3110 = vpow.pop %v3109
    %v3111 = vmul.f32 %v3096, 1.442695
    %v3112 = vpow.pop %v3111
    %v3113 = vsel %vm3064, %v3098, 0.0
    %3114 = vadd.xlane.f32.xlu0 %v3113
    %v3115 = vpop.xlane.xlu0 %3114
    %v3116 = vsel %vm3064, %v3100, 0.0
    %3117 = vadd.xlane.f32.xlu0 %v3116
    %v3118 = vpop.xlane.xlu0 %3117
    %v3119 = vsel %vm3064, %v3102, 0.0
    %3120 = vadd.xlane.f32.xlu0 %v3119
    %v3121 = vpop.xlane.xlu0 %3120
    %v3122 = vsel %vm3064, %v3104, 0.0
    %3123 = vadd.xlane.f32.xlu0 %v3122
    %v3124 = vpop.xlane.xlu0 %3123
    %v3125 = vsel %vm3064, %v3106, 0.0
    %3126 = vadd.xlane.f32.xlu0 %v3125
    %v3127 = vpop.xlane.xlu0 %3126
    %v3128 = vsel %vm3064, %v3108, 0.0
    %3129 = vadd.xlane.f32.xlu0 %v3128
    %v3130 = vpop.xlane.xlu0 %3129
    %v3131 = vsel %vm3064, %v3110, 0.0
    %3132 = vadd.xlane.f32.xlu0 %v3131
    %v3133 = vpop.xlane.xlu0 %3132
    %v3134 = vsel %vm3064, %v3112, 0.0
    %3135 = vadd.xlane.f32.xlu0 %v3134
    %v3136 = vpop.xlane.xlu0 %3135
    %v3137 = vrcp.pop %v3115
    %v3138 = vrcp.pop %v3118
    %v3139 = vrcp.pop %v3121
    %v3140 = vrcp.pop %v3124
    %v3141 = vrcp.pop %v3127
    %v3142 = vrcp.pop %v3130
    %v3143 = vrcp.pop %v3133
    %v3144 = vrcp.pop %v3136
    %v3145 = vmul.f32 %v3098, %v3137
    %v3146 = vmul.f32 %v3100, %v3138
    %v3147 = vmul.f32 %v3102, %v3139
    %v3148 = vmul.f32 %v3104, %v3140
    %v3149 = vmul.f32 %v3106, %v3141
    %v3150 = vmul.f32 %v3108, %v3142
    %v3151 = vmul.f32 %v3110, %v3143
    %v3152 = vmul.f32 %v3112, %v3144
    %3153 = vrot.lane.b32.xlu0 %v2395, 96
    %v3154 = vpop.permute.xlu0 %3153
    %3155 = vrot.lane.b32.xlu0 %v2400, 96
    %v3156 = vpop.permute.xlu0 %3155
    %v3159 = vsel %vm3064, %v3145, 0
    %v3161 = vsel %vm2211, %v3156, 0
    %3163 = vmatprep.subr.mxu0 0.0
    %3164 = vmatpush1.msra.mxu0 %v3154
    %3165 = vmatprep.subr.mxu0 0.0
    %3166 = vmatpush1.msra.mxu0 %v3161
    %3167 = vmatprep.subr.mxu0 0.0
    %3168 = vmatpush1.msra.mxu0 0.0
    %3169 = vmatprep.subr.mxu0 0.0
    %3170 = vmatpush1.msra.mxu0 0.0
    %3171 = vmatprep.subr.mxu0 0.0
    %3172 = vmatpush1.msra.mxu0 0.0
    %3173 = vmatprep.subr.mxu0 0.0
    %3174 = vmatpush1.msra.mxu0 0.0
    %3175 = vmatprep.subr.mxu0 0.0
    %3176 = vmatpush1.msra.mxu0 0.0
    %3177 = vmatprep.subr.mxu0 0.0
    %3178 = vmatpush1.msra.mxu0 0.0
    %3179 = vmatprep.subr.mxu0 0.0
    %3180 = vmatpush1.msra.mxu0 0.0
    %3181 = vmatprep.subr.mxu0 0.0
    %3182 = vmatpush1.msra.mxu0 0.0
    %3183 = vmatprep.subr.mxu0 0.0
    %3184 = vmatpush1.msra.mxu0 0.0
    %3185 = vmatprep.subr.mxu0 0.0
    %3186 = vmatpush1.msra.mxu0 0.0
    %3187 = vmatprep.subr.mxu0 0.0
    %3188 = vmatpush1.msra.mxu0 0.0
    %3189 = vmatprep.subr.mxu0 0.0
    %3190 = vmatpush1.msra.mxu0 0.0
    %3191 = vmatprep.subr.mxu0 0.0
    %3192 = vmatpush1.msra.mxu0 0.0
    %3193 = vmatprep.subr.mxu0 0.0
    %3194 = vmatpush1.msra.mxu0 0.0
    %3195 = vmatprep.subr.mxu0 0.0
    %3196 = vmatpush1.msra.mxu0 0.0
    %3197 = vmatprep.subr.mxu0 0.0
    %3198 = vmatpush1.msra.mxu0 0.0
    %3199 = vmatprep.subr.mxu0 0.0
    %3200 = vmatpush1.msra.mxu0 0.0
    %3201 = vmatprep.subr.mxu0 0.0
    %3202 = vmatpush1.msra.mxu0 0.0
    %3203 = vmatprep.subr.mxu0 0.0
    %3204 = vmatpush1.msra.mxu0 0.0
    %3205 = vmatprep.subr.mxu0 0.0
    %3206 = vmatpush1.msra.mxu0 0.0
    %3207 = vmatprep.subr.mxu0 0.0
    %3208 = vmatpush1.msra.mxu0 0.0
    %3209 = vmatprep.subr.mxu0 0.0
    %3210 = vmatpush1.msra.mxu0 0.0
    %3211 = vmatprep.subr.mxu0 0.0
    %3212 = vmatpush1.msra.mxu0 0.0
    %3213 = vmatprep.subr.mxu0 0.0
    %3214 = vmatpush1.msra.mxu0 0.0
    %3215 = vmatprep.subr.mxu0 0.0
    %3216 = vmatpush1.msra.mxu0 0.0
    %3217 = vmatprep.subr.mxu0 0.0
    %3218 = vmatpush1.msra.mxu0 0.0
    %3219 = vmatprep.subr.mxu0 0.0
    %3220 = vmatpush1.msra.mxu0 0.0
    %3221 = vmatprep.subr.mxu0 0.0
    %3222 = vmatpush1.msra.mxu0 0.0
    %3223 = vmatprep.subr.mxu0 0.0
    %3224 = vmatpush1.msra.mxu0 0.0
    %3225 = vmatprep.subr.mxu0 0.0
    %3226 = vmatpush1.msra.mxu0 0.0
    %3227 = vmatprep.mubr.f32.mxu0 0.0
    %3228 = vmatmul.mubr.f32.gmra.mrb[0].mxu0 %v3159
    %v3229 = vpop.f32.mrb[0].mxu0
    %v3230 = vadd.f32 0.0, %v3229
    %v3231 = vpop.f32.mrb[0].mxu0
    %3232 = vdwg.mxu0
    %3233 = vrot.lane.b32.xlu0 %v2395, 88
    %v3234 = vpop.permute.xlu0 %3233
    %3235 = vrot.lane.b32.xlu0 %v2400, 88
    %v3236 = vpop.permute.xlu0 %3235
    %v3239 = vsel %vm3064, %v3146, 0
    %v3241 = vsel %vm2211, %v3236, 0
    %3243 = vmatprep.subr.mxu0 0.0
    %3244 = vmatpush1.msra.mxu0 %v3234
    %3245 = vmatprep.subr.mxu0 0.0
    %3246 = vmatpush1.msra.mxu0 %v3241
    %3247 = vmatprep.subr.mxu0 0.0
    %3248 = vmatpush1.msra.mxu0 0.0
    %3249 = vmatprep.subr.mxu0 0.0
    %3250 = vmatpush1.msra.mxu0 0.0
    %3251 = vmatprep.subr.mxu0 0.0
    %3252 = vmatpush1.msra.mxu0 0.0
    %3253 = vmatprep.subr.mxu0 0.0
    %3254 = vmatpush1.msra.mxu0 0.0
    %3255 = vmatprep.subr.mxu0 0.0
    %3256 = vmatpush1.msra.mxu0 0.0
    %3257 = vmatprep.subr.mxu0 0.0
    %3258 = vmatpush1.msra.mxu0 0.0
    %3259 = vmatprep.subr.mxu0 0.0
    %3260 = vmatpush1.msra.mxu0 0.0
    %3261 = vmatprep.subr.mxu0 0.0
    %3262 = vmatpush1.msra.mxu0 0.0
    %3263 = vmatprep.subr.mxu0 0.0
    %3264 = vmatpush1.msra.mxu0 0.0
    %3265 = vmatprep.subr.mxu0 0.0
    %3266 = vmatpush1.msra.mxu0 0.0
    %3267 = vmatprep.subr.mxu0 0.0
    %3268 = vmatpush1.msra.mxu0 0.0
    %3269 = vmatprep.subr.mxu0 0.0
    %3270 = vmatpush1.msra.mxu0 0.0
    %3271 = vmatprep.subr.mxu0 0.0
    %3272 = vmatpush1.msra.mxu0 0.0
    %3273 = vmatprep.subr.mxu0 0.0
    %3274 = vmatpush1.msra.mxu0 0.0
    %3275 = vmatprep.subr.mxu0 0.0
    %3276 = vmatpush1.msra.mxu0 0.0
    %3277 = vmatprep.subr.mxu0 0.0
    %3278 = vmatpush1.msra.mxu0 0.0
    %3279 = vmatprep.subr.mxu0 0.0
    %3280 = vmatpush1.msra.mxu0 0.0
    %3281 = vmatprep.subr.mxu0 0.0
    %3282 = vmatpush1.msra.mxu0 0.0
    %3283 = vmatprep.subr.mxu0 0.0
    %3284 = vmatpush1.msra.mxu0 0.0
    %3285 = vmatprep.subr.mxu0 0.0
    %3286 = vmatpush1.msra.mxu0 0.0
    %3287 = vmatprep.subr.mxu0 0.0
    %3288 = vmatpush1.msra.mxu0 0.0
    %3289 = vmatprep.subr.mxu0 0.0
    %3290 = vmatpush1.msra.mxu0 0.0
    %3291 = vmatprep.subr.mxu0 0.0
    %3292 = vmatpush1.msra.mxu0 0.0
    %3293 = vmatprep.subr.mxu0 0.0
    %3294 = vmatpush1.msra.mxu0 0.0
    %3295 = vmatprep.subr.mxu0 0.0
    %3296 = vmatpush1.msra.mxu0 0.0
    %3297 = vmatprep.subr.mxu0 0.0
    %3298 = vmatpush1.msra.mxu0 0.0
    %3299 = vmatprep.subr.mxu0 0.0
    %3300 = vmatpush1.msra.mxu0 0.0
    %3301 = vmatprep.subr.mxu0 0.0
    %3302 = vmatpush1.msra.mxu0 0.0
    %3303 = vmatprep.subr.mxu0 0.0
    %3304 = vmatpush1.msra.mxu0 0.0
    %3305 = vmatprep.subr.mxu0 0.0
    %3306 = vmatpush1.msra.mxu0 0.0
    %3307 = vmatprep.mubr.f32.mxu0 0.0
    %3308 = vmatmul.mubr.f32.gmra.mrb[0].mxu0 %v3239
    %v3309 = vpop.f32.mrb[0].mxu0
    %v3310 = vadd.f32 0.0, %v3309
    %v3311 = vpop.f32.mrb[0].mxu0
    %3312 = vdwg.mxu0
    %v3314 = vsel %vm251, %v3310, 0
    %3316 = vmatprep.subr.mxu0 0.0
    %3317 = vmatpush1.msra.mxu0 %v2409
    %3318 = vmatprep.subr.mxu0 0.0
    %3319 = vmatpush1.msra.mxu0 0.0
    %3320 = vmatprep.subr.mxu0 0.0
    %3321 = vmatpush1.msra.mxu0 0.0
    %3322 = vmatprep.subr.mxu0 0.0
    %3323 = vmatpush1.msra.mxu0 0.0
    %3324 = vmatprep.subr.mxu0 0.0
    %3325 = vmatpush1.msra.mxu0 0.0
    %3326 = vmatprep.subr.mxu0 0.0
    %3327 = vmatpush1.msra.mxu0 0.0
    %3328 = vmatprep.subr.mxu0 0.0
    %3329 = vmatpush1.msra.mxu0 0.0
    %3330 = vmatprep.subr.mxu0 0.0
    %3331 = vmatpush1.msra.mxu0 0.0
    %3332 = vmatprep.subr.mxu0 0.0
    %3333 = vmatpush1.msra.mxu0 0.0
    %3334 = vmatprep.subr.mxu0 0.0
    %3335 = vmatpush1.msra.mxu0 0.0
    %3336 = vmatprep.subr.mxu0 0.0
    %3337 = vmatpush1.msra.mxu0 0.0
    %3338 = vmatprep.subr.mxu0 0.0
    %3339 = vmatpush1.msra.mxu0 0.0
    %3340 = vmatprep.subr.mxu0 0.0
    %3341 = vmatpush1.msra.mxu0 0.0
    %3342 = vmatprep.subr.mxu0 0.0
    %3343 = vmatpush1.msra.mxu0 0.0
    %3344 = vmatprep.subr.mxu0 0.0
    %3345 = vmatpush1.msra.mxu0 0.0
    %3346 = vmatprep.subr.mxu0 0.0
    %3347 = vmatpush1.msra.mxu0 0.0
    %3348 = vmatprep.subr.mxu0 0.0
    %3349 = vmatpush1.msra.mxu0 0.0
    %3350 = vmatprep.subr.mxu0 0.0
    %3351 = vmatpush1.msra.mxu0 0.0
    %3352 = vmatprep.subr.mxu0 0.0
    %3353 = vmatpush1.msra.mxu0 0.0
    %3354 = vmatprep.subr.mxu0 0.0
    %3355 = vmatpush1.msra.mxu0 0.0
    %3356 = vmatprep.subr.mxu0 0.0
    %3357 = vmatpush1.msra.mxu0 0.0
    %3358 = vmatprep.subr.mxu0 0.0
    %3359 = vmatpush1.msra.mxu0 0.0
    %3360 = vmatprep.subr.mxu0 0.0
    %3361 = vmatpush1.msra.mxu0 0.0
    %3362 = vmatprep.subr.mxu0 0.0
    %3363 = vmatpush1.msra.mxu0 0.0
    %3364 = vmatprep.subr.mxu0 0.0
    %3365 = vmatpush1.msra.mxu0 0.0
    %3366 = vmatprep.subr.mxu0 0.0
    %3367 = vmatpush1.msra.mxu0 0.0
    %3368 = vmatprep.subr.mxu0 0.0
    %3369 = vmatpush1.msra.mxu0 0.0
    %3370 = vmatprep.subr.mxu0 0.0
    %3371 = vmatpush1.msra.mxu0 0.0
    %3372 = vmatprep.subr.mxu0 0.0
    %3373 = vmatpush1.msra.mxu0 0.0
    %3374 = vmatprep.subr.mxu0 0.0
    %3375 = vmatpush1.msra.mxu0 0.0
    %3376 = vmatprep.subr.mxu0 0.0
    %3377 = vmatpush1.msra.mxu0 0.0
    %3378 = vmatprep.subr.mxu0 0.0
    %3379 = vmatpush1.msra.mxu0 0.0
    %3380 = vmatprep.mubr.f32.mxu0 0.0
    %3381 = vmatmul.mubr.f32.gmra.mrb[0].mxu0 %v3314
    %v3382 = vpop.f32.mrb[0].mxu0
    %v3383 = vadd.f32 0.0, %v3382
    %v3384 = vpop.f32.mrb[0].mxu0
    %3385 = vdwg.mxu0
    %v3387 = vsel %vm251, %v3230, 0
    %3389 = vmatprep.subr.mxu0 0.0
    %3390 = vmatpush1.msra.mxu0 %v2408
    %3391 = vmatprep.subr.mxu0 0.0
    %3392 = vmatpush1.msra.mxu0 0.0
    %3393 = vmatprep.subr.mxu0 0.0
    %3394 = vmatpush1.msra.mxu0 0.0
    %3395 = vmatprep.subr.mxu0 0.0
    %3396 = vmatpush1.msra.mxu0 0.0
    %3397 = vmatprep.subr.mxu0 0.0
    %3398 = vmatpush1.msra.mxu0 0.0
    %3399 = vmatprep.subr.mxu0 0.0
    %3400 = vmatpush1.msra.mxu0 0.0
    %3401 = vmatprep.subr.mxu0 0.0
    %3402 = vmatpush1.msra.mxu0 0.0
    %3403 = vmatprep.subr.mxu0 0.0
    %3404 = vmatpush1.msra.mxu0 0.0
    %3405 = vmatprep.subr.mxu0 0.0
    %3406 = vmatpush1.msra.mxu0 0.0
    %3407 = vmatprep.subr.mxu0 0.0
    %3408 = vmatpush1.msra.mxu0 0.0
    %3409 = vmatprep.subr.mxu0 0.0
    %3410 = vmatpush1.msra.mxu0 0.0
    %3411 = vmatprep.subr.mxu0 0.0
    %3412 = vmatpush1.msra.mxu0 0.0
    %3413 = vmatprep.subr.mxu0 0.0
    %3414 = vmatpush1.msra.mxu0 0.0
    %3415 = vmatprep.subr.mxu0 0.0
    %3416 = vmatpush1.msra.mxu0 0.0
    %3417 = vmatprep.subr.mxu0 0.0
    %3418 = vmatpush1.msra.mxu0 0.0
    %3419 = vmatprep.subr.mxu0 0.0
    %3420 = vmatpush1.msra.mxu0 0.0
    %3421 = vmatprep.subr.mxu0 0.0
    %3422 = vmatpush1.msra.mxu0 0.0
    %3423 = vmatprep.subr.mxu0 0.0
    %3424 = vmatpush1.msra.mxu0 0.0
    %3425 = vmatprep.subr.mxu0 0.0
    %3426 = vmatpush1.msra.mxu0 0.0
    %3427 = vmatprep.subr.mxu0 0.0
    %3428 = vmatpush1.msra.mxu0 0.0
    %3429 = vmatprep.subr.mxu0 0.0
    %3430 = vmatpush1.msra.mxu0 0.0
    %3431 = vmatprep.subr.mxu0 0.0
    %3432 = vmatpush1.msra.mxu0 0.0
    %3433 = vmatprep.subr.mxu0 0.0
    %3434 = vmatpush1.msra.mxu0 0.0
    %3435 = vmatprep.subr.mxu0 0.0
    %3436 = vmatpush1.msra.mxu0 0.0
    %3437 = vmatprep.subr.mxu0 0.0
    %3438 = vmatpush1.msra.mxu0 0.0
    %3439 = vmatprep.subr.mxu0 0.0
    %3440 = vmatpush1.msra.mxu0 0.0
    %3441 = vmatprep.subr.mxu0 0.0
    %3442 = vmatpush1.msra.mxu0 0.0
    %3443 = vmatprep.subr.mxu0 0.0
    %3444 = vmatpush1.msra.mxu0 0.0
    %3445 = vmatprep.subr.mxu0 0.0
    %3446 = vmatpush1.msra.mxu0 0.0
    %3447 = vmatprep.subr.mxu0 0.0
    %3448 = vmatpush1.msra.mxu0 0.0
    %3449 = vmatprep.subr.mxu0 0.0
    %3450 = vmatpush1.msra.mxu0 0.0
    %3451 = vmatprep.subr.mxu0 0.0
    %3452 = vmatpush1.msra.mxu0 0.0
    %3453 = vmatprep.mubr.f32.mxu0 0.0
    %3454 = vmatmul.mubr.f32.gmra.mrb[0].mxu0 %v3387
    %v3455 = vpop.f32.mrb[0].mxu0
    %v3456 = vadd.f32 %v3383, %v3455
    %v3457 = vpop.f32.mrb[0].mxu0
    %3458 = vdwg.mxu0
    %v3459 = vadd.f32 %v3145, %v3146
    %3460 = vrot.lane.b32.xlu0 %v2395, 80
    %v3461 = vpop.permute.xlu0 %3460
    %3462 = vrot.lane.b32.xlu0 %v2400, 80
    %v3463 = vpop.permute.xlu0 %3462
    %v3466 = vsel %vm3064, %v3147, 0
    %v3468 = vsel %vm2211, %v3463, 0
    %3470 = vmatprep.subr.mxu0 0.0
    %3471 = vmatpush1.msra.mxu0 %v3461
    %3472 = vmatprep.subr.mxu0 0.0
    %3473 = vmatpush1.msra.mxu0 %v3468
    %3474 = vmatprep.subr.mxu0 0.0
    %3475 = vmatpush1.msra.mxu0 0.0
    %3476 = vmatprep.subr.mxu0 0.0
    %3477 = vmatpush1.msra.mxu0 0.0
    %3478 = vmatprep.subr.mxu0 0.0
    %3479 = vmatpush1.msra.mxu0 0.0
    %3480 = vmatprep.subr.mxu0 0.0
    %3481 = vmatpush1.msra.mxu0 0.0
    %3482 = vmatprep.subr.mxu0 0.0
    %3483 = vmatpush1.msra.mxu0 0.0
    %3484 = vmatprep.subr.mxu0 0.0
    %3485 = vmatpush1.msra.mxu0 0.0
    %3486 = vmatprep.subr.mxu0 0.0
    %3487 = vmatpush1.msra.mxu0 0.0
    %3488 = vmatprep.subr.mxu0 0.0
    %3489 = vmatpush1.msra.mxu0 0.0
    %3490 = vmatprep.subr.mxu0 0.0
    %3491 = vmatpush1.msra.mxu0 0.0
    %3492 = vmatprep.subr.mxu0 0.0
    %3493 = vmatpush1.msra.mxu0 0.0
    %3494 = vmatprep.subr.mxu0 0.0
    %3495 = vmatpush1.msra.mxu0 0.0
    %3496 = vmatprep.subr.mxu0 0.0
    %3497 = vmatpush1.msra.mxu0 0.0
    %3498 = vmatprep.subr.mxu0 0.0
    %3499 = vmatpush1.msra.mxu0 0.0
    %3500 = vmatprep.subr.mxu0 0.0
    %3501 = vmatpush1.msra.mxu0 0.0
    %3502 = vmatprep.subr.mxu0 0.0
    %3503 = vmatpush1.msra.mxu0 0.0
    %3504 = vmatprep.subr.mxu0 0.0
    %3505 = vmatpush1.msra.mxu0 0.0
    %3506 = vmatprep.subr.mxu0 0.0
    %3507 = vmatpush1.msra.mxu0 0.0
    %3508 = vmatprep.subr.mxu0 0.0
    %3509 = vmatpush1.msra.mxu0 0.0
    %3510 = vmatprep.subr.mxu0 0.0
    %3511 = vmatpush1.msra.mxu0 0.0
    %3512 = vmatprep.subr.mxu0 0.0
    %3513 = vmatpush1.msra.mxu0 0.0
    %3514 = vmatprep.subr.mxu0 0.0
    %3515 = vmatpush1.msra.mxu0 0.0
    %3516 = vmatprep.subr.mxu0 0.0
    %3517 = vmatpush1.msra.mxu0 0.0
    %3518 = vmatprep.subr.mxu0 0.0
    %3519 = vmatpush1.msra.mxu0 0.0
    %3520 = vmatprep.subr.mxu0 0.0
    %3521 = vmatpush1.msra.mxu0 0.0
    %3522 = vmatprep.subr.mxu0 0.0
    %3523 = vmatpush1.msra.mxu0 0.0
    %3524 = vmatprep.subr.mxu0 0.0
    %3525 = vmatpush1.msra.mxu0 0.0
    %3526 = vmatprep.subr.mxu0 0.0
    %3527 = vmatpush1.msra.mxu0 0.0
    %3528 = vmatprep.subr.mxu0 0.0
    %3529 = vmatpush1.msra.mxu0 0.0
    %3530 = vmatprep.subr.mxu0 0.0
    %3531 = vmatpush1.msra.mxu0 0.0
    %3532 = vmatprep.subr.mxu0 0.0
    %3533 = vmatpush1.msra.mxu0 0.0
    %3534 = vmatprep.mubr.f32.mxu0 0.0
    %3535 = vmatmul.mubr.f32.gmra.mrb[0].mxu0 %v3466
    %v3536 = vpop.f32.mrb[0].mxu0
    %v3537 = vadd.f32 0.0, %v3536
    %v3538 = vpop.f32.mrb[0].mxu0
    %3539 = vdwg.mxu0
    %v3541 = vsel %vm251, %v3537, 0
    %3543 = vmatprep.subr.mxu0 0.0
    %3544 = vmatpush1.msra.mxu0 %v2410
    %3545 = vmatprep.subr.mxu0 0.0
    %3546 = vmatpush1.msra.mxu0 0.0
    %3547 = vmatprep.subr.mxu0 0.0
    %3548 = vmatpush1.msra.mxu0 0.0
    %3549 = vmatprep.subr.mxu0 0.0
    %3550 = vmatpush1.msra.mxu0 0.0
    %3551 = vmatprep.subr.mxu0 0.0
    %3552 = vmatpush1.msra.mxu0 0.0
    %3553 = vmatprep.subr.mxu0 0.0
    %3554 = vmatpush1.msra.mxu0 0.0
    %3555 = vmatprep.subr.mxu0 0.0
    %3556 = vmatpush1.msra.mxu0 0.0
    %3557 = vmatprep.subr.mxu0 0.0
    %3558 = vmatpush1.msra.mxu0 0.0
    %3559 = vmatprep.subr.mxu0 0.0
    %3560 = vmatpush1.msra.mxu0 0.0
    %3561 = vmatprep.subr.mxu0 0.0
    %3562 = vmatpush1.msra.mxu0 0.0
    %3563 = vmatprep.subr.mxu0 0.0
    %3564 = vmatpush1.msra.mxu0 0.0
    %3565 = vmatprep.subr.mxu0 0.0
    %3566 = vmatpush1.msra.mxu0 0.0
    %3567 = vmatprep.subr.mxu0 0.0
    %3568 = vmatpush1.msra.mxu0 0.0
    %3569 = vmatprep.subr.mxu0 0.0
    %3570 = vmatpush1.msra.mxu0 0.0
    %3571 = vmatprep.subr.mxu0 0.0
    %3572 = vmatpush1.msra.mxu0 0.0
    %3573 = vmatprep.subr.mxu0 0.0
    %3574 = vmatpush1.msra.mxu0 0.0
    %3575 = vmatprep.subr.mxu0 0.0
    %3576 = vmatpush1.msra.mxu0 0.0
    %3577 = vmatprep.subr.mxu0 0.0
    %3578 = vmatpush1.msra.mxu0 0.0
    %3579 = vmatprep.subr.mxu0 0.0
    %3580 = vmatpush1.msra.mxu0 0.0
    %3581 = vmatprep.subr.mxu0 0.0
    %3582 = vmatpush1.msra.mxu0 0.0
    %3583 = vmatprep.subr.mxu0 0.0
    %3584 = vmatpush1.msra.mxu0 0.0
    %3585 = vmatprep.subr.mxu0 0.0
    %3586 = vmatpush1.msra.mxu0 0.0
    %3587 = vmatprep.subr.mxu0 0.0
    %3588 = vmatpush1.msra.mxu0 0.0
    %3589 = vmatprep.subr.mxu0 0.0
    %3590 = vmatpush1.msra.mxu0 0.0
    %3591 = vmatprep.subr.mxu0 0.0
    %3592 = vmatpush1.msra.mxu0 0.0
    %3593 = vmatprep.subr.mxu0 0.0
    %3594 = vmatpush1.msra.mxu0 0.0
    %3595 = vmatprep.subr.mxu0 0.0
    %3596 = vmatpush1.msra.mxu0 0.0
    %3597 = vmatprep.subr.mxu0 0.0
    %3598 = vmatpush1.msra.mxu0 0.0
    %3599 = vmatprep.subr.mxu0 0.0
    %3600 = vmatpush1.msra.mxu0 0.0
    %3601 = vmatprep.subr.mxu0 0.0
    %3602 = vmatpush1.msra.mxu0 0.0
    %3603 = vmatprep.subr.mxu0 0.0
    %3604 = vmatpush1.msra.mxu0 0.0
    %3605 = vmatprep.subr.mxu0 0.0
    %3606 = vmatpush1.msra.mxu0 0.0
    %3607 = vmatprep.mubr.f32.mxu0 0.0
    %3608 = vmatmul.mubr.f32.gmra.mrb[0].mxu0 %v3541
    %v3609 = vpop.f32.mrb[0].mxu0
    %v3610 = vadd.f32 0.0, %v3609
    %v3611 = vpop.f32.mrb[0].mxu0
    %3612 = vdwg.mxu0
    %v3613 = vadd.f32 %v3456, %v3610
    %v3614 = vadd.f32 %v3459, %v3147
    %3615 = vrot.lane.b32.xlu0 %v2395, 72
    %v3616 = vpop.permute.xlu0 %3615
    %3617 = vrot.lane.b32.xlu0 %v2400, 72
    %v3618 = vpop.permute.xlu0 %3617
    %v3621 = vsel %vm3064, %v3148, 0
    %v3623 = vsel %vm2211, %v3618, 0
    %3625 = vmatprep.subr.mxu0 0.0
    %3626 = vmatpush1.msra.mxu0 %v3616
    %3627 = vmatprep.subr.mxu0 0.0
    %3628 = vmatpush1.msra.mxu0 %v3623
    %3629 = vmatprep.subr.mxu0 0.0
    %3630 = vmatpush1.msra.mxu0 0.0
    %3631 = vmatprep.subr.mxu0 0.0
    %3632 = vmatpush1.msra.mxu0 0.0
    %3633 = vmatprep.subr.mxu0 0.0
    %3634 = vmatpush1.msra.mxu0 0.0
    %3635 = vmatprep.subr.mxu0 0.0
    %3636 = vmatpush1.msra.mxu0 0.0
    %3637 = vmatprep.subr.mxu0 0.0
    %3638 = vmatpush1.msra.mxu0 0.0
    %3639 = vmatprep.subr.mxu0 0.0
    %3640 = vmatpush1.msra.mxu0 0.0
    %3641 = vmatprep.subr.mxu0 0.0
    %3642 = vmatpush1.msra.mxu0 0.0
    %3643 = vmatprep.subr.mxu0 0.0
    %3644 = vmatpush1.msra.mxu0 0.0
    %3645 = vmatprep.subr.mxu0 0.0
    %3646 = vmatpush1.msra.mxu0 0.0
    %3647 = vmatprep.subr.mxu0 0.0
    %3648 = vmatpush1.msra.mxu0 0.0
    %3649 = vmatprep.subr.mxu0 0.0
    %3650 = vmatpush1.msra.mxu0 0.0
    %3651 = vmatprep.subr.mxu0 0.0
    %3652 = vmatpush1.msra.mxu0 0.0
    %3653 = vmatprep.subr.mxu0 0.0
    %3654 = vmatpush1.msra.mxu0 0.0
    %3655 = vmatprep.subr.mxu0 0.0
    %3656 = vmatpush1.msra.mxu0 0.0
    %3657 = vmatprep.subr.mxu0 0.0
    %3658 = vmatpush1.msra.mxu0 0.0
    %3659 = vmatprep.subr.mxu0 0.0
    %3660 = vmatpush1.msra.mxu0 0.0
    %3661 = vmatprep.subr.mxu0 0.0
    %3662 = vmatpush1.msra.mxu0 0.0
    %3663 = vmatprep.subr.mxu0 0.0
    %3664 = vmatpush1.msra.mxu0 0.0
    %3665 = vmatprep.subr.mxu0 0.0
    %3666 = vmatpush1.msra.mxu0 0.0
    %3667 = vmatprep.subr.mxu0 0.0
    %3668 = vmatpush1.msra.mxu0 0.0
    %3669 = vmatprep.subr.mxu0 0.0
    %3670 = vmatpush1.msra.mxu0 0.0
    %3671 = vmatprep.subr.mxu0 0.0
    %3672 = vmatpush1.msra.mxu0 0.0
    %3673 = vmatprep.subr.mxu0 0.0
    %3674 = vmatpush1.msra.mxu0 0.0
    %3675 = vmatprep.subr.mxu0 0.0
    %3676 = vmatpush1.msra.mxu0 0.0
    %3677 = vmatprep.subr.mxu0 0.0
    %3678 = vmatpush1.msra.mxu0 0.0
    %3679 = vmatprep.subr.mxu0 0.0
    %3680 = vmatpush1.msra.mxu0 0.0
    %3681 = vmatprep.subr.mxu0 0.0
    %3682 = vmatpush1.msra.mxu0 0.0
    %3683 = vmatprep.subr.mxu0 0.0
    %3684 = vmatpush1.msra.mxu0 0.0
    %3685 = vmatprep.subr.mxu0 0.0
    %3686 = vmatpush1.msra.mxu0 0.0
    %3687 = vmatprep.subr.mxu0 0.0
    %3688 = vmatpush1.msra.mxu0 0.0
    %3689 = vmatprep.mubr.f32.mxu0 0.0
    %3690 = vmatmul.mubr.f32.gmra.mrb[0].mxu0 %v3621
    %v3691 = vpop.f32.mrb[0].mxu0
    %v3692 = vadd.f32 0.0, %v3691
    %v3693 = vpop.f32.mrb[0].mxu0
    %3694 = vdwg.mxu0
    %v3696 = vsel %vm251, %v3692, 0
    %3698 = vmatprep.subr.mxu0 0.0
    %3699 = vmatpush1.msra.mxu0 %v2411
    %3700 = vmatprep.subr.mxu0 0.0
    %3701 = vmatpush1.msra.mxu0 0.0
    %3702 = vmatprep.subr.mxu0 0.0
    %3703 = vmatpush1.msra.mxu0 0.0
    %3704 = vmatprep.subr.mxu0 0.0
    %3705 = vmatpush1.msra.mxu0 0.0
    %3706 = vmatprep.subr.mxu0 0.0
    %3707 = vmatpush1.msra.mxu0 0.0
    %3708 = vmatprep.subr.mxu0 0.0
    %3709 = vmatpush1.msra.mxu0 0.0
    %3710 = vmatprep.subr.mxu0 0.0
    %3711 = vmatpush1.msra.mxu0 0.0
    %3712 = vmatprep.subr.mxu0 0.0
    %3713 = vmatpush1.msra.mxu0 0.0
    %3714 = vmatprep.subr.mxu0 0.0
    %3715 = vmatpush1.msra.mxu0 0.0
    %3716 = vmatprep.subr.mxu0 0.0
    %3717 = vmatpush1.msra.mxu0 0.0
    %3718 = vmatprep.subr.mxu0 0.0
    %3719 = vmatpush1.msra.mxu0 0.0
    %3720 = vmatprep.subr.mxu0 0.0
    %3721 = vmatpush1.msra.mxu0 0.0
    %3722 = vmatprep.subr.mxu0 0.0
    %3723 = vmatpush1.msra.mxu0 0.0
    %3724 = vmatprep.subr.mxu0 0.0
    %3725 = vmatpush1.msra.mxu0 0.0
    %3726 = vmatprep.subr.mxu0 0.0
    %3727 = vmatpush1.msra.mxu0 0.0
    %3728 = vmatprep.subr.mxu0 0.0
    %3729 = vmatpush1.msra.mxu0 0.0
    %3730 = vmatprep.subr.mxu0 0.0
    %3731 = vmatpush1.msra.mxu0 0.0
    %3732 = vmatprep.subr.mxu0 0.0
    %3733 = vmatpush1.msra.mxu0 0.0
    %3734 = vmatprep.subr.mxu0 0.0
    %3735 = vmatpush1.msra.mxu0 0.0
    %3736 = vmatprep.subr.mxu0 0.0
    %3737 = vmatpush1.msra.mxu0 0.0
    %3738 = vmatprep.subr.mxu0 0.0
    %3739 = vmatpush1.msra.mxu0 0.0
    %3740 = vmatprep.subr.mxu0 0.0
    %3741 = vmatpush1.msra.mxu0 0.0
    %3742 = vmatprep.subr.mxu0 0.0
    %3743 = vmatpush1.msra.mxu0 0.0
    %3744 = vmatprep.subr.mxu0 0.0
    %3745 = vmatpush1.msra.mxu0 0.0
    %3746 = vmatprep.subr.mxu0 0.0
    %3747 = vmatpush1.msra.mxu0 0.0
    %3748 = vmatprep.subr.mxu0 0.0
    %3749 = vmatpush1.msra.mxu0 0.0
    %3750 = vmatprep.subr.mxu0 0.0
    %3751 = vmatpush1.msra.mxu0 0.0
    %3752 = vmatprep.subr.mxu0 0.0
    %3753 = vmatpush1.msra.mxu0 0.0
    %3754 = vmatprep.subr.mxu0 0.0
    %3755 = vmatpush1.msra.mxu0 0.0
    %3756 = vmatprep.subr.mxu0 0.0
    %3757 = vmatpush1.msra.mxu0 0.0
    %3758 = vmatprep.subr.mxu0 0.0
    %3759 = vmatpush1.msra.mxu0 0.0
    %3760 = vmatprep.subr.mxu0 0.0
    %3761 = vmatpush1.msra.mxu0 0.0
    %3762 = vmatprep.mubr.f32.mxu0 0.0
    %3763 = vmatmul.mubr.f32.gmra.mrb[0].mxu0 %v3696
    %v3764 = vpop.f32.mrb[0].mxu0
    %v3765 = vadd.f32 0.0, %v3764
    %v3766 = vpop.f32.mrb[0].mxu0
    %3767 = vdwg.mxu0
    %v3768 = vadd.f32 %v3613, %v3765
    %v3769 = vadd.f32 %v3614, %v3148
    %v3770 = vmul.f32 %v3769, 0.25
    %3771 = vst.msk [vmem:[#allocation15] sm:$0xff] %vm3064, %v3770
    %3772 = vrot.lane.b32.xlu0 %v2740, 96
    %v3773 = vpop.permute.xlu0 %3772
    %3774 = vrot.lane.b32.xlu0 %v2739, 96
    %v3775 = vpop.permute.xlu0 %3774
    %v3778 = vsel %vm3064, %v3149, 0
    %v3780 = vsel %vm2211, %v3775, 0
    %3782 = vmatprep.subr.mxu0 0.0
    %3783 = vmatpush1.msra.mxu0 %v3773
    %3784 = vmatprep.subr.mxu0 0.0
    %3785 = vmatpush1.msra.mxu0 %v3780
    %3786 = vmatprep.subr.mxu0 0.0
    %3787 = vmatpush1.msra.mxu0 0.0
    %3788 = vmatprep.subr.mxu0 0.0
    %3789 = vmatpush1.msra.mxu0 0.0
    %3790 = vmatprep.subr.mxu0 0.0
    %3791 = vmatpush1.msra.mxu0 0.0
    %3792 = vmatprep.subr.mxu0 0.0
    %3793 = vmatpush1.msra.mxu0 0.0
    %3794 = vmatprep.subr.mxu0 0.0
    %3795 = vmatpush1.msra.mxu0 0.0
    %3796 = vmatprep.subr.mxu0 0.0
    %3797 = vmatpush1.msra.mxu0 0.0
    %3798 = vmatprep.subr.mxu0 0.0
    %3799 = vmatpush1.msra.mxu0 0.0
    %3800 = vmatprep.subr.mxu0 0.0
    %3801 = vmatpush1.msra.mxu0 0.0
    %3802 = vmatprep.subr.mxu0 0.0
    %3803 = vmatpush1.msra.mxu0 0.0
    %3804 = vmatprep.subr.mxu0 0.0
    %3805 = vmatpush1.msra.mxu0 0.0
    %3806 = vmatprep.subr.mxu0 0.0
    %3807 = vmatpush1.msra.mxu0 0.0
    %3808 = vmatprep.subr.mxu0 0.0
    %3809 = vmatpush1.msra.mxu0 0.0
    %3810 = vmatprep.subr.mxu0 0.0
    %3811 = vmatpush1.msra.mxu0 0.0
    %3812 = vmatprep.subr.mxu0 0.0
    %3813 = vmatpush1.msra.mxu0 0.0
    %3814 = vmatprep.subr.mxu0 0.0
    %3815 = vmatpush1.msra.mxu0 0.0
    %3816 = vmatprep.subr.mxu0 0.0
    %3817 = vmatpush1.msra.mxu0 0.0
    %3818 = vmatprep.subr.mxu0 0.0
    %3819 = vmatpush1.msra.mxu0 0.0
    %3820 = vmatprep.subr.mxu0 0.0
    %3821 = vmatpush1.msra.mxu0 0.0
    %3822 = vmatprep.subr.mxu0 0.0
    %3823 = vmatpush1.msra.mxu0 0.0
    %3824 = vmatprep.subr.mxu0 0.0
    %3825 = vmatpush1.msra.mxu0 0.0
    %3826 = vmatprep.subr.mxu0 0.0
    %3827 = vmatpush1.msra.mxu0 0.0
    %3828 = vmatprep.subr.mxu0 0.0
    %3829 = vmatpush1.msra.mxu0 0.0
    %3830 = vmatprep.subr.mxu0 0.0
    %3831 = vmatpush1.msra.mxu0 0.0
    %3832 = vmatprep.subr.mxu0 0.0
    %3833 = vmatpush1.msra.mxu0 0.0
    %3834 = vmatprep.subr.mxu0 0.0
    %3835 = vmatpush1.msra.mxu0 0.0
    %3836 = vmatprep.subr.mxu0 0.0
    %3837 = vmatpush1.msra.mxu0 0.0
    %3838 = vmatprep.subr.mxu0 0.0
    %3839 = vmatpush1.msra.mxu0 0.0
    %3840 = vmatprep.subr.mxu0 0.0
    %3841 = vmatpush1.msra.mxu0 0.0
    %3842 = vmatprep.subr.mxu0 0.0
    %3843 = vmatpush1.msra.mxu0 0.0
    %3844 = vmatprep.subr.mxu0 0.0
    %3845 = vmatpush1.msra.mxu0 0.0
    %3846 = vmatprep.mubr.f32.mxu0 0.0
    %3847 = vmatmul.mubr.f32.gmra.mrb[0].mxu0 %v3778
    %v3848 = vpop.f32.mrb[0].mxu0
    %v3849 = vadd.f32 0.0, %v3848
    %v3850 = vpop.f32.mrb[0].mxu0
    %3851 = vdwg.mxu0
    %3852 = vrot.lane.b32.xlu0 %v2740, 88
    %v3853 = vpop.permute.xlu0 %3852
    %3854 = vrot.lane.b32.xlu0 %v2739, 88
    %v3855 = vpop.permute.xlu0 %3854
    %v3858 = vsel %vm3064, %v3150, 0
    %v3860 = vsel %vm2211, %v3855, 0
    %3862 = vmatprep.subr.mxu0 0.0
    %3863 = vmatpush1.msra.mxu0 %v3853
    %3864 = vmatprep.subr.mxu0 0.0
    %3865 = vmatpush1.msra.mxu0 %v3860
    %3866 = vmatprep.subr.mxu0 0.0
    %3867 = vmatpush1.msra.mxu0 0.0
    %3868 = vmatprep.subr.mxu0 0.0
    %3869 = vmatpush1.msra.mxu0 0.0
    %3870 = vmatprep.subr.mxu0 0.0
    %3871 = vmatpush1.msra.mxu0 0.0
    %3872 = vmatprep.subr.mxu0 0.0
    %3873 = vmatpush1.msra.mxu0 0.0
    %3874 = vmatprep.subr.mxu0 0.0
    %3875 = vmatpush1.msra.mxu0 0.0
    %3876 = vmatprep.subr.mxu0 0.0
    %3877 = vmatpush1.msra.mxu0 0.0
    %3878 = vmatprep.subr.mxu0 0.0
    %3879 = vmatpush1.msra.mxu0 0.0
    %3880 = vmatprep.subr.mxu0 0.0
    %3881 = vmatpush1.msra.mxu0 0.0
    %3882 = vmatprep.subr.mxu0 0.0
    %3883 = vmatpush1.msra.mxu0 0.0
    %3884 = vmatprep.subr.mxu0 0.0
    %3885 = vmatpush1.msra.mxu0 0.0
    %3886 = vmatprep.subr.mxu0 0.0
    %3887 = vmatpush1.msra.mxu0 0.0
    %3888 = vmatprep.subr.mxu0 0.0
    %3889 = vmatpush1.msra.mxu0 0.0
    %3890 = vmatprep.subr.mxu0 0.0
    %3891 = vmatpush1.msra.mxu0 0.0
    %3892 = vmatprep.subr.mxu0 0.0
    %3893 = vmatpush1.msra.mxu0 0.0
    %3894 = vmatprep.subr.mxu0 0.0
    %3895 = vmatpush1.msra.mxu0 0.0
    %3896 = vmatprep.subr.mxu0 0.0
    %3897 = vmatpush1.msra.mxu0 0.0
    %3898 = vmatprep.subr.mxu0 0.0
    %3899 = vmatpush1.msra.mxu0 0.0
    %3900 = vmatprep.subr.mxu0 0.0
    %3901 = vmatpush1.msra.mxu0 0.0
    %3902 = vmatprep.subr.mxu0 0.0
    %3903 = vmatpush1.msra.mxu0 0.0
    %3904 = vmatprep.subr.mxu0 0.0
    %3905 = vmatpush1.msra.mxu0 0.0
    %3906 = vmatprep.subr.mxu0 0.0
    %3907 = vmatpush1.msra.mxu0 0.0
    %3908 = vmatprep.subr.mxu0 0.0
    %3909 = vmatpush1.msra.mxu0 0.0
    %3910 = vmatprep.subr.mxu0 0.0
    %3911 = vmatpush1.msra.mxu0 0.0
    %3912 = vmatprep.subr.mxu0 0.0
    %3913 = vmatpush1.msra.mxu0 0.0
    %3914 = vmatprep.subr.mxu0 0.0
    %3915 = vmatpush1.msra.mxu0 0.0
    %3916 = vmatprep.subr.mxu0 0.0
    %3917 = vmatpush1.msra.mxu0 0.0
    %3918 = vmatprep.subr.mxu0 0.0
    %3919 = vmatpush1.msra.mxu0 0.0
    %3920 = vmatprep.subr.mxu0 0.0
    %3921 = vmatpush1.msra.mxu0 0.0
    %3922 = vmatprep.subr.mxu0 0.0
    %3923 = vmatpush1.msra.mxu0 0.0
    %3924 = vmatprep.subr.mxu0 0.0
    %3925 = vmatpush1.msra.mxu0 0.0
    %3926 = vmatprep.mubr.f32.mxu0 0.0
    %3927 = vmatmul.mubr.f32.gmra.mrb[0].mxu0 %v3858
    %v3928 = vpop.f32.mrb[0].mxu0
    %v3929 = vadd.f32 0.0, %v3928
    %v3930 = vpop.f32.mrb[0].mxu0
    %3931 = vdwg.mxu0
    %v3933 = vsel %vm251, %v3929, 0
    %3935 = vmatprep.subr.mxu0 0.0
    %3936 = vmatpush1.msra.mxu0 %v2409
    %3937 = vmatprep.subr.mxu0 0.0
    %3938 = vmatpush1.msra.mxu0 0.0
    %3939 = vmatprep.subr.mxu0 0.0
    %3940 = vmatpush1.msra.mxu0 0.0
    %3941 = vmatprep.subr.mxu0 0.0
    %3942 = vmatpush1.msra.mxu0 0.0
    %3943 = vmatprep.subr.mxu0 0.0
    %3944 = vmatpush1.msra.mxu0 0.0
    %3945 = vmatprep.subr.mxu0 0.0
    %3946 = vmatpush1.msra.mxu0 0.0
    %3947 = vmatprep.subr.mxu0 0.0
    %3948 = vmatpush1.msra.mxu0 0.0
    %3949 = vmatprep.subr.mxu0 0.0
    %3950 = vmatpush1.msra.mxu0 0.0
    %3951 = vmatprep.subr.mxu0 0.0
    %3952 = vmatpush1.msra.mxu0 0.0
    %3953 = vmatprep.subr.mxu0 0.0
    %3954 = vmatpush1.msra.mxu0 0.0
    %3955 = vmatprep.subr.mxu0 0.0
    %3956 = vmatpush1.msra.mxu0 0.0
    %3957 = vmatprep.subr.mxu0 0.0
    %3958 = vmatpush1.msra.mxu0 0.0
    %3959 = vmatprep.subr.mxu0 0.0
    %3960 = vmatpush1.msra.mxu0 0.0
    %3961 = vmatprep.subr.mxu0 0.0
    %3962 = vmatpush1.msra.mxu0 0.0
    %3963 = vmatprep.subr.mxu0 0.0
    %3964 = vmatpush1.msra.mxu0 0.0
    %3965 = vmatprep.subr.mxu0 0.0
    %3966 = vmatpush1.msra.mxu0 0.0
    %3967 = vmatprep.subr.mxu0 0.0
    %3968 = vmatpush1.msra.mxu0 0.0
    %3969 = vmatprep.subr.mxu0 0.0
    %3970 = vmatpush1.msra.mxu0 0.0
    %3971 = vmatprep.subr.mxu0 0.0
    %3972 = vmatpush1.msra.mxu0 0.0
    %3973 = vmatprep.subr.mxu0 0.0
    %3974 = vmatpush1.msra.mxu0 0.0
    %3975 = vmatprep.subr.mxu0 0.0
    %3976 = vmatpush1.msra.mxu0 0.0
    %3977 = vmatprep.subr.mxu0 0.0
    %3978 = vmatpush1.msra.mxu0 0.0
    %3979 = vmatprep.subr.mxu0 0.0
    %3980 = vmatpush1.msra.mxu0 0.0
    %3981 = vmatprep.subr.mxu0 0.0
    %3982 = vmatpush1.msra.mxu0 0.0
    %3983 = vmatprep.subr.mxu0 0.0
    %3984 = vmatpush1.msra.mxu0 0.0
    %3985 = vmatprep.subr.mxu0 0.0
    %3986 = vmatpush1.msra.mxu0 0.0
    %3987 = vmatprep.subr.mxu0 0.0
    %3988 = vmatpush1.msra.mxu0 0.0
    %3989 = vmatprep.subr.mxu0 0.0
    %3990 = vmatpush1.msra.mxu0 0.0
    %3991 = vmatprep.subr.mxu0 0.0
    %3992 = vmatpush1.msra.mxu0 0.0
    %3993 = vmatprep.subr.mxu0 0.0
    %3994 = vmatpush1.msra.mxu0 0.0
    %3995 = vmatprep.subr.mxu0 0.0
    %3996 = vmatpush1.msra.mxu0 0.0
    %3997 = vmatprep.subr.mxu0 0.0
    %3998 = vmatpush1.msra.mxu0 0.0
    %3999 = vmatprep.mubr.f32.mxu0 0.0
    %4000 = vmatmul.mubr.f32.gmra.mrb[0].mxu0 %v3933
    %v4001 = vpop.f32.mrb[0].mxu0
    %v4002 = vadd.f32 0.0, %v4001
    %v4003 = vpop.f32.mrb[0].mxu0
    %4004 = vdwg.mxu0
    %v4006 = vsel %vm251, %v3849, 0
    %4008 = vmatprep.subr.mxu0 0.0
    %4009 = vmatpush1.msra.mxu0 %v2408
    %4010 = vmatprep.subr.mxu0 0.0
    %4011 = vmatpush1.msra.mxu0 0.0
    %4012 = vmatprep.subr.mxu0 0.0
    %4013 = vmatpush1.msra.mxu0 0.0
    %4014 = vmatprep.subr.mxu0 0.0
    %4015 = vmatpush1.msra.mxu0 0.0
    %4016 = vmatprep.subr.mxu0 0.0
    %4017 = vmatpush1.msra.mxu0 0.0
    %4018 = vmatprep.subr.mxu0 0.0
    %4019 = vmatpush1.msra.mxu0 0.0
    %4020 = vmatprep.subr.mxu0 0.0
    %4021 = vmatpush1.msra.mxu0 0.0
    %4022 = vmatprep.subr.mxu0 0.0
    %4023 = vmatpush1.msra.mxu0 0.0
    %4024 = vmatprep.subr.mxu0 0.0
    %4025 = vmatpush1.msra.mxu0 0.0
    %4026 = vmatprep.subr.mxu0 0.0
    %4027 = vmatpush1.msra.mxu0 0.0
    %4028 = vmatprep.subr.mxu0 0.0
    %4029 = vmatpush1.msra.mxu0 0.0
    %4030 = vmatprep.subr.mxu0 0.0
    %4031 = vmatpush1.msra.mxu0 0.0
    %4032 = vmatprep.subr.mxu0 0.0
    %4033 = vmatpush1.msra.mxu0 0.0
    %4034 = vmatprep.subr.mxu0 0.0
    %4035 = vmatpush1.msra.mxu0 0.0
    %4036 = vmatprep.subr.mxu0 0.0
    %4037 = vmatpush1.msra.mxu0 0.0
    %4038 = vmatprep.subr.mxu0 0.0
    %4039 = vmatpush1.msra.mxu0 0.0
    %4040 = vmatprep.subr.mxu0 0.0
    %4041 = vmatpush1.msra.mxu0 0.0
    %4042 = vmatprep.subr.mxu0 0.0
    %4043 = vmatpush1.msra.mxu0 0.0
    %4044 = vmatprep.subr.mxu0 0.0
    %4045 = vmatpush1.msra.mxu0 0.0
    %4046 = vmatprep.subr.mxu0 0.0
    %4047 = vmatpush1.msra.mxu0 0.0
    %4048 = vmatprep.subr.mxu0 0.0
    %4049 = vmatpush1.msra.mxu0 0.0
    %4050 = vmatprep.subr.mxu0 0.0
    %4051 = vmatpush1.msra.mxu0 0.0
    %4052 = vmatprep.subr.mxu0 0.0
    %4053 = vmatpush1.msra.mxu0 0.0
    %4054 = vmatprep.subr.mxu0 0.0
    %4055 = vmatpush1.msra.mxu0 0.0
    %4056 = vmatprep.subr.mxu0 0.0
    %4057 = vmatpush1.msra.mxu0 0.0
    %4058 = vmatprep.subr.mxu0 0.0
    %4059 = vmatpush1.msra.mxu0 0.0
    %4060 = vmatprep.subr.mxu0 0.0
    %4061 = vmatpush1.msra.mxu0 0.0
    %4062 = vmatprep.subr.mxu0 0.0
    %4063 = vmatpush1.msra.mxu0 0.0
    %4064 = vmatprep.subr.mxu0 0.0
    %4065 = vmatpush1.msra.mxu0 0.0
    %4066 = vmatprep.subr.mxu0 0.0
    %4067 = vmatpush1.msra.mxu0 0.0
    %4068 = vmatprep.subr.mxu0 0.0
    %4069 = vmatpush1.msra.mxu0 0.0
    %4070 = vmatprep.subr.mxu0 0.0
    %4071 = vmatpush1.msra.mxu0 0.0
    %4072 = vmatprep.mubr.f32.mxu0 0.0
    %4073 = vmatmul.mubr.f32.gmra.mrb[0].mxu0 %v4006
    %v4074 = vpop.f32.mrb[0].mxu0
    %v4075 = vadd.f32 %v4002, %v4074
    %v4076 = vpop.f32.mrb[0].mxu0
    %4077 = vdwg.mxu0
    %v4078 = vadd.f32 %v3149, %v3150
    %4079 = vrot.lane.b32.xlu0 %v2740, 80
    %v4080 = vpop.permute.xlu0 %4079
    %4081 = vrot.lane.b32.xlu0 %v2739, 80
    %v4082 = vpop.permute.xlu0 %4081
    %v4085 = vsel %vm3064, %v3151, 0
    %v4087 = vsel %vm2211, %v4082, 0
    %4089 = vmatprep.subr.mxu0 0.0
    %4090 = vmatpush1.msra.mxu0 %v4080
    %4091 = vmatprep.subr.mxu0 0.0
    %4092 = vmatpush1.msra.mxu0 %v4087
    %4093 = vmatprep.subr.mxu0 0.0
    %4094 = vmatpush1.msra.mxu0 0.0
    %4095 = vmatprep.subr.mxu0 0.0
    %4096 = vmatpush1.msra.mxu0 0.0
    %4097 = vmatprep.subr.mxu0 0.0
    %4098 = vmatpush1.msra.mxu0 0.0
    %4099 = vmatprep.subr.mxu0 0.0
    %4100 = vmatpush1.msra.mxu0 0.0
    %4101 = vmatprep.subr.mxu0 0.0
    %4102 = vmatpush1.msra.mxu0 0.0
    %4103 = vmatprep.subr.mxu0 0.0
    %4104 = vmatpush1.msra.mxu0 0.0
    %4105 = vmatprep.subr.mxu0 0.0
    %4106 = vmatpush1.msra.mxu0 0.0
    %4107 = vmatprep.subr.mxu0 0.0
    %4108 = vmatpush1.msra.mxu0 0.0
    %4109 = vmatprep.subr.mxu0 0.0
    %4110 = vmatpush1.msra.mxu0 0.0
    %4111 = vmatprep.subr.mxu0 0.0
    %4112 = vmatpush1.msra.mxu0 0.0
    %4113 = vmatprep.subr.mxu0 0.0
    %4114 = vmatpush1.msra.mxu0 0.0
    %4115 = vmatprep.subr.mxu0 0.0
    %4116 = vmatpush1.msra.mxu0 0.0
    %4117 = vmatprep.subr.mxu0 0.0
    %4118 = vmatpush1.msra.mxu0 0.0
    %4119 = vmatprep.subr.mxu0 0.0
    %4120 = vmatpush1.msra.mxu0 0.0
    %4121 = vmatprep.subr.mxu0 0.0
    %4122 = vmatpush1.msra.mxu0 0.0
    %4123 = vmatprep.subr.mxu0 0.0
    %4124 = vmatpush1.msra.mxu0 0.0
    %4125 = vmatprep.subr.mxu0 0.0
    %4126 = vmatpush1.msra.mxu0 0.0
    %4127 = vmatprep.subr.mxu0 0.0
    %4128 = vmatpush1.msra.mxu0 0.0
    %4129 = vmatprep.subr.mxu0 0.0
    %4130 = vmatpush1.msra.mxu0 0.0
    %4131 = vmatprep.subr.mxu0 0.0
    %4132 = vmatpush1.msra.mxu0 0.0
    %4133 = vmatprep.subr.mxu0 0.0
    %4134 = vmatpush1.msra.mxu0 0.0
    %4135 = vmatprep.subr.mxu0 0.0
    %4136 = vmatpush1.msra.mxu0 0.0
    %4137 = vmatprep.subr.mxu0 0.0
    %4138 = vmatpush1.msra.mxu0 0.0
    %4139 = vmatprep.subr.mxu0 0.0
    %4140 = vmatpush1.msra.mxu0 0.0
    %4141 = vmatprep.subr.mxu0 0.0
    %4142 = vmatpush1.msra.mxu0 0.0
    %4143 = vmatprep.subr.mxu0 0.0
    %4144 = vmatpush1.msra.mxu0 0.0
    %4145 = vmatprep.subr.mxu0 0.0
    %4146 = vmatpush1.msra.mxu0 0.0
    %4147 = vmatprep.subr.mxu0 0.0
    %4148 = vmatpush1.msra.mxu0 0.0
    %4149 = vmatprep.subr.mxu0 0.0
    %4150 = vmatpush1.msra.mxu0 0.0
    %4151 = vmatprep.subr.mxu0 0.0
    %4152 = vmatpush1.msra.mxu0 0.0
    %4153 = vmatprep.mubr.f32.mxu0 0.0
    %4154 = vmatmul.mubr.f32.gmra.mrb[0].mxu0 %v4085
    %v4155 = vpop.f32.mrb[0].mxu0
    %v4156 = vadd.f32 0.0, %v4155
    %v4157 = vpop.f32.mrb[0].mxu0
    %4158 = vdwg.mxu0
    %v4160 = vsel %vm251, %v4156, 0
    %4162 = vmatprep.subr.mxu0 0.0
    %4163 = vmatpush1.msra.mxu0 %v2410
    %4164 = vmatprep.subr.mxu0 0.0
    %4165 = vmatpush1.msra.mxu0 0.0
    %4166 = vmatprep.subr.mxu0 0.0
    %4167 = vmatpush1.msra.mxu0 0.0
    %4168 = vmatprep.subr.mxu0 0.0
    %4169 = vmatpush1.msra.mxu0 0.0
    %4170 = vmatprep.subr.mxu0 0.0
    %4171 = vmatpush1.msra.mxu0 0.0
    %4172 = vmatprep.subr.mxu0 0.0
    %4173 = vmatpush1.msra.mxu0 0.0
    %4174 = vmatprep.subr.mxu0 0.0
    %4175 = vmatpush1.msra.mxu0 0.0
    %4176 = vmatprep.subr.mxu0 0.0
    %4177 = vmatpush1.msra.mxu0 0.0
    %4178 = vmatprep.subr.mxu0 0.0
    %4179 = vmatpush1.msra.mxu0 0.0
    %4180 = vmatprep.subr.mxu0 0.0
    %4181 = vmatpush1.msra.mxu0 0.0
    %4182 = vmatprep.subr.mxu0 0.0
    %4183 = vmatpush1.msra.mxu0 0.0
    %4184 = vmatprep.subr.mxu0 0.0
    %4185 = vmatpush1.msra.mxu0 0.0
    %4186 = vmatprep.subr.mxu0 0.0
    %4187 = vmatpush1.msra.mxu0 0.0
    %4188 = vmatprep.subr.mxu0 0.0
    %4189 = vmatpush1.msra.mxu0 0.0
    %4190 = vmatprep.subr.mxu0 0.0
    %4191 = vmatpush1.msra.mxu0 0.0
    %4192 = vmatprep.subr.mxu0 0.0
    %4193 = vmatpush1.msra.mxu0 0.0
    %4194 = vmatprep.subr.mxu0 0.0
    %4195 = vmatpush1.msra.mxu0 0.0
    %4196 = vmatprep.subr.mxu0 0.0
    %4197 = vmatpush1.msra.mxu0 0.0
    %4198 = vmatprep.subr.mxu0 0.0
    %4199 = vmatpush1.msra.mxu0 0.0
    %4200 = vmatprep.subr.mxu0 0.0
    %4201 = vmatpush1.msra.mxu0 0.0
    %4202 = vmatprep.subr.mxu0 0.0
    %4203 = vmatpush1.msra.mxu0 0.0
    %4204 = vmatprep.subr.mxu0 0.0
    %4205 = vmatpush1.msra.mxu0 0.0
    %4206 = vmatprep.subr.mxu0 0.0
    %4207 = vmatpush1.msra.mxu0 0.0
    %4208 = vmatprep.subr.mxu0 0.0
    %4209 = vmatpush1.msra.mxu0 0.0
    %4210 = vmatprep.subr.mxu0 0.0
    %4211 = vmatpush1.msra.mxu0 0.0
    %4212 = vmatprep.subr.mxu0 0.0
    %4213 = vmatpush1.msra.mxu0 0.0
    %4214 = vmatprep.subr.mxu0 0.0
    %4215 = vmatpush1.msra.mxu0 0.0
    %4216 = vmatprep.subr.mxu0 0.0
    %4217 = vmatpush1.msra.mxu0 0.0
    %4218 = vmatprep.subr.mxu0 0.0
    %4219 = vmatpush1.msra.mxu0 0.0
    %4220 = vmatprep.subr.mxu0 0.0
    %4221 = vmatpush1.msra.mxu0 0.0
    %4222 = vmatprep.subr.mxu0 0.0
    %4223 = vmatpush1.msra.mxu0 0.0
    %4224 = vmatprep.subr.mxu0 0.0
    %4225 = vmatpush1.msra.mxu0 0.0
    %4226 = vmatprep.mubr.f32.mxu0 0.0
    %4227 = vmatmul.mubr.f32.gmra.mrb[0].mxu0 %v4160
    %v4228 = vpop.f32.mrb[0].mxu0
    %v4229 = vadd.f32 0.0, %v4228
    %v4230 = vpop.f32.mrb[0].mxu0
    %4231 = vdwg.mxu0
    %v4232 = vadd.f32 %v4075, %v4229
    %v4233 = vadd.f32 %v4078, %v3151
    %4234 = vrot.lane.b32.xlu0 %v2740, 72
    %v4235 = vpop.permute.xlu0 %4234
    %4236 = vrot.lane.b32.xlu0 %v2739, 72
    %v4237 = vpop.permute.xlu0 %4236
    %v4240 = vsel %vm3064, %v3152, 0
    %v4242 = vsel %vm2211, %v4237, 0
    %4244 = vmatprep.subr.mxu0 0.0
    %4245 = vmatpush1.msra.mxu0 %v4235
    %4246 = vmatprep.subr.mxu0 0.0
    %4247 = vmatpush1.msra.mxu0 %v4242
    %4248 = vmatprep.subr.mxu0 0.0
    %4249 = vmatpush1.msra.mxu0 0.0
    %4250 = vmatprep.subr.mxu0 0.0
    %4251 = vmatpush1.msra.mxu0 0.0
    %4252 = vmatprep.subr.mxu0 0.0
    %4253 = vmatpush1.msra.mxu0 0.0
    %4254 = vmatprep.subr.mxu0 0.0
    %4255 = vmatpush1.msra.mxu0 0.0
    %4256 = vmatprep.subr.mxu0 0.0
    %4257 = vmatpush1.msra.mxu0 0.0
    %4258 = vmatprep.subr.mxu0 0.0
    %4259 = vmatpush1.msra.mxu0 0.0
    %4260 = vmatprep.subr.mxu0 0.0
    %4261 = vmatpush1.msra.mxu0 0.0
    %4262 = vmatprep.subr.mxu0 0.0
    %4263 = vmatpush1.msra.mxu0 0.0
    %4264 = vmatprep.subr.mxu0 0.0
    %4265 = vmatpush1.msra.mxu0 0.0
    %4266 = vmatprep.subr.mxu0 0.0
    %4267 = vmatpush1.msra.mxu0 0.0
    %4268 = vmatprep.subr.mxu0 0.0
    %4269 = vmatpush1.msra.mxu0 0.0
    %4270 = vmatprep.subr.mxu0 0.0
    %4271 = vmatpush1.msra.mxu0 0.0
    %4272 = vmatprep.subr.mxu0 0.0
    %4273 = vmatpush1.msra.mxu0 0.0
    %4274 = vmatprep.subr.mxu0 0.0
    %4275 = vmatpush1.msra.mxu0 0.0
    %4276 = vmatprep.subr.mxu0 0.0
    %4277 = vmatpush1.msra.mxu0 0.0
    %4278 = vmatprep.subr.mxu0 0.0
    %4279 = vmatpush1.msra.mxu0 0.0
    %4280 = vmatprep.subr.mxu0 0.0
    %4281 = vmatpush1.msra.mxu0 0.0
    %4282 = vmatprep.subr.mxu0 0.0
    %4283 = vmatpush1.msra.mxu0 0.0
    %4284 = vmatprep.subr.mxu0 0.0
    %4285 = vmatpush1.msra.mxu0 0.0
    %4286 = vmatprep.subr.mxu0 0.0
    %4287 = vmatpush1.msra.mxu0 0.0
    %4288 = vmatprep.subr.mxu0 0.0
    %4289 = vmatpush1.msra.mxu0 0.0
    %4290 = vmatprep.subr.mxu0 0.0
    %4291 = vmatpush1.msra.mxu0 0.0
    %4292 = vmatprep.subr.mxu0 0.0
    %4293 = vmatpush1.msra.mxu0 0.0
    %4294 = vmatprep.subr.mxu0 0.0
    %4295 = vmatpush1.msra.mxu0 0.0
    %4296 = vmatprep.subr.mxu0 0.0
    %4297 = vmatpush1.msra.mxu0 0.0
    %4298 = vmatprep.subr.mxu0 0.0
    %4299 = vmatpush1.msra.mxu0 0.0
    %4300 = vmatprep.subr.mxu0 0.0
    %4301 = vmatpush1.msra.mxu0 0.0
    %4302 = vmatprep.subr.mxu0 0.0
    %4303 = vmatpush1.msra.mxu0 0.0
    %4304 = vmatprep.subr.mxu0 0.0
    %4305 = vmatpush1.msra.mxu0 0.0
    %4306 = vmatprep.subr.mxu0 0.0
    %4307 = vmatpush1.msra.mxu0 0.0
    %4308 = vmatprep.mubr.f32.mxu0 0.0
    %4309 = vmatmul.mubr.f32.gmra.mrb[0].mxu0 %v4240
    %v4310 = vpop.f32.mrb[0].mxu0
    %v4311 = vadd.f32 0.0, %v4310
    %v4312 = vpop.f32.mrb[0].mxu0
    %4313 = vdwg.mxu0
    %v4315 = vsel %vm251, %v4311, 0
    %4317 = vmatprep.subr.mxu0 0.0
    %4318 = vmatpush1.msra.mxu0 %v2411
    %4319 = vmatprep.subr.mxu0 0.0
    %4320 = vmatpush1.msra.mxu0 0.0
    %4321 = vmatprep.subr.mxu0 0.0
    %4322 = vmatpush1.msra.mxu0 0.0
    %4323 = vmatprep.subr.mxu0 0.0
    %4324 = vmatpush1.msra.mxu0 0.0
    %4325 = vmatprep.subr.mxu0 0.0
    %4326 = vmatpush1.msra.mxu0 0.0
    %4327 = vmatprep.subr.mxu0 0.0
    %4328 = vmatpush1.msra.mxu0 0.0
    %4329 = vmatprep.subr.mxu0 0.0
    %4330 = vmatpush1.msra.mxu0 0.0
    %4331 = vmatprep.subr.mxu0 0.0
    %4332 = vmatpush1.msra.mxu0 0.0
    %4333 = vmatprep.subr.mxu0 0.0
    %4334 = vmatpush1.msra.mxu0 0.0
    %4335 = vmatprep.subr.mxu0 0.0
    %4336 = vmatpush1.msra.mxu0 0.0
    %4337 = vmatprep.subr.mxu0 0.0
    %4338 = vmatpush1.msra.mxu0 0.0
    %4339 = vmatprep.subr.mxu0 0.0
    %4340 = vmatpush1.msra.mxu0 0.0
    %4341 = vmatprep.subr.mxu0 0.0
    %4342 = vmatpush1.msra.mxu0 0.0
    %4343 = vmatprep.subr.mxu0 0.0
    %4344 = vmatpush1.msra.mxu0 0.0
    %4345 = vmatprep.subr.mxu0 0.0
    %4346 = vmatpush1.msra.mxu0 0.0
    %4347 = vmatprep.subr.mxu0 0.0
    %4348 = vmatpush1.msra.mxu0 0.0
    %4349 = vmatprep.subr.mxu0 0.0
    %4350 = vmatpush1.msra.mxu0 0.0
    %4351 = vmatprep.subr.mxu0 0.0
    %4352 = vmatpush1.msra.mxu0 0.0
    %4353 = vmatprep.subr.mxu0 0.0
    %4354 = vmatpush1.msra.mxu0 0.0
    %4355 = vmatprep.subr.mxu0 0.0
    %4356 = vmatpush1.msra.mxu0 0.0
    %4357 = vmatprep.subr.mxu0 0.0
    %4358 = vmatpush1.msra.mxu0 0.0
    %4359 = vmatprep.subr.mxu0 0.0
    %4360 = vmatpush1.msra.mxu0 0.0
    %4361 = vmatprep.subr.mxu0 0.0
    %4362 = vmatpush1.msra.mxu0 0.0
    %4363 = vmatprep.subr.mxu0 0.0
    %4364 = vmatpush1.msra.mxu0 0.0
    %4365 = vmatprep.subr.mxu0 0.0
    %4366 = vmatpush1.msra.mxu0 0.0
    %4367 = vmatprep.subr.mxu0 0.0
    %4368 = vmatpush1.msra.mxu0 0.0
    %4369 = vmatprep.subr.mxu0 0.0
    %4370 = vmatpush1.msra.mxu0 0.0
    %4371 = vmatprep.subr.mxu0 0.0
    %4372 = vmatpush1.msra.mxu0 0.0
    %4373 = vmatprep.subr.mxu0 0.0
    %4374 = vmatpush1.msra.mxu0 0.0
    %4375 = vmatprep.subr.mxu0 0.0
    %4376 = vmatpush1.msra.mxu0 0.0
    %4377 = vmatprep.subr.mxu0 0.0
    %4378 = vmatpush1.msra.mxu0 0.0
    %4379 = vmatprep.subr.mxu0 0.0
    %4380 = vmatpush1.msra.mxu0 0.0
    %4381 = vmatprep.mubr.f32.mxu0 0.0
    %4382 = vmatmul.mubr.f32.gmra.mrb[0].mxu0 %v4315
    %v4383 = vpop.f32.mrb[0].mxu0
    %v4384 = vadd.f32 0.0, %v4383
    %v4385 = vpop.f32.mrb[0].mxu0
    %4386 = vdwg.mxu0
    %v4387 = vadd.f32 %v4232, %v4384
    %v4388 = vadd.f32 %v4233, %v3152
    %v4389 = vmul.f32 %v4388, 0.25
    %s4390 = scalar_lea.vmem [#allocation15], 8
    %4391 = vst.msk [vmem:[%s4390] sm:$0xff] %vm3064, %v4389
    %v4392 = vlaneseq
    %v4393 = vshrl.u32 %v4392, 7
    %v4394 = vsub.s32 4, %v4393
    %v4395 = vrot.slane %v146, %v4394
    %v4396 = vadd.f32 %v3768, %v4395
    %v4397 = vadd.f32 %v4387, %v4395
    %v4398 = vadd.f32 %v4396, %v2200
    %v4399 = vadd.f32 %v4397, %v2201
    %v4400 = vsel %vm162, %v4398, 0.0
    %4401 = vadd.xlane.f32.xlu0 %v4400
    %v4402 = vpop.xlane.xlu0 %4401
    %v4403 = vsel %vm162, %v4399, 0.0
    %4404 = vadd.xlane.f32.xlu0 %v4403
    %v4405 = vpop.xlane.xlu0 %4404
    %v4406 = vmul.f32 %v4402, %v2169
    %v4407 = vmul.f32 %v4405, %v2169
    %v4408 = vsub.f32 %v4398, %v4406
    %v4409 = vsub.f32 %v4399, %v4407
    %v4410 = vmul.f32 %v4408, %v4408
    %v4411 = vmul.f32 %v4409, %v4409
    %v4412 = vsel %vm162, %v4410, 0.0
    %4413 = vadd.xlane.f32.xlu0 %v4412
    %v4414 = vpop.xlane.xlu0 %4413
    %v4415 = vsel %vm162, %v4411, 0.0
    %4416 = vadd.xlane.f32.xlu0 %v4415
    %v4417 = vpop.xlane.xlu0 %4416
    %v4418 = vmul.f32 %v4414, %v2169
    %v4419 = vmul.f32 %v4417, %v2169
    %v4420 = vadd.f32 %v4418, 1e-05
    %v4421 = vadd.f32 %v4419, 1e-05
    %v4422 = vrsqrt.pop %v4420
    %v4423 = vrsqrt.pop %v4421
    %v4424 = vmul.f32 %v4408, %v4422
    %v4425 = vmul.f32 %v4409, %v4423
    %v4426 = vlaneseq
    %v4427 = vshrl.u32 %v4426, 7
    %v4428 = vsub.s32 5, %v4427
    %v4429 = vrot.slane %v146, %v4428
    %v4430 = vmul.f32 %v4424, %v4429
    %v4431 = vmul.f32 %v4425, %v4429
    %v4432 = vlaneseq
    %v4433 = vshrl.u32 %v4432, 7
    %v4434 = vsub.s32 6, %v4433
    %v4435 = vrot.slane %v146, %v4434
    %v4436 = vadd.f32 %v4430, %v4435
    %v4437 = vadd.f32 %v4431, %v4435
    %v4438 = vld [vmem:[#allocation7] sm:$0xff]
    %v4439 = vld [vmem:[#allocation7 + $0x8] sm:$0xff]
    %vm4440 = vcmask 130048
    %v4442 = vsel %vm4440, %v4438, 0
    %v4445 = vsel %vm4440, %v4439, 0
    %4447 = vmatprep.subr.mxu0 0.0
    %4448 = vmatpush1.msra.mxu0 %v4436
    %4449 = vmatprep.subr.mxu0 0.0
    %4450 = vmatpush1.msra.mxu0 %v4437
    %4451 = vmatprep.subr.mxu0 0.0
    %4452 = vmatpush1.msra.mxu0 0.0
    %4453 = vmatprep.subr.mxu0 0.0
    %4454 = vmatpush1.msra.mxu0 0.0
    %4455 = vmatprep.subr.mxu0 0.0
    %4456 = vmatpush1.msra.mxu0 0.0
    %4457 = vmatprep.subr.mxu0 0.0
    %4458 = vmatpush1.msra.mxu0 0.0
    %4459 = vmatprep.subr.mxu0 0.0
    %4460 = vmatpush1.msra.mxu0 0.0
    %4461 = vmatprep.subr.mxu0 0.0
    %4462 = vmatpush1.msra.mxu0 0.0
    %4463 = vmatprep.subr.mxu0 0.0
    %4464 = vmatpush1.msra.mxu0 0.0
    %4465 = vmatprep.subr.mxu0 0.0
    %4466 = vmatpush1.msra.mxu0 0.0
    %4467 = vmatprep.subr.mxu0 0.0
    %4468 = vmatpush1.msra.mxu0 0.0
    %4469 = vmatprep.subr.mxu0 0.0
    %4470 = vmatpush1.msra.mxu0 0.0
    %4471 = vmatprep.subr.mxu0 0.0
    %4472 = vmatpush1.msra.mxu0 0.0
    %4473 = vmatprep.subr.mxu0 0.0
    %4474 = vmatpush1.msra.mxu0 0.0
    %4475 = vmatprep.subr.mxu0 0.0
    %4476 = vmatpush1.msra.mxu0 0.0
    %4477 = vmatprep.subr.mxu0 0.0
    %4478 = vmatpush1.msra.mxu0 0.0
    %4479 = vmatprep.subr.mxu0 0.0
    %4480 = vmatpush1.msra.mxu0 0.0
    %4481 = vmatprep.subr.mxu0 0.0
    %4482 = vmatpush1.msra.mxu0 0.0
    %4483 = vmatprep.subr.mxu0 0.0
    %4484 = vmatpush1.msra.mxu0 0.0
    %4485 = vmatprep.subr.mxu0 0.0
    %4486 = vmatpush1.msra.mxu0 0.0
    %4487 = vmatprep.subr.mxu0 0.0
    %4488 = vmatpush1.msra.mxu0 0.0
    %4489 = vmatprep.subr.mxu0 0.0
    %4490 = vmatpush1.msra.mxu0 0.0
    %4491 = vmatprep.subr.mxu0 0.0
    %4492 = vmatpush1.msra.mxu0 0.0
    %4493 = vmatprep.subr.mxu0 0.0
    %4494 = vmatpush1.msra.mxu0 0.0
    %4495 = vmatprep.subr.mxu0 0.0
    %4496 = vmatpush1.msra.mxu0 0.0
    %4497 = vmatprep.subr.mxu0 0.0
    %4498 = vmatpush1.msra.mxu0 0.0
    %4499 = vmatprep.subr.mxu0 0.0
    %4500 = vmatpush1.msra.mxu0 0.0
    %4501 = vmatprep.subr.mxu0 0.0
    %4502 = vmatpush1.msra.mxu0 0.0
    %4503 = vmatprep.subr.mxu0 0.0
    %4504 = vmatpush1.msra.mxu0 0.0
    %4505 = vmatprep.subr.mxu0 0.0
    %4506 = vmatpush1.msra.mxu0 0.0
    %4507 = vmatprep.subr.mxu0 0.0
    %4508 = vmatpush1.msra.mxu0 0.0
    %4509 = vmatprep.subr.mxu0 0.0
    %4510 = vmatpush1.msra.mxu0 0.0
    %4511 = vmatprep.mubr.f32.mxu0 0.0
    %4512 = vmatmul.mubr.f32.gmra.mrb[0].mxu0 %v4442
    %v4513 = vpop.f32.mrb[0].mxu0
    %v4514 = vadd.f32 0.0, %v4513
    %v4515 = vpop.f32.mrb[0].mxu0
    %4516 = vmatprep.mubr.f32.mxu0 0.0
    %4517 = vmatmul.mubr.f32.gmra.mrb[0].mxu0 %v4445
    %v4518 = vpop.f32.mrb[0].mxu0
    %v4519 = vadd.f32 0.0, %v4518
    %v4520 = vpop.f32.mrb[0].mxu0
    %4521 = vdwg.mxu0
    %v4522 = vld [vmem:[#allocation11] sm:$0xff]
    %v4523 = vld [vmem:[#allocation11 + $0x8] sm:$0xff]
    %v4524 = vld [vmem:[#allocation11 + $0x10] sm:$0xff]
    %v4525 = vld [vmem:[#allocation11 + $0x18] sm:$0xff]
    %v4526 = vld [vmem:[%s11] sm:$0x1]
    %v4528 = vlaneseq
    %v4529 = vshrl.u32 %v4528, 7
    %v4530 = vsub.s32 0, %v4529
    %v4531 = vrot.slane %v4526, %v4530
    %v4534 = vsel %vm162, %v4514, 0
    %v4537 = vsel %vm162, %v4519, 0
    %4539 = vmatprep.subr.mxu0 0.0
    %4540 = vmatpush1.msra.mxu0 %v4522
    %4541 = vmatprep.subr.mxu0 0.0
    %4542 = vmatpush1.msra.mxu0 %v4523
    %4543 = vmatprep.subr.mxu0 0.0
    %4544 = vmatpush1.msra.mxu0 %v4524
    %4545 = vmatprep.subr.mxu0 0.0
    %4546 = vmatpush1.msra.mxu0 %v4525
    %4547 = vmatprep.subr.mxu0 0.0
    %4548 = vmatpush1.msra.mxu0 0.0
    %4549 = vmatprep.subr.mxu0 0.0
    %4550 = vmatpush1.msra.mxu0 0.0
    %4551 = vmatprep.subr.mxu0 0.0
    %4552 = vmatpush1.msra.mxu0 0.0
    %4553 = vmatprep.subr.mxu0 0.0
    %4554 = vmatpush1.msra.mxu0 0.0
    %4555 = vmatprep.subr.mxu0 0.0
    %4556 = vmatpush1.msra.mxu0 0.0
    %4557 = vmatprep.subr.mxu0 0.0
    %4558 = vmatpush1.msra.mxu0 0.0
    %4559 = vmatprep.subr.mxu0 0.0
    %4560 = vmatpush1.msra.mxu0 0.0
    %4561 = vmatprep.subr.mxu0 0.0
    %4562 = vmatpush1.msra.mxu0 0.0
    %4563 = vmatprep.subr.mxu0 0.0
    %4564 = vmatpush1.msra.mxu0 0.0
    %4565 = vmatprep.subr.mxu0 0.0
    %4566 = vmatpush1.msra.mxu0 0.0
    %4567 = vmatprep.subr.mxu0 0.0
    %4568 = vmatpush1.msra.mxu0 0.0
    %4569 = vmatprep.subr.mxu0 0.0
    %4570 = vmatpush1.msra.mxu0 0.0
    %4571 = vmatprep.subr.mxu0 0.0
    %4572 = vmatpush1.msra.mxu0 0.0
    %4573 = vmatprep.subr.mxu0 0.0
    %4574 = vmatpush1.msra.mxu0 0.0
    %4575 = vmatprep.subr.mxu0 0.0
    %4576 = vmatpush1.msra.mxu0 0.0
    %4577 = vmatprep.subr.mxu0 0.0
    %4578 = vmatpush1.msra.mxu0 0.0
    %4579 = vmatprep.subr.mxu0 0.0
    %4580 = vmatpush1.msra.mxu0 0.0
    %4581 = vmatprep.subr.mxu0 0.0
    %4582 = vmatpush1.msra.mxu0 0.0
    %4583 = vmatprep.subr.mxu0 0.0
    %4584 = vmatpush1.msra.mxu0 0.0
    %4585 = vmatprep.subr.mxu0 0.0
    %4586 = vmatpush1.msra.mxu0 0.0
    %4587 = vmatprep.subr.mxu0 0.0
    %4588 = vmatpush1.msra.mxu0 0.0
    %4589 = vmatprep.subr.mxu0 0.0
    %4590 = vmatpush1.msra.mxu0 0.0
    %4591 = vmatprep.subr.mxu0 0.0
    %4592 = vmatpush1.msra.mxu0 0.0
    %4593 = vmatprep.subr.mxu0 0.0
    %4594 = vmatpush1.msra.mxu0 0.0
    %4595 = vmatprep.subr.mxu0 0.0
    %4596 = vmatpush1.msra.mxu0 0.0
    %4597 = vmatprep.subr.mxu0 0.0
    %4598 = vmatpush1.msra.mxu0 0.0
    %4599 = vmatprep.subr.mxu0 0.0
    %4600 = vmatpush1.msra.mxu0 0.0
    %4601 = vmatprep.subr.mxu0 0.0
    %4602 = vmatpush1.msra.mxu0 0.0
    %4603 = vmatprep.mubr.f32.mxu0 0.0
    %4604 = vmatmul.mubr.f32.gmra.mrb[0].mxu0 %v4534
    %v4605 = vpop.f32.mrb[0].mxu0
    %v4606 = vadd.f32 %v4531, %v4605
    %v4607 = vpop.f32.mrb[0].mxu0
    %4608 = vmatprep.mubr.f32.mxu0 0.0
    %4609 = vmatmul.mubr.f32.gmra.mrb[0].mxu0 %v4537
    %v4610 = vpop.f32.mrb[0].mxu0
    %v4611 = vadd.f32 %v4531, %v4610
    %v4612 = vpop.f32.mrb[0].mxu0
    %4613 = vdwg.mxu0
    %v4614 = vmax.f32 %v4606, 0.0
    %v4615 = vmax.f32 %v4611, 0.0
    %v4616 = vld [vmem:[%s12] sm:$0xff]
    %v4617 = vld [vmem:[%s12 + $0x8] sm:$0xff]
    %v4618 = vld [vmem:[%s12 + $0x10] sm:$0xff]
    %v4619 = vld [vmem:[%s12 + $0x18] sm:$0xff]
    %v4620 = vld [vmem:[%s12 + $0x20] sm:$0xff]
    %v4621 = vld [vmem:[%s12 + $0x28] sm:$0xff]
    %v4622 = vld [vmem:[%s12 + $0x30] sm:$0xff]
    %v4623 = vld [vmem:[%s12 + $0x38] sm:$0xff]
    %v4624 = vlaneseq
    %v4625 = vshrl.u32 %v4624, 7
    %v4626 = vsub.s32 7, %v4625
    %v4627 = vrot.slane %v146, %v4626
    %vm4628 = vcmask 523264
    %v4630 = vsel %vm4628, %v4614, 0
    %v4633 = vsel %vm4628, %v4615, 0
    %4635 = vmatprep.subr.mxu0 0.0
    %4636 = vmatpush1.msra.mxu0 %v4616
    %4637 = vmatprep.subr.mxu0 0.0
    %4638 = vmatpush1.msra.mxu0 %v4617
    %4639 = vmatprep.subr.mxu0 0.0
    %4640 = vmatpush1.msra.mxu0 %v4618
    %4641 = vmatprep.subr.mxu0 0.0
    %4642 = vmatpush1.msra.mxu0 %v4619
    %4643 = vmatprep.subr.mxu0 0.0
    %4644 = vmatpush1.msra.mxu0 %v4620
    %4645 = vmatprep.subr.mxu0 0.0
    %4646 = vmatpush1.msra.mxu0 %v4621
    %4647 = vmatprep.subr.mxu0 0.0
    %4648 = vmatpush1.msra.mxu0 %v4622
    %4649 = vmatprep.subr.mxu0 0.0
    %4650 = vmatpush1.msra.mxu0 %v4623
    %4651 = vmatprep.subr.mxu0 0.0
    %4652 = vmatpush1.msra.mxu0 0.0
    %4653 = vmatprep.subr.mxu0 0.0
    %4654 = vmatpush1.msra.mxu0 0.0
    %4655 = vmatprep.subr.mxu0 0.0
    %4656 = vmatpush1.msra.mxu0 0.0
    %4657 = vmatprep.subr.mxu0 0.0
    %4658 = vmatpush1.msra.mxu0 0.0
    %4659 = vmatprep.subr.mxu0 0.0
    %4660 = vmatpush1.msra.mxu0 0.0
    %4661 = vmatprep.subr.mxu0 0.0
    %4662 = vmatpush1.msra.mxu0 0.0
    %4663 = vmatprep.subr.mxu0 0.0
    %4664 = vmatpush1.msra.mxu0 0.0
    %4665 = vmatprep.subr.mxu0 0.0
    %4666 = vmatpush1.msra.mxu0 0.0
    %4667 = vmatprep.subr.mxu0 0.0
    %4668 = vmatpush1.msra.mxu0 0.0
    %4669 = vmatprep.subr.mxu0 0.0
    %4670 = vmatpush1.msra.mxu0 0.0
    %4671 = vmatprep.subr.mxu0 0.0
    %4672 = vmatpush1.msra.mxu0 0.0
    %4673 = vmatprep.subr.mxu0 0.0
    %4674 = vmatpush1.msra.mxu0 0.0
    %4675 = vmatprep.subr.mxu0 0.0
    %4676 = vmatpush1.msra.mxu0 0.0
    %4677 = vmatprep.subr.mxu0 0.0
    %4678 = vmatpush1.msra.mxu0 0.0
    %4679 = vmatprep.subr.mxu0 0.0
    %4680 = vmatpush1.msra.mxu0 0.0
    %4681 = vmatprep.subr.mxu0 0.0
    %4682 = vmatpush1.msra.mxu0 0.0
    %4683 = vmatprep.subr.mxu0 0.0
    %4684 = vmatpush1.msra.mxu0 0.0
    %4685 = vmatprep.subr.mxu0 0.0
    %4686 = vmatpush1.msra.mxu0 0.0
    %4687 = vmatprep.subr.mxu0 0.0
    %4688 = vmatpush1.msra.mxu0 0.0
    %4689 = vmatprep.subr.mxu0 0.0
    %4690 = vmatpush1.msra.mxu0 0.0
    %4691 = vmatprep.subr.mxu0 0.0
    %4692 = vmatpush1.msra.mxu0 0.0
    %4693 = vmatprep.subr.mxu0 0.0
    %4694 = vmatpush1.msra.mxu0 0.0
    %4695 = vmatprep.subr.mxu0 0.0
    %4696 = vmatpush1.msra.mxu0 0.0
    %4697 = vmatprep.subr.mxu0 0.0
    %4698 = vmatpush1.msra.mxu0 0.0
    %4699 = vmatprep.mubr.f32.mxu0 0.0
    %4700 = vmatmul.mubr.f32.gmra.mrb[0].mxu0 %v4630
    %v4701 = vpop.f32.mrb[0].mxu0
    %v4702 = vadd.f32 %v4627, %v4701
    %v4703 = vpop.f32.mrb[0].mxu0
    %4704 = vmatprep.mubr.f32.mxu0 0.0
    %4705 = vmatmul.mubr.f32.gmra.mrb[0].mxu0 %v4633
    %v4706 = vpop.f32.mrb[0].mxu0
    %v4707 = vadd.f32 %v4627, %v4706
    %v4708 = vpop.f32.mrb[0].mxu0
    %4709 = vdwg.mxu0
    %v4710 = vadd.f32 %v4702, %v4514
    %v4711 = vadd.f32 %v4707, %v4519
    %v4712 = vsel %vm162, %v4710, 0.0
    %4713 = vadd.xlane.f32.xlu0 %v4712
    %v4714 = vpop.xlane.xlu0 %4713
    %v4715 = vsel %vm162, %v4711, 0.0
    %4716 = vadd.xlane.f32.xlu0 %v4715
    %v4717 = vpop.xlane.xlu0 %4716
    %v4718 = vmul.f32 %v4714, %v2169
    %v4719 = vmul.f32 %v4717, %v2169
    %v4720 = vsub.f32 %v4710, %v4718
    %v4721 = vsub.f32 %v4711, %v4719
    %v4722 = vmul.f32 %v4720, %v4720
    %v4723 = vmul.f32 %v4721, %v4721
    %v4724 = vsel %vm162, %v4722, 0.0
    %4725 = vadd.xlane.f32.xlu0 %v4724
    %v4726 = vpop.xlane.xlu0 %4725
    %v4727 = vsel %vm162, %v4723, 0.0
    %4728 = vadd.xlane.f32.xlu0 %v4727
    %v4729 = vpop.xlane.xlu0 %4728
    %v4730 = vmul.f32 %v4726, %v2169
    %v4731 = vmul.f32 %v4729, %v2169
    %v4732 = vadd.f32 %v4730, 1e-05
    %v4733 = vadd.f32 %v4731, 1e-05
    %v4734 = vrsqrt.pop %v4732
    %v4735 = vrsqrt.pop %v4733
    %v4736 = vmul.f32 %v4720, %v4734
    %v4737 = vmul.f32 %v4721, %v4735
    %v4738 = vlaneseq
    %v4739 = vshrl.u32 %v4738, 7
    %v4740 = vsub.s32 0, %v4739
    %v4741 = vrot.slane %v147, %v4740
    %v4742 = vmul.f32 %v4736, %v4741
    %v4743 = vmul.f32 %v4737, %v4741
    %v4744 = vlaneseq
    %v4745 = vshrl.u32 %v4744, 7
    %v4746 = vsub.s32 1, %v4745
    %v4747 = vrot.slane %v147, %v4746
    %v4748 = vadd.f32 %v4742, %v4747
    %v4749 = vadd.f32 %v4743, %v4747
    %4750 = vst.msk [vmem:[#allocation14] sm:$0xff] %vm162, %v4748
    %4751 = vst.msk [vmem:[#allocation14 + $0x8] sm:$0xff] %vm162, %v4749
    // Predicated region
    $region86: #{decoder_layer_forward.1} parent=1 // pred_check
      _
    $region87: #{decoder_layer_forward.1} parent=1 // pred_check_branch
      %4753 = sbr.rel (0) target = $region89
    $region88: #{decoder_layer_forward.1} parent=1 // pred_region
      %s4755 = ssub.s32 256, 256
      %4756 = vsyncadd [#allocation4], %s4755
      %s4757 = sshll.u32 [#allocation14], 4
      %s4758 = int_to_ptr.vmem [resolvable:$true] %s4757
      %4763 = dma.vmem_to_hbm [thread:$0]  %s4758, 256, %s14, [#allocation4], 128, 128, 8
    $region89: #{decoder_layer_forward.1} parent=1 // pred_fallthru
      _
    // Predicated region
    $region90: #{decoder_layer_forward.1} parent=1 // pred_check
      _
    $region91: #{decoder_layer_forward.1} parent=1 // pred_check_branch
      %4765 = sbr.rel (0) target = $region93
    $region92: #{decoder_layer_forward.1} parent=1 // pred_region
      %s4767 = ssub.s32 256, 256
      %4768 = vsyncadd [#allocation16], %s4767
      %s4769 = sshll.u32 [#allocation15], 4
      %s4770 = int_to_ptr.vmem [resolvable:$true] %s4769
      %4775 = dma.vmem_to_hbm [thread:$0]  %s4770, 256, %s15, [#allocation16], 128, 128, 8
    $region93: #{decoder_layer_forward.1} parent=1 // pred_fallthru
      _
    // Predicated region
    $region94: #{decoder_layer_forward.1} parent=1 // pred_check
      _
    $region95: #{decoder_layer_forward.1} parent=1 // pred_check_branch
      %4777 = sbr.rel (0) target = $region97
    $region96: #{decoder_layer_forward.1} parent=1 // pred_region
      %4778 = dma.done [#allocation4], 256
    $region97: #{decoder_layer_forward.1} parent=1 // pred_fallthru
      _
    // Predicated region
    $region98: #{decoder_layer_forward.1} parent=1 // pred_check
      _
    $region99: #{decoder_layer_forward.1} parent=1 // pred_check_branch
      %4780 = sbr.rel (0) target = $region101
    $region100: #{decoder_layer_forward.1} parent=1 // pred_region
      %4781 = dma.done [#allocation16], 256
    $region101: #{decoder_layer_forward.1} parent=1 // pred_fallthru
      _
    %4782 = vsyncpa [#allocation3], 1
    %4783 = vsyncpa [#allocation6], 1
    %4784 = vsyncpa [#allocation9], 1
    %4785 = vsyncpa [#allocation12], 1
    %4786 = vsyncpa [#allocation4], 1
    %4787 = vsyncpa [#allocation16], 1

</llo_original>
